<compile_context>
chip_gen: v7x
topology: tpu7x:2x2x1
jax: 0.10.0
libtpu: 0.0.40
codegen_flags: <defaults>
</compile_context>

<pallas_src>
import functools
import numpy as np
import jax
import jax.numpy as jnp
from jax import lax
from jax.experimental import pallas as pl
from jax.experimental.pallas import tpu as pltpu


def _tdvp_kernel(x_ref, a_ref, b_ref, scale_ref, y_ref, al_ref, ar_ref,
                 *, n, D, din, dout):
    eps = jnp.float32(1e-6)
    scale = scale_ref[0]

    # scalar parameter accessors (flattened SMEM)
    def a_p(i, l, r, d):                                   # A[i, l, r, d]
        return a_ref[((i * D + l) * D + r) * din + d]

    def b_p(i, l, r, j, k):                                # B[i, l, r, j, k]
        return b_ref[(((i * D + l) * D + r) * dout + j) * din + k]

    def load_x(i):                                         # raw inputs of site i
        return [x_ref[i * din + d] for d in range(din)]    # din x [rows, 128]

    def norm_x(i):                                         # x / ||x||  (no eps)
        xr = load_x(i)
        inv = lax.rsqrt(sum(v * v for v in xr))
        return [v * inv for v in xr]

    def site_matrix(i, xn):                                # Alist[i][l][r]
        return [[sum(xn[d] * a_p(i, l, r, d) for d in range(din))
                 for r in range(D)] for l in range(D)]

    # ---- left prefixes: Aleft[k] = normalize(e0^T A_0 ... A_k), k=0..n-2 -----
    # (parallel-mode math: the raw product is accumulated, normalization is
    #  only applied to the emitted value, matching the PyTorch parallel branch)
    P = None
    for k in range(n - 1):
        xn = norm_x(k)
        if k == 0:
            P = [sum(xn[d] * a_p(0, 0, r, d) for d in range(din))
                 for r in range(D)]
        else:
            M = site_matrix(k, xn)
            P = [sum(P[l] * M[l][r] for l in range(D)) for r in range(D)]
        inv = pl.reciprocal(jnp.sqrt(sum(v * v for v in P)) + eps)
        for r in range(D):
            al_ref[k * D + r] = P[r] * inv                 # whole (rows,128) tile

    # ---- right suffixes: Aright[i] = normalize(A_{i+1} ... A_{n-1} e0) -------
    Q = None
    for idx in range(n - 1):
        i = n - 2 - idx
        xn = norm_x(i + 1)
        if idx == 0:
            Q = [sum(xn[d] * a_p(n - 1, l, 0, d) for d in range(din))
                 for l in range(D)]
        else:
            M = site_matrix(i + 1, xn)
            Q = [sum(M[l][r] * Q[r] for r in range(D)) for l in range(D)]
        inv = pl.reciprocal(jnp.sqrt(sum(v * v for v in Q)) + eps)
        for l in range(D):
            ar_ref[i * D + l] = Q[l] * inv

    # ---- local Hamiltonians + output ----------------------------------------
    inf = jnp.float32(jnp.inf)
    for i in range(n):
        xr = load_x(i)
        Al = ([al_ref[(i - 1) * D + l] for l in range(D)] if i > 0 else None)
        Ar = ([ar_ref[i * D + r] for r in range(D)] if i < n - 1 else None)

        H = [[None] * din for _ in range(dout)]
        for j in range(dout):
            for k in range(din):
                if i == 0:
                    H[j][k] = sum(b_p(0, 0, r, j, k) * Ar[r] for r in range(D))
                elif i == n - 1:
                    H[j][k] = sum(Al[l] * b_p(n - 1, l, 0, j, k) for l in range(D))
                else:
                    H[j][k] = sum(Al[l] * b_p(i, l, r, j, k) * Ar[r]
                                  for l in range(D) for r in range(D))

        nrm = jnp.sqrt(sum(H[j][k] * H[j][k]
                           for j in range(dout) for k in range(din))) + eps
        c = scale * pl.reciprocal(nrm)
        # Hoisted NaN/Inf guard: any non-finite H entry makes nrm non-finite;
        # the reference then zeroes those entries, which zeroes the whole row
        # of the output, so one compare per site + one select per output row
        # replaces the per-element isnan checks (ok is False for NaN and +Inf).
        ok = nrm < inf

        yv = []
        for j in range(dout):
            v = sum(H[j][k] * xr[k] for k in range(din)) * c
            v = jnp.where(ok, v, jnp.float32(0.0))
            v = jnp.where(v >= 0, v, jnp.float32(1e-5) * v)    # LeakyReLU(1e-5)
            yv.append(jnp.abs(v))                              # out_norm='L1'
        inv_s = pl.reciprocal(sum(yv))
        for j in range(dout):
            y_ref[i * dout + j] = yv[j] * inv_s


def tdvp_v2_forward(x, A, Bt, scale, *, max_block_rows=32):
    """x: [B, n, din], A: [n, D, D, din], Bt: [n, D, D, dout, din]."""
    bsz, n, din = x.shape
    assert n >= 2
    D = A.shape[1]
    dout = Bt.shape[3]

    lanes = 128
    sub = 8
    rows_needed = max(1, -(-bsz // lanes))
    rows_needed = -(-rows_needed // sub) * sub              # multiple of 8
    block_rows = min(max_block_rows, rows_needed)           # stays a multiple of 8
    num_blocks = -(-rows_needed // block_rows)              # robust for any bsz
    rows_total = num_blocks * block_rows
    b_pad = rows_total * lanes

    # [B, n, din] -> [n*din, rows, 128]  (batch on sublane x lane = full vregs)
    xk = jnp.transpose(x, (1, 2, 0)).astype(jnp.float32)    # [n, din, B]
    xk = jnp.pad(xk, ((0, 0), (0, 0), (0, b_pad - bsz)), constant_values=1.0)
    xk = xk.reshape(n * din, rows_total, lanes)

    kernel = functools.partial(_tdvp_kernel, n=n, D=D, din=din, dout=dout)
    out_shapes = (
        jax.ShapeDtypeStruct((n * dout, rows_total, lanes), jnp.float32),
        jax.ShapeDtypeStruct(((n - 1) * D, rows_total, lanes), jnp.float32),
        jax.ShapeDtypeStruct(((n - 1) * D, rows_total, lanes), jnp.float32),
    )

    smem = pl.BlockSpec(memory_space=pltpu.MemorySpace.SMEM)
    x_spec = pl.BlockSpec((n * din, block_rows, lanes), lambda b: (0, b, 0))
    y_spec = pl.BlockSpec((n * dout, block_rows, lanes), lambda b: (0, b, 0))
    a_spec = pl.BlockSpec(((n - 1) * D, block_rows, lanes), lambda b: (0, b, 0))

    y, al, ar = pl.pallas_call(
        kernel,
        out_shape=out_shapes,
        grid=(num_blocks,),
        in_specs=[x_spec, smem, smem, smem],
        out_specs=(y_spec, a_spec, a_spec),
        compiler_params=pltpu.CompilerParams(
            dimension_semantics=("parallel",)),
    )(xk,
      A.reshape(-1).astype(jnp.float32),
      Bt.reshape(-1).astype(jnp.float32),
      jnp.asarray(scale, jnp.float32).reshape(1))

    y = jnp.transpose(y.reshape(n, dout, b_pad)[:, :, :bsz], (2, 0, 1))        # [B, n, dout]
    aleft = jnp.transpose(al.reshape(n - 1, D, b_pad)[:, :, :bsz], (0, 2, 1))  # [n-1, B, D]
    aright = jnp.transpose(ar.reshape(n - 1, D, b_pad)[:, :, :bsz], (0, 2, 1)) # [n-1, B, D]
    return y, aleft, aright


def tdvp_ref(x, A, Bt, scale):
    """Pure-JAX reference mirroring the PyTorch forward (parallel-mode math)."""
    bsz, n, din = x.shape
    eps = 1e-6
    Xn = x / jnp.linalg.norm(x, axis=-1, keepdims=True)
    Alist = jnp.einsum('bnd,nlrd->nblr', Xn, A)          # [n, B, D, D]

    Aleft = []
    P = Alist[0][:, 0, :]
    for k in range(n - 1):
        if k > 0:
            P = jnp.einsum('bl,blr->br', P, Alist[k])
        Aleft.append(P / (jnp.linalg.norm(P, axis=-1, keepdims=True) + eps))

    Aright = [None] * (n - 1)
    Q = Alist[n - 1][:, :, 0]
    for idx in range(n - 1):
        i = n - 2 - idx
        if idx > 0:
            Q = jnp.einsum('blr,br->bl', Alist[i + 1], Q)
        Aright[i] = Q / (jnp.linalg.norm(Q, axis=-1, keepdims=True) + eps)

    ys = []
    for i in range(n):
        if i == 0:
            H = jnp.einsum('ljk,bl->bjk', Bt[0, 0], Aright[0])
        elif i == n - 1:
            H = jnp.einsum('bl,ljk->bjk', Aleft[n - 2], Bt[n - 1][:, 0])
        else:
            H = jnp.einsum('bl,lrjk,br->bjk', Aleft[i - 1], Bt[i], Aright[i])
        nrm = jnp.linalg.norm(H.reshape(bsz, -1), axis=-1)[:, None, None] + eps
        H = scale * H / nrm
        H = jnp.where(jnp.isnan(H), 0.0, H)
        v = jnp.einsum('bjk,bk->bj', H, x[:, i, :])
        v = jnp.where(v >= 0, v, 1e-5 * v)
        av = jnp.abs(v)
        ys.append(av / jnp.sum(av, axis=-1, keepdims=True))
    return jnp.stack(ys, axis=1), jnp.stack(Aleft), jnp.stack(Aright)


if __name__ == "__main__":
    n, din, dout, D, batch = 8, 2, 2, 2, 2
    key = jax.random.PRNGKey(0)
    k1, k2, k3 = jax.random.split(key, 3)

    # deterministic synthetic parameters (shapes per __init__, non-ti branch)
    x = jax.random.uniform(k1, (batch, n, din), jnp.float32, minval=0.1, maxval=1.0)
    A = jax.random.normal(k2, (n, D, D, din), jnp.float32)
    Bt = jax.random.normal(k3, (n, D, D, dout, din), jnp.float32)
    scale = 1.0

    y, al, ar = tdvp_v2_forward(x, A, Bt, scale)
    jax.block_until_ready((y, al, ar))

    yr, alr, arr = tdvp_ref(x, A, Bt, scale)
    np.testing.assert_allclose(np.asarray(y), np.asarray(yr), rtol=1e-4, atol=1e-4)
    np.testing.assert_allclose(np.asarray(al), np.asarray(alr), rtol=1e-4, atol=1e-4)
    np.testing.assert_allclose(np.asarray(ar), np.asarray(arr), rtol=1e-4, atol=1e-4)

    print("KERNEL_OK")
</pallas_src>

<mosaic_0001>
module attributes {stable_mosaic.version = 11 : i64} {
  func.func @_tdvp_kernel(%arg0: i32, %arg1: memref<16x8x128xf32, #tpu.memory_space<vmem>>, %arg2: memref<64xf32, #tpu.memory_space<smem>>, %arg3: memref<128xf32, #tpu.memory_space<smem>>, %arg4: memref<1xf32, #tpu.memory_space<smem>>, %arg5: memref<16x8x128xf32, #tpu.memory_space<vmem>>, %arg6: memref<14x8x128xf32, #tpu.memory_space<vmem>>, %arg7: memref<14x8x128xf32, #tpu.memory_space<vmem>>) attributes {dimension_semantics = [#tpu.dimension_semantics<parallel>], iteration_bounds = array<i64: 1>, scalar_prefetch = 0 : i64, scratch_operands = 0 : i64, tpu.core_type = #tpu.core_type<tc>, window_params = [{transform_indices = @transform_0, window_bounds = array<i64: 16, 8, 128>}, {transform_indices = @transform_1, window_bounds = array<i64: 64>}, {transform_indices = @transform_2, window_bounds = array<i64: 128>}, {transform_indices = @transform_3, window_bounds = array<i64: 1>}, {transform_indices = @transform_4, window_bounds = array<i64: 16, 8, 128>}, {transform_indices = @transform_5, window_bounds = array<i64: 14, 8, 128>}, {transform_indices = @transform_6, window_bounds = array<i64: 14, 8, 128>}]} {
    %c0 = arith.constant 0 : index
    %0 = memref.load %arg4[%c0] : memref<1xf32, #tpu.memory_space<smem>>
    %c0_0 = arith.constant 0 : index
    %c0_1 = arith.constant 0 : index
    %c0_2 = arith.constant 0 : index
    %1 = vector.load %arg1[%c0_0, %c0_1, %c0_2] : memref<16x8x128xf32, #tpu.memory_space<vmem>>, vector<1x8x128xf32>
    %2 = vector.shape_cast %1 : vector<1x8x128xf32> to vector<8x128xf32>
    %c1 = arith.constant 1 : index
    %c0_3 = arith.constant 0 : index
    %c0_4 = arith.constant 0 : index
    %3 = vector.load %arg1[%c1, %c0_3, %c0_4] : memref<16x8x128xf32, #tpu.memory_space<vmem>>, vector<1x8x128xf32>
    %4 = vector.shape_cast %3 : vector<1x8x128xf32> to vector<8x128xf32>
    %5 = arith.mulf %2, %2 : vector<8x128xf32>
    %cst = arith.constant 0.000000e+00 : f32
    %6 = vector.broadcast %cst : f32 to vector<8x128xf32>
    %7 = arith.addf %6, %5 : vector<8x128xf32>
    %8 = arith.mulf %4, %4 : vector<8x128xf32>
    %9 = arith.addf %7, %8 : vector<8x128xf32>
    %10 = math.rsqrt %9 : vector<8x128xf32>
    %11 = arith.mulf %2, %10 : vector<8x128xf32>
    %12 = arith.mulf %4, %10 : vector<8x128xf32>
    %c0_5 = arith.constant 0 : index
    %13 = memref.load %arg2[%c0_5] : memref<64xf32, #tpu.memory_space<smem>>
    %14 = vector.broadcast %13 : f32 to vector<8x128xf32>
    %15 = arith.mulf %11, %14 : vector<8x128xf32>
    %cst_6 = arith.constant 0.000000e+00 : f32
    %16 = vector.broadcast %cst_6 : f32 to vector<8x128xf32>
    %17 = arith.addf %16, %15 : vector<8x128xf32>
    %c1_7 = arith.constant 1 : index
    %18 = memref.load %arg2[%c1_7] : memref<64xf32, #tpu.memory_space<smem>>
    %19 = vector.broadcast %18 : f32 to vector<8x128xf32>
    %20 = arith.mulf %12, %19 : vector<8x128xf32>
    %21 = arith.addf %17, %20 : vector<8x128xf32>
    %c2 = arith.constant 2 : index
    %22 = memref.load %arg2[%c2] : memref<64xf32, #tpu.memory_space<smem>>
    %23 = vector.broadcast %22 : f32 to vector<8x128xf32>
    %24 = arith.mulf %11, %23 : vector<8x128xf32>
    %cst_8 = arith.constant 0.000000e+00 : f32
    %25 = vector.broadcast %cst_8 : f32 to vector<8x128xf32>
    %26 = arith.addf %25, %24 : vector<8x128xf32>
    %c3 = arith.constant 3 : index
    %27 = memref.load %arg2[%c3] : memref<64xf32, #tpu.memory_space<smem>>
    %28 = vector.broadcast %27 : f32 to vector<8x128xf32>
    %29 = arith.mulf %12, %28 : vector<8x128xf32>
    %30 = arith.addf %26, %29 : vector<8x128xf32>
    %31 = arith.mulf %21, %21 : vector<8x128xf32>
    %cst_9 = arith.constant 0.000000e+00 : f32
    %32 = vector.broadcast %cst_9 : f32 to vector<8x128xf32>
    %33 = arith.addf %32, %31 : vector<8x128xf32>
    %34 = arith.mulf %30, %30 : vector<8x128xf32>
    %35 = arith.addf %33, %34 : vector<8x128xf32>
    %36 = math.sqrt %35 : vector<8x128xf32>
    %cst_10 = arith.constant 9.99999997E-7 : f32
    %37 = vector.broadcast %cst_10 : f32 to vector<8x128xf32>
    %38 = arith.addf %36, %37 : vector<8x128xf32>
    %39 = tpu.reciprocal %38 : vector<8x128xf32> -> vector<8x128xf32>
    %40 = arith.mulf %21, %39 : vector<8x128xf32>
    %c0_11 = arith.constant 0 : index
    %c0_12 = arith.constant 0 : index
    %c0_13 = arith.constant 0 : index
    %41 = vector.load %arg6[%c0_11, %c0_12, %c0_13] : memref<14x8x128xf32, #tpu.memory_space<vmem>>, vector<1x8x128xf32>
    %42 = vector.shape_cast %41 : vector<1x8x128xf32> to vector<8x128xf32>
    %43 = vector.shape_cast %40 : vector<8x128xf32> to vector<1x8x128xf32>
    tpu.vector_store %arg6[%c0_11, %c0_12, %c0_13], %43 {strides = array<i32>} : memref<14x8x128xf32, #tpu.memory_space<vmem>>, vector<1x8x128xf32>,
    %44 = arith.mulf %30, %39 : vector<8x128xf32>
    %c1_14 = arith.constant 1 : index
    %c0_15 = arith.constant 0 : index
    %c0_16 = arith.constant 0 : index
    %45 = vector.load %arg6[%c1_14, %c0_15, %c0_16] : memref<14x8x128xf32, #tpu.memory_space<vmem>>, vector<1x8x128xf32>
    %46 = vector.shape_cast %45 : vector<1x8x128xf32> to vector<8x128xf32>
    %47 = vector.shape_cast %44 : vector<8x128xf32> to vector<1x8x128xf32>
    tpu.vector_store %arg6[%c1_14, %c0_15, %c0_16], %47 {strides = array<i32>} : memref<14x8x128xf32, #tpu.memory_space<vmem>>, vector<1x8x128xf32>,
    %c2_17 = arith.constant 2 : index
    %c0_18 = arith.constant 0 : index
    %c0_19 = arith.constant 0 : index
    %48 = vector.load %arg1[%c2_17, %c0_18, %c0_19] : memref<16x8x128xf32, #tpu.memory_space<vmem>>, vector<1x8x128xf32>
    %49 = vector.shape_cast %48 : vector<1x8x128xf32> to vector<8x128xf32>
    %c3_20 = arith.constant 3 : index
    %c0_21 = arith.constant 0 : index
    %c0_22 = arith.constant 0 : index
    %50 = vector.load %arg1[%c3_20, %c0_21, %c0_22] : memref<16x8x128xf32, #tpu.memory_space<vmem>>, vector<1x8x128xf32>
    %51 = vector.shape_cast %50 : vector<1x8x128xf32> to vector<8x128xf32>
    %52 = arith.mulf %49, %49 : vector<8x128xf32>
    %cst_23 = arith.constant 0.000000e+00 : f32
    %53 = vector.broadcast %cst_23 : f32 to vector<8x128xf32>
    %54 = arith.addf %53, %52 : vector<8x128xf32>
    %55 = arith.mulf %51, %51 : vector<8x128xf32>
    %56 = arith.addf %54, %55 : vector<8x128xf32>
    %57 = math.rsqrt %56 : vector<8x128xf32>
    %58 = arith.mulf %49, %57 : vector<8x128xf32>
    %59 = arith.mulf %51, %57 : vector<8x128xf32>
    %c8 = arith.constant 8 : index
    %60 = memref.load %arg2[%c8] : memref<64xf32, #tpu.memory_space<smem>>
    %61 = vector.broadcast %60 : f32 to vector<8x128xf32>
    %62 = arith.mulf %58, %61 : vector<8x128xf32>
    %cst_24 = arith.constant 0.000000e+00 : f32
    %63 = vector.broadcast %cst_24 : f32 to vector<8x128xf32>
    %64 = arith.addf %63, %62 : vector<8x128xf32>
    %c9 = arith.constant 9 : index
    %65 = memref.load %arg2[%c9] : memref<64xf32, #tpu.memory_space<smem>>
    %66 = vector.broadcast %65 : f32 to vector<8x128xf32>
    %67 = arith.mulf %59, %66 : vector<8x128xf32>
    %68 = arith.addf %64, %67 : vector<8x128xf32>
    %c10 = arith.constant 10 : index
    %69 = memref.load %arg2[%c10] : memref<64xf32, #tpu.memory_space<smem>>
    %70 = vector.broadcast %69 : f32 to vector<8x128xf32>
    %71 = arith.mulf %58, %70 : vector<8x128xf32>
    %cst_25 = arith.constant 0.000000e+00 : f32
    %72 = vector.broadcast %cst_25 : f32 to vector<8x128xf32>
    %73 = arith.addf %72, %71 : vector<8x128xf32>
    %c11 = arith.constant 11 : index
    %74 = memref.load %arg2[%c11] : memref<64xf32, #tpu.memory_space<smem>>
    %75 = vector.broadcast %74 : f32 to vector<8x128xf32>
    %76 = arith.mulf %59, %75 : vector<8x128xf32>
    %77 = arith.addf %73, %76 : vector<8x128xf32>
    %c12 = arith.constant 12 : index
    %78 = memref.load %arg2[%c12] : memref<64xf32, #tpu.memory_space<smem>>
    %79 = vector.broadcast %78 : f32 to vector<8x128xf32>
    %80 = arith.mulf %58, %79 : vector<8x128xf32>
    %cst_26 = arith.constant 0.000000e+00 : f32
    %81 = vector.broadcast %cst_26 : f32 to vector<8x128xf32>
    %82 = arith.addf %81, %80 : vector<8x128xf32>
    %c13 = arith.constant 13 : index
    %83 = memref.load %arg2[%c13] : memref<64xf32, #tpu.memory_space<smem>>
    %84 = vector.broadcast %83 : f32 to vector<8x128xf32>
    %85 = arith.mulf %59, %84 : vector<8x128xf32>
    %86 = arith.addf %82, %85 : vector<8x128xf32>
    %c14 = arith.constant 14 : index
    %87 = memref.load %arg2[%c14] : memref<64xf32, #tpu.memory_space<smem>>
    %88 = vector.broadcast %87 : f32 to vector<8x128xf32>
    %89 = arith.mulf %58, %88 : vector<8x128xf32>
    %cst_27 = arith.constant 0.000000e+00 : f32
    %90 = vector.broadcast %cst_27 : f32 to vector<8x128xf32>
    %91 = arith.addf %90, %89 : vector<8x128xf32>
    %c15 = arith.constant 15 : index
    %92 = memref.load %arg2[%c15] : memref<64xf32, #tpu.memory_space<smem>>
    %93 = vector.broadcast %92 : f32 to vector<8x128xf32>
    %94 = arith.mulf %59, %93 : vector<8x128xf32>
    %95 = arith.addf %91, %94 : vector<8x128xf32>
    %96 = arith.mulf %21, %68 : vector<8x128xf32>
    %cst_28 = arith.constant 0.000000e+00 : f32
    %97 = vector.broadcast %cst_28 : f32 to vector<8x128xf32>
    %98 = arith.addf %97, %96 : vector<8x128xf32>
    %99 = arith.mulf %30, %86 : vector<8x128xf32>
    %100 = arith.addf %98, %99 : vector<8x128xf32>
    %101 = arith.mulf %21, %77 : vector<8x128xf32>
    %cst_29 = arith.constant 0.000000e+00 : f32
    %102 = vector.broadcast %cst_29 : f32 to vector<8x128xf32>
    %103 = arith.addf %102, %101 : vector<8x128xf32>
    %104 = arith.mulf %30, %95 : vector<8x128xf32>
    %105 = arith.addf %103, %104 : vector<8x128xf32>
    %106 = arith.mulf %100, %100 : vector<8x128xf32>
    %cst_30 = arith.constant 0.000000e+00 : f32
    %107 = vector.broadcast %cst_30 : f32 to vector<8x128xf32>
    %108 = arith.addf %107, %106 : vector<8x128xf32>
    %109 = arith.mulf %105, %105 : vector<8x128xf32>
    %110 = arith.addf %108, %109 : vector<8x128xf32>
    %111 = math.sqrt %110 : vector<8x128xf32>
    %cst_31 = arith.constant 9.99999997E-7 : f32
    %112 = vector.broadcast %cst_31 : f32 to vector<8x128xf32>
    %113 = arith.addf %111, %112 : vector<8x128xf32>
    %114 = tpu.reciprocal %113 : vector<8x128xf32> -> vector<8x128xf32>
    %115 = arith.mulf %100, %114 : vector<8x128xf32>
    %c2_32 = arith.constant 2 : index
    %c0_33 = arith.constant 0 : index
    %c0_34 = arith.constant 0 : index
    %116 = vector.load %arg6[%c2_32, %c0_33, %c0_34] : memref<14x8x128xf32, #tpu.memory_space<vmem>>, vector<1x8x128xf32>
    %117 = vector.shape_cast %116 : vector<1x8x128xf32> to vector<8x128xf32>
    %118 = vector.shape_cast %115 : vector<8x128xf32> to vector<1x8x128xf32>
    tpu.vector_store %arg6[%c2_32, %c0_33, %c0_34], %118 {strides = array<i32>} : memref<14x8x128xf32, #tpu.memory_space<vmem>>, vector<1x8x128xf32>,
    %119 = arith.mulf %105, %114 : vector<8x128xf32>
    %c3_35 = arith.constant 3 : index
    %c0_36 = arith.constant 0 : index
    %c0_37 = arith.constant 0 : index
    %120 = vector.load %arg6[%c3_35, %c0_36, %c0_37] : memref<14x8x128xf32, #tpu.memory_space<vmem>>, vector<1x8x128xf32>
    %121 = vector.shape_cast %120 : vector<1x8x128xf32> to vector<8x128xf32>
    %122 = vector.shape_cast %119 : vector<8x128xf32> to vector<1x8x128xf32>
    tpu.vector_store %arg6[%c3_35, %c0_36, %c0_37], %122 {strides = array<i32>} : memref<14x8x128xf32, #tpu.memory_space<vmem>>, vector<1x8x128xf32>,
    %c4 = arith.constant 4 : index
    %c0_38 = arith.constant 0 : index
    %c0_39 = arith.constant 0 : index
    %123 = vector.load %arg1[%c4, %c0_38, %c0_39] : memref<16x8x128xf32, #tpu.memory_space<vmem>>, vector<1x8x128xf32>
    %124 = vector.shape_cast %123 : vector<1x8x128xf32> to vector<8x128xf32>
    %c5 = arith.constant 5 : index
    %c0_40 = arith.constant 0 : index
    %c0_41 = arith.constant 0 : index
    %125 = vector.load %arg1[%c5, %c0_40, %c0_41] : memref<16x8x128xf32, #tpu.memory_space<vmem>>, vector<1x8x128xf32>
    %126 = vector.shape_cast %125 : vector<1x8x128xf32> to vector<8x128xf32>
    %127 = arith.mulf %124, %124 : vector<8x128xf32>
    %cst_42 = arith.constant 0.000000e+00 : f32
    %128 = vector.broadcast %cst_42 : f32 to vector<8x128xf32>
    %129 = arith.addf %128, %127 : vector<8x128xf32>
    %130 = arith.mulf %126, %126 : vector<8x128xf32>
    %131 = arith.addf %129, %130 : vector<8x128xf32>
    %132 = math.rsqrt %131 : vector<8x128xf32>
    %133 = arith.mulf %124, %132 : vector<8x128xf32>
    %134 = arith.mulf %126, %132 : vector<8x128xf32>
    %c16 = arith.constant 16 : index
    %135 = memref.load %arg2[%c16] : memref<64xf32, #tpu.memory_space<smem>>
    %136 = vector.broadcast %135 : f32 to vector<8x128xf32>
    %137 = arith.mulf %133, %136 : vector<8x128xf32>
    %cst_43 = arith.constant 0.000000e+00 : f32
    %138 = vector.broadcast %cst_43 : f32 to vector<8x128xf32>
    %139 = arith.addf %138, %137 : vector<8x128xf32>
    %c17 = arith.constant 17 : index
    %140 = memref.load %arg2[%c17] : memref<64xf32, #tpu.memory_space<smem>>
    %141 = vector.broadcast %140 : f32 to vector<8x128xf32>
    %142 = arith.mulf %134, %141 : vector<8x128xf32>
    %143 = arith.addf %139, %142 : vector<8x128xf32>
    %c18 = arith.constant 18 : index
    %144 = memref.load %arg2[%c18] : memref<64xf32, #tpu.memory_space<smem>>
    %145 = vector.broadcast %144 : f32 to vector<8x128xf32>
    %146 = arith.mulf %133, %145 : vector<8x128xf32>
    %cst_44 = arith.constant 0.000000e+00 : f32
    %147 = vector.broadcast %cst_44 : f32 to vector<8x128xf32>
    %148 = arith.addf %147, %146 : vector<8x128xf32>
    %c19 = arith.constant 19 : index
    %149 = memref.load %arg2[%c19] : memref<64xf32, #tpu.memory_space<smem>>
    %150 = vector.broadcast %149 : f32 to vector<8x128xf32>
    %151 = arith.mulf %134, %150 : vector<8x128xf32>
    %152 = arith.addf %148, %151 : vector<8x128xf32>
    %c20 = arith.constant 20 : index
    %153 = memref.load %arg2[%c20] : memref<64xf32, #tpu.memory_space<smem>>
    %154 = vector.broadcast %153 : f32 to vector<8x128xf32>
    %155 = arith.mulf %133, %154 : vector<8x128xf32>
    %cst_45 = arith.constant 0.000000e+00 : f32
    %156 = vector.broadcast %cst_45 : f32 to vector<8x128xf32>
    %157 = arith.addf %156, %155 : vector<8x128xf32>
    %c21 = arith.constant 21 : index
    %158 = memref.load %arg2[%c21] : memref<64xf32, #tpu.memory_space<smem>>
    %159 = vector.broadcast %158 : f32 to vector<8x128xf32>
    %160 = arith.mulf %134, %159 : vector<8x128xf32>
    %161 = arith.addf %157, %160 : vector<8x128xf32>
    %c22 = arith.constant 22 : index
    %162 = memref.load %arg2[%c22] : memref<64xf32, #tpu.memory_space<smem>>
    %163 = vector.broadcast %162 : f32 to vector<8x128xf32>
    %164 = arith.mulf %133, %163 : vector<8x128xf32>
    %cst_46 = arith.constant 0.000000e+00 : f32
    %165 = vector.broadcast %cst_46 : f32 to vector<8x128xf32>
    %166 = arith.addf %165, %164 : vector<8x128xf32>
    %c23 = arith.constant 23 : index
    %167 = memref.load %arg2[%c23] : memref<64xf32, #tpu.memory_space<smem>>
    %168 = vector.broadcast %167 : f32 to vector<8x128xf32>
    %169 = arith.mulf %134, %168 : vector<8x128xf32>
    %170 = arith.addf %166, %169 : vector<8x128xf32>
    %171 = arith.mulf %100, %143 : vector<8x128xf32>
    %cst_47 = arith.constant 0.000000e+00 : f32
    %172 = vector.broadcast %cst_47 : f32 to vector<8x128xf32>
    %173 = arith.addf %172, %171 : vector<8x128xf32>
    %174 = arith.mulf %105, %161 : vector<8x128xf32>
    %175 = arith.addf %173, %174 : vector<8x128xf32>
    %176 = arith.mulf %100, %152 : vector<8x128xf32>
    %cst_48 = arith.constant 0.000000e+00 : f32
    %177 = vector.broadcast %cst_48 : f32 to vector<8x128xf32>
    %178 = arith.addf %177, %176 : vector<8x128xf32>
    %179 = arith.mulf %105, %170 : vector<8x128xf32>
    %180 = arith.addf %178, %179 : vector<8x128xf32>
    %181 = arith.mulf %175, %175 : vector<8x128xf32>
    %cst_49 = arith.constant 0.000000e+00 : f32
    %182 = vector.broadcast %cst_49 : f32 to vector<8x128xf32>
    %183 = arith.addf %182, %181 : vector<8x128xf32>
    %184 = arith.mulf %180, %180 : vector<8x128xf32>
    %185 = arith.addf %183, %184 : vector<8x128xf32>
    %186 = math.sqrt %185 : vector<8x128xf32>
    %cst_50 = arith.constant 9.99999997E-7 : f32
    %187 = vector.broadcast %cst_50 : f32 to vector<8x128xf32>
    %188 = arith.addf %186, %187 : vector<8x128xf32>
    %189 = tpu.reciprocal %188 : vector<8x128xf32> -> vector<8x128xf32>
    %190 = arith.mulf %175, %189 : vector<8x128xf32>
    %c4_51 = arith.constant 4 : index
    %c0_52 = arith.constant 0 : index
    %c0_53 = arith.constant 0 : index
    %191 = vector.load %arg6[%c4_51, %c0_52, %c0_53] : memref<14x8x128xf32, #tpu.memory_space<vmem>>, vector<1x8x128xf32>
    %192 = vector.shape_cast %191 : vector<1x8x128xf32> to vector<8x128xf32>
    %193 = vector.shape_cast %190 : vector<8x128xf32> to vector<1x8x128xf32>
    tpu.vector_store %arg6[%c4_51, %c0_52, %c0_53], %193 {strides = array<i32>} : memref<14x8x128xf32, #tpu.memory_space<vmem>>, vector<1x8x128xf32>,
    %194 = arith.mulf %180, %189 : vector<8x128xf32>
    %c5_54 = arith.constant 5 : index
    %c0_55 = arith.constant 0 : index
    %c0_56 = arith.constant 0 : index
    %195 = vector.load %arg6[%c5_54, %c0_55, %c0_56] : memref<14x8x128xf32, #tpu.memory_space<vmem>>, vector<1x8x128xf32>
    %196 = vector.shape_cast %195 : vector<1x8x128xf32> to vector<8x128xf32>
    %197 = vector.shape_cast %194 : vector<8x128xf32> to vector<1x8x128xf32>
    tpu.vector_store %arg6[%c5_54, %c0_55, %c0_56], %197 {strides = array<i32>} : memref<14x8x128xf32, #tpu.memory_space<vmem>>, vector<1x8x128xf32>,
    %c6 = arith.constant 6 : index
    %c0_57 = arith.constant 0 : index
    %c0_58 = arith.constant 0 : index
    %198 = vector.load %arg1[%c6, %c0_57, %c0_58] : memref<16x8x128xf32, #tpu.memory_space<vmem>>, vector<1x8x128xf32>
    %199 = vector.shape_cast %198 : vector<1x8x128xf32> to vector<8x128xf32>
    %c7 = arith.constant 7 : index
    %c0_59 = arith.constant 0 : index
    %c0_60 = arith.constant 0 : index
    %200 = vector.load %arg1[%c7, %c0_59, %c0_60] : memref<16x8x128xf32, #tpu.memory_space<vmem>>, vector<1x8x128xf32>
    %201 = vector.shape_cast %200 : vector<1x8x128xf32> to vector<8x128xf32>
    %202 = arith.mulf %199, %199 : vector<8x128xf32>
    %cst_61 = arith.constant 0.000000e+00 : f32
    %203 = vector.broadcast %cst_61 : f32 to vector<8x128xf32>
    %204 = arith.addf %203, %202 : vector<8x128xf32>
    %205 = arith.mulf %201, %201 : vector<8x128xf32>
    %206 = arith.addf %204, %205 : vector<8x128xf32>
    %207 = math.rsqrt %206 : vector<8x128xf32>
    %208 = arith.mulf %199, %207 : vector<8x128xf32>
    %209 = arith.mulf %201, %207 : vector<8x128xf32>
    %c24 = arith.constant 24 : index
    %210 = memref.load %arg2[%c24] : memref<64xf32, #tpu.memory_space<smem>>
    %211 = vector.broadcast %210 : f32 to vector<8x128xf32>
    %212 = arith.mulf %208, %211 : vector<8x128xf32>
    %cst_62 = arith.constant 0.000000e+00 : f32
    %213 = vector.broadcast %cst_62 : f32 to vector<8x128xf32>
    %214 = arith.addf %213, %212 : vector<8x128xf32>
    %c25 = arith.constant 25 : index
    %215 = memref.load %arg2[%c25] : memref<64xf32, #tpu.memory_space<smem>>
    %216 = vector.broadcast %215 : f32 to vector<8x128xf32>
    %217 = arith.mulf %209, %216 : vector<8x128xf32>
    %218 = arith.addf %214, %217 : vector<8x128xf32>
    %c26 = arith.constant 26 : index
    %219 = memref.load %arg2[%c26] : memref<64xf32, #tpu.memory_space<smem>>
    %220 = vector.broadcast %219 : f32 to vector<8x128xf32>
    %221 = arith.mulf %208, %220 : vector<8x128xf32>
    %cst_63 = arith.constant 0.000000e+00 : f32
    %222 = vector.broadcast %cst_63 : f32 to vector<8x128xf32>
    %223 = arith.addf %222, %221 : vector<8x128xf32>
    %c27 = arith.constant 27 : index
    %224 = memref.load %arg2[%c27] : memref<64xf32, #tpu.memory_space<smem>>
    %225 = vector.broadcast %224 : f32 to vector<8x128xf32>
    %226 = arith.mulf %209, %225 : vector<8x128xf32>
    %227 = arith.addf %223, %226 : vector<8x128xf32>
    %c28 = arith.constant 28 : index
    %228 = memref.load %arg2[%c28] : memref<64xf32, #tpu.memory_space<smem>>
    %229 = vector.broadcast %228 : f32 to vector<8x128xf32>
    %230 = arith.mulf %208, %229 : vector<8x128xf32>
    %cst_64 = arith.constant 0.000000e+00 : f32
    %231 = vector.broadcast %cst_64 : f32 to vector<8x128xf32>
    %232 = arith.addf %231, %230 : vector<8x128xf32>
    %c29 = arith.constant 29 : index
    %233 = memref.load %arg2[%c29] : memref<64xf32, #tpu.memory_space<smem>>
    %234 = vector.broadcast %233 : f32 to vector<8x128xf32>
    %235 = arith.mulf %209, %234 : vector<8x128xf32>
    %236 = arith.addf %232, %235 : vector<8x128xf32>
    %c30 = arith.constant 30 : index
    %237 = memref.load %arg2[%c30] : memref<64xf32, #tpu.memory_space<smem>>
    %238 = vector.broadcast %237 : f32 to vector<8x128xf32>
    %239 = arith.mulf %208, %238 : vector<8x128xf32>
    %cst_65 = arith.constant 0.000000e+00 : f32
    %240 = vector.broadcast %cst_65 : f32 to vector<8x128xf32>
    %241 = arith.addf %240, %239 : vector<8x128xf32>
    %c31 = arith.constant 31 : index
    %242 = memref.load %arg2[%c31] : memref<64xf32, #tpu.memory_space<smem>>
    %243 = vector.broadcast %242 : f32 to vector<8x128xf32>
    %244 = arith.mulf %209, %243 : vector<8x128xf32>
    %245 = arith.addf %241, %244 : vector<8x128xf32>
    %246 = arith.mulf %175, %218 : vector<8x128xf32>
    %cst_66 = arith.constant 0.000000e+00 : f32
    %247 = vector.broadcast %cst_66 : f32 to vector<8x128xf32>
    %248 = arith.addf %247, %246 : vector<8x128xf32>
    %249 = arith.mulf %180, %236 : vector<8x128xf32>
    %250 = arith.addf %248, %249 : vector<8x128xf32>
    %251 = arith.mulf %175, %227 : vector<8x128xf32>
    %cst_67 = arith.constant 0.000000e+00 : f32
    %252 = vector.broadcast %cst_67 : f32 to vector<8x128xf32>
    %253 = arith.addf %252, %251 : vector<8x128xf32>
    %254 = arith.mulf %180, %245 : vector<8x128xf32>
    %255 = arith.addf %253, %254 : vector<8x128xf32>
    %256 = arith.mulf %250, %250 : vector<8x128xf32>
    %cst_68 = arith.constant 0.000000e+00 : f32
    %257 = vector.broadcast %cst_68 : f32 to vector<8x128xf32>
    %258 = arith.addf %257, %256 : vector<8x128xf32>
    %259 = arith.mulf %255, %255 : vector<8x128xf32>
    %260 = arith.addf %258, %259 : vector<8x128xf32>
    %261 = math.sqrt %260 : vector<8x128xf32>
    %cst_69 = arith.constant 9.99999997E-7 : f32
    %262 = vector.broadcast %cst_69 : f32 to vector<8x128xf32>
    %263 = arith.addf %261, %262 : vector<8x128xf32>
    %264 = tpu.reciprocal %263 : vector<8x128xf32> -> vector<8x128xf32>
    %265 = arith.mulf %250, %264 : vector<8x128xf32>
    %c6_70 = arith.constant 6 : index
    %c0_71 = arith.constant 0 : index
    %c0_72 = arith.constant 0 : index
    %266 = vector.load %arg6[%c6_70, %c0_71, %c0_72] : memref<14x8x128xf32, #tpu.memory_space<vmem>>, vector<1x8x128xf32>
    %267 = vector.shape_cast %266 : vector<1x8x128xf32> to vector<8x128xf32>
    %268 = vector.shape_cast %265 : vector<8x128xf32> to vector<1x8x128xf32>
    tpu.vector_store %arg6[%c6_70, %c0_71, %c0_72], %268 {strides = array<i32>} : memref<14x8x128xf32, #tpu.memory_space<vmem>>, vector<1x8x128xf32>,
    %269 = arith.mulf %255, %264 : vector<8x128xf32>
    %c7_73 = arith.constant 7 : index
    %c0_74 = arith.constant 0 : index
    %c0_75 = arith.constant 0 : index
    %270 = vector.load %arg6[%c7_73, %c0_74, %c0_75] : memref<14x8x128xf32, #tpu.memory_space<vmem>>, vector<1x8x128xf32>
    %271 = vector.shape_cast %270 : vector<1x8x128xf32> to vector<8x128xf32>
    %272 = vector.shape_cast %269 : vector<8x128xf32> to vector<1x8x128xf32>
    tpu.vector_store %arg6[%c7_73, %c0_74, %c0_75], %272 {strides = array<i32>} : memref<14x8x128xf32, #tpu.memory_space<vmem>>, vector<1x8x128xf32>,
    %c8_76 = arith.constant 8 : index
    %c0_77 = arith.constant 0 : index
    %c0_78 = arith.constant 0 : index
    %273 = vector.load %arg1[%c8_76, %c0_77, %c0_78] : memref<16x8x128xf32, #tpu.memory_space<vmem>>, vector<1x8x128xf32>
    %274 = vector.shape_cast %273 : vector<1x8x128xf32> to vector<8x128xf32>
    %c9_79 = arith.constant 9 : index
    %c0_80 = arith.constant 0 : index
    %c0_81 = arith.constant 0 : index
    %275 = vector.load %arg1[%c9_79, %c0_80, %c0_81] : memref<16x8x128xf32, #tpu.memory_space<vmem>>, vector<1x8x128xf32>
    %276 = vector.shape_cast %275 : vector<1x8x128xf32> to vector<8x128xf32>
    %277 = arith.mulf %274, %274 : vector<8x128xf32>
    %cst_82 = arith.constant 0.000000e+00 : f32
    %278 = vector.broadcast %cst_82 : f32 to vector<8x128xf32>
    %279 = arith.addf %278, %277 : vector<8x128xf32>
    %280 = arith.mulf %276, %276 : vector<8x128xf32>
    %281 = arith.addf %279, %280 : vector<8x128xf32>
    %282 = math.rsqrt %281 : vector<8x128xf32>
    %283 = arith.mulf %274, %282 : vector<8x128xf32>
    %284 = arith.mulf %276, %282 : vector<8x128xf32>
    %c32 = arith.constant 32 : index
    %285 = memref.load %arg2[%c32] : memref<64xf32, #tpu.memory_space<smem>>
    %286 = vector.broadcast %285 : f32 to vector<8x128xf32>
    %287 = arith.mulf %283, %286 : vector<8x128xf32>
    %cst_83 = arith.constant 0.000000e+00 : f32
    %288 = vector.broadcast %cst_83 : f32 to vector<8x128xf32>
    %289 = arith.addf %288, %287 : vector<8x128xf32>
    %c33 = arith.constant 33 : index
    %290 = memref.load %arg2[%c33] : memref<64xf32, #tpu.memory_space<smem>>
    %291 = vector.broadcast %290 : f32 to vector<8x128xf32>
    %292 = arith.mulf %284, %291 : vector<8x128xf32>
    %293 = arith.addf %289, %292 : vector<8x128xf32>
    %c34 = arith.constant 34 : index
    %294 = memref.load %arg2[%c34] : memref<64xf32, #tpu.memory_space<smem>>
    %295 = vector.broadcast %294 : f32 to vector<8x128xf32>
    %296 = arith.mulf %283, %295 : vector<8x128xf32>
    %cst_84 = arith.constant 0.000000e+00 : f32
    %297 = vector.broadcast %cst_84 : f32 to vector<8x128xf32>
    %298 = arith.addf %297, %296 : vector<8x128xf32>
    %c35 = arith.constant 35 : index
    %299 = memref.load %arg2[%c35] : memref<64xf32, #tpu.memory_space<smem>>
    %300 = vector.broadcast %299 : f32 to vector<8x128xf32>
    %301 = arith.mulf %284, %300 : vector<8x128xf32>
    %302 = arith.addf %298, %301 : vector<8x128xf32>
    %c36 = arith.constant 36 : index
    %303 = memref.load %arg2[%c36] : memref<64xf32, #tpu.memory_space<smem>>
    %304 = vector.broadcast %303 : f32 to vector<8x128xf32>
    %305 = arith.mulf %283, %304 : vector<8x128xf32>
    %cst_85 = arith.constant 0.000000e+00 : f32
    %306 = vector.broadcast %cst_85 : f32 to vector<8x128xf32>
    %307 = arith.addf %306, %305 : vector<8x128xf32>
    %c37 = arith.constant 37 : index
    %308 = memref.load %arg2[%c37] : memref<64xf32, #tpu.memory_space<smem>>
    %309 = vector.broadcast %308 : f32 to vector<8x128xf32>
    %310 = arith.mulf %284, %309 : vector<8x128xf32>
    %311 = arith.addf %307, %310 : vector<8x128xf32>
    %c38 = arith.constant 38 : index
    %312 = memref.load %arg2[%c38] : memref<64xf32, #tpu.memory_space<smem>>
    %313 = vector.broadcast %312 : f32 to vector<8x128xf32>
    %314 = arith.mulf %283, %313 : vector<8x128xf32>
    %cst_86 = arith.constant 0.000000e+00 : f32
    %315 = vector.broadcast %cst_86 : f32 to vector<8x128xf32>
    %316 = arith.addf %315, %314 : vector<8x128xf32>
    %c39 = arith.constant 39 : index
    %317 = memref.load %arg2[%c39] : memref<64xf32, #tpu.memory_space<smem>>
    %318 = vector.broadcast %317 : f32 to vector<8x128xf32>
    %319 = arith.mulf %284, %318 : vector<8x128xf32>
    %320 = arith.addf %316, %319 : vector<8x128xf32>
    %321 = arith.mulf %250, %293 : vector<8x128xf32>
    %cst_87 = arith.constant 0.000000e+00 : f32
    %322 = vector.broadcast %cst_87 : f32 to vector<8x128xf32>
    %323 = arith.addf %322, %321 : vector<8x128xf32>
    %324 = arith.mulf %255, %311 : vector<8x128xf32>
    %325 = arith.addf %323, %324 : vector<8x128xf32>
    %326 = arith.mulf %250, %302 : vector<8x128xf32>
    %cst_88 = arith.constant 0.000000e+00 : f32
    %327 = vector.broadcast %cst_88 : f32 to vector<8x128xf32>
    %328 = arith.addf %327, %326 : vector<8x128xf32>
    %329 = arith.mulf %255, %320 : vector<8x128xf32>
    %330 = arith.addf %328, %329 : vector<8x128xf32>
    %331 = arith.mulf %325, %325 : vector<8x128xf32>
    %cst_89 = arith.constant 0.000000e+00 : f32
    %332 = vector.broadcast %cst_89 : f32 to vector<8x128xf32>
    %333 = arith.addf %332, %331 : vector<8x128xf32>
    %334 = arith.mulf %330, %330 : vector<8x128xf32>
    %335 = arith.addf %333, %334 : vector<8x128xf32>
    %336 = math.sqrt %335 : vector<8x128xf32>
    %cst_90 = arith.constant 9.99999997E-7 : f32
    %337 = vector.broadcast %cst_90 : f32 to vector<8x128xf32>
    %338 = arith.addf %336, %337 : vector<8x128xf32>
    %339 = tpu.reciprocal %338 : vector<8x128xf32> -> vector<8x128xf32>
    %340 = arith.mulf %325, %339 : vector<8x128xf32>
    %c8_91 = arith.constant 8 : index
    %c0_92 = arith.constant 0 : index
    %c0_93 = arith.constant 0 : index
    %341 = vector.load %arg6[%c8_91, %c0_92, %c0_93] : memref<14x8x128xf32, #tpu.memory_space<vmem>>, vector<1x8x128xf32>
    %342 = vector.shape_cast %341 : vector<1x8x128xf32> to vector<8x128xf32>
    %343 = vector.shape_cast %340 : vector<8x128xf32> to vector<1x8x128xf32>
    tpu.vector_store %arg6[%c8_91, %c0_92, %c0_93], %343 {strides = array<i32>} : memref<14x8x128xf32, #tpu.memory_space<vmem>>, vector<1x8x128xf32>,
    %344 = arith.mulf %330, %339 : vector<8x128xf32>
    %c9_94 = arith.constant 9 : index
    %c0_95 = arith.constant 0 : index
    %c0_96 = arith.constant 0 : index
    %345 = vector.load %arg6[%c9_94, %c0_95, %c0_96] : memref<14x8x128xf32, #tpu.memory_space<vmem>>, vector<1x8x128xf32>
    %346 = vector.shape_cast %345 : vector<1x8x128xf32> to vector<8x128xf32>
    %347 = vector.shape_cast %344 : vector<8x128xf32> to vector<1x8x128xf32>
    tpu.vector_store %arg6[%c9_94, %c0_95, %c0_96], %347 {strides = array<i32>} : memref<14x8x128xf32, #tpu.memory_space<vmem>>, vector<1x8x128xf32>,
    %c10_97 = arith.constant 10 : index
    %c0_98 = arith.constant 0 : index
    %c0_99 = arith.constant 0 : index
    %348 = vector.load %arg1[%c10_97, %c0_98, %c0_99] : memref<16x8x128xf32, #tpu.memory_space<vmem>>, vector<1x8x128xf32>
    %349 = vector.shape_cast %348 : vector<1x8x128xf32> to vector<8x128xf32>
    %c11_100 = arith.constant 11 : index
    %c0_101 = arith.constant 0 : index
    %c0_102 = arith.constant 0 : index
    %350 = vector.load %arg1[%c11_100, %c0_101, %c0_102] : memref<16x8x128xf32, #tpu.memory_space<vmem>>, vector<1x8x128xf32>
    %351 = vector.shape_cast %350 : vector<1x8x128xf32> to vector<8x128xf32>
    %352 = arith.mulf %349, %349 : vector<8x128xf32>
    %cst_103 = arith.constant 0.000000e+00 : f32
    %353 = vector.broadcast %cst_103 : f32 to vector<8x128xf32>
    %354 = arith.addf %353, %352 : vector<8x128xf32>
    %355 = arith.mulf %351, %351 : vector<8x128xf32>
    %356 = arith.addf %354, %355 : vector<8x128xf32>
    %357 = math.rsqrt %356 : vector<8x128xf32>
    %358 = arith.mulf %349, %357 : vector<8x128xf32>
    %359 = arith.mulf %351, %357 : vector<8x128xf32>
    %c40 = arith.constant 40 : index
    %360 = memref.load %arg2[%c40] : memref<64xf32, #tpu.memory_space<smem>>
    %361 = vector.broadcast %360 : f32 to vector<8x128xf32>
    %362 = arith.mulf %358, %361 : vector<8x128xf32>
    %cst_104 = arith.constant 0.000000e+00 : f32
    %363 = vector.broadcast %cst_104 : f32 to vector<8x128xf32>
    %364 = arith.addf %363, %362 : vector<8x128xf32>
    %c41 = arith.constant 41 : index
    %365 = memref.load %arg2[%c41] : memref<64xf32, #tpu.memory_space<smem>>
    %366 = vector.broadcast %365 : f32 to vector<8x128xf32>
    %367 = arith.mulf %359, %366 : vector<8x128xf32>
    %368 = arith.addf %364, %367 : vector<8x128xf32>
    %c42 = arith.constant 42 : index
    %369 = memref.load %arg2[%c42] : memref<64xf32, #tpu.memory_space<smem>>
    %370 = vector.broadcast %369 : f32 to vector<8x128xf32>
    %371 = arith.mulf %358, %370 : vector<8x128xf32>
    %cst_105 = arith.constant 0.000000e+00 : f32
    %372 = vector.broadcast %cst_105 : f32 to vector<8x128xf32>
    %373 = arith.addf %372, %371 : vector<8x128xf32>
    %c43 = arith.constant 43 : index
    %374 = memref.load %arg2[%c43] : memref<64xf32, #tpu.memory_space<smem>>
    %375 = vector.broadcast %374 : f32 to vector<8x128xf32>
    %376 = arith.mulf %359, %375 : vector<8x128xf32>
    %377 = arith.addf %373, %376 : vector<8x128xf32>
    %c44 = arith.constant 44 : index
    %378 = memref.load %arg2[%c44] : memref<64xf32, #tpu.memory_space<smem>>
    %379 = vector.broadcast %378 : f32 to vector<8x128xf32>
    %380 = arith.mulf %358, %379 : vector<8x128xf32>
    %cst_106 = arith.constant 0.000000e+00 : f32
    %381 = vector.broadcast %cst_106 : f32 to vector<8x128xf32>
    %382 = arith.addf %381, %380 : vector<8x128xf32>
    %c45 = arith.constant 45 : index
    %383 = memref.load %arg2[%c45] : memref<64xf32, #tpu.memory_space<smem>>
    %384 = vector.broadcast %383 : f32 to vector<8x128xf32>
    %385 = arith.mulf %359, %384 : vector<8x128xf32>
    %386 = arith.addf %382, %385 : vector<8x128xf32>
    %c46 = arith.constant 46 : index
    %387 = memref.load %arg2[%c46] : memref<64xf32, #tpu.memory_space<smem>>
    %388 = vector.broadcast %387 : f32 to vector<8x128xf32>
    %389 = arith.mulf %358, %388 : vector<8x128xf32>
    %cst_107 = arith.constant 0.000000e+00 : f32
    %390 = vector.broadcast %cst_107 : f32 to vector<8x128xf32>
    %391 = arith.addf %390, %389 : vector<8x128xf32>
    %c47 = arith.constant 47 : index
    %392 = memref.load %arg2[%c47] : memref<64xf32, #tpu.memory_space<smem>>
    %393 = vector.broadcast %392 : f32 to vector<8x128xf32>
    %394 = arith.mulf %359, %393 : vector<8x128xf32>
    %395 = arith.addf %391, %394 : vector<8x128xf32>
    %396 = arith.mulf %325, %368 : vector<8x128xf32>
    %cst_108 = arith.constant 0.000000e+00 : f32
    %397 = vector.broadcast %cst_108 : f32 to vector<8x128xf32>
    %398 = arith.addf %397, %396 : vector<8x128xf32>
    %399 = arith.mulf %330, %386 : vector<8x128xf32>
    %400 = arith.addf %398, %399 : vector<8x128xf32>
    %401 = arith.mulf %325, %377 : vector<8x128xf32>
    %cst_109 = arith.constant 0.000000e+00 : f32
    %402 = vector.broadcast %cst_109 : f32 to vector<8x128xf32>
    %403 = arith.addf %402, %401 : vector<8x128xf32>
    %404 = arith.mulf %330, %395 : vector<8x128xf32>
    %405 = arith.addf %403, %404 : vector<8x128xf32>
    %406 = arith.mulf %400, %400 : vector<8x128xf32>
    %cst_110 = arith.constant 0.000000e+00 : f32
    %407 = vector.broadcast %cst_110 : f32 to vector<8x128xf32>
    %408 = arith.addf %407, %406 : vector<8x128xf32>
    %409 = arith.mulf %405, %405 : vector<8x128xf32>
    %410 = arith.addf %408, %409 : vector<8x128xf32>
    %411 = math.sqrt %410 : vector<8x128xf32>
    %cst_111 = arith.constant 9.99999997E-7 : f32
    %412 = vector.broadcast %cst_111 : f32 to vector<8x128xf32>
    %413 = arith.addf %411, %412 : vector<8x128xf32>
    %414 = tpu.reciprocal %413 : vector<8x128xf32> -> vector<8x128xf32>
    %415 = arith.mulf %400, %414 : vector<8x128xf32>
    %c10_112 = arith.constant 10 : index
    %c0_113 = arith.constant 0 : index
    %c0_114 = arith.constant 0 : index
    %416 = vector.load %arg6[%c10_112, %c0_113, %c0_114] : memref<14x8x128xf32, #tpu.memory_space<vmem>>, vector<1x8x128xf32>
    %417 = vector.shape_cast %416 : vector<1x8x128xf32> to vector<8x128xf32>
    %418 = vector.shape_cast %415 : vector<8x128xf32> to vector<1x8x128xf32>
    tpu.vector_store %arg6[%c10_112, %c0_113, %c0_114], %418 {strides = array<i32>} : memref<14x8x128xf32, #tpu.memory_space<vmem>>, vector<1x8x128xf32>,
    %419 = arith.mulf %405, %414 : vector<8x128xf32>
    %c11_115 = arith.constant 11 : index
    %c0_116 = arith.constant 0 : index
    %c0_117 = arith.constant 0 : index
    %420 = vector.load %arg6[%c11_115, %c0_116, %c0_117] : memref<14x8x128xf32, #tpu.memory_space<vmem>>, vector<1x8x128xf32>
    %421 = vector.shape_cast %420 : vector<1x8x128xf32> to vector<8x128xf32>
    %422 = vector.shape_cast %419 : vector<8x128xf32> to vector<1x8x128xf32>
    tpu.vector_store %arg6[%c11_115, %c0_116, %c0_117], %422 {strides = array<i32>} : memref<14x8x128xf32, #tpu.memory_space<vmem>>, vector<1x8x128xf32>,
    %c12_118 = arith.constant 12 : index
    %c0_119 = arith.constant 0 : index
    %c0_120 = arith.constant 0 : index
    %423 = vector.load %arg1[%c12_118, %c0_119, %c0_120] : memref<16x8x128xf32, #tpu.memory_space<vmem>>, vector<1x8x128xf32>
    %424 = vector.shape_cast %423 : vector<1x8x128xf32> to vector<8x128xf32>
    %c13_121 = arith.constant 13 : index
    %c0_122 = arith.constant 0 : index
    %c0_123 = arith.constant 0 : index
    %425 = vector.load %arg1[%c13_121, %c0_122, %c0_123] : memref<16x8x128xf32, #tpu.memory_space<vmem>>, vector<1x8x128xf32>
    %426 = vector.shape_cast %425 : vector<1x8x128xf32> to vector<8x128xf32>
    %427 = arith.mulf %424, %424 : vector<8x128xf32>
    %cst_124 = arith.constant 0.000000e+00 : f32
    %428 = vector.broadcast %cst_124 : f32 to vector<8x128xf32>
    %429 = arith.addf %428, %427 : vector<8x128xf32>
    %430 = arith.mulf %426, %426 : vector<8x128xf32>
    %431 = arith.addf %429, %430 : vector<8x128xf32>
    %432 = math.rsqrt %431 : vector<8x128xf32>
    %433 = arith.mulf %424, %432 : vector<8x128xf32>
    %434 = arith.mulf %426, %432 : vector<8x128xf32>
    %c48 = arith.constant 48 : index
    %435 = memref.load %arg2[%c48] : memref<64xf32, #tpu.memory_space<smem>>
    %436 = vector.broadcast %435 : f32 to vector<8x128xf32>
    %437 = arith.mulf %433, %436 : vector<8x128xf32>
    %cst_125 = arith.constant 0.000000e+00 : f32
    %438 = vector.broadcast %cst_125 : f32 to vector<8x128xf32>
    %439 = arith.addf %438, %437 : vector<8x128xf32>
    %c49 = arith.constant 49 : index
    %440 = memref.load %arg2[%c49] : memref<64xf32, #tpu.memory_space<smem>>
    %441 = vector.broadcast %440 : f32 to vector<8x128xf32>
    %442 = arith.mulf %434, %441 : vector<8x128xf32>
    %443 = arith.addf %439, %442 : vector<8x128xf32>
    %c50 = arith.constant 50 : index
    %444 = memref.load %arg2[%c50] : memref<64xf32, #tpu.memory_space<smem>>
    %445 = vector.broadcast %444 : f32 to vector<8x128xf32>
    %446 = arith.mulf %433, %445 : vector<8x128xf32>
    %cst_126 = arith.constant 0.000000e+00 : f32
    %447 = vector.broadcast %cst_126 : f32 to vector<8x128xf32>
    %448 = arith.addf %447, %446 : vector<8x128xf32>
    %c51 = arith.constant 51 : index
    %449 = memref.load %arg2[%c51] : memref<64xf32, #tpu.memory_space<smem>>
    %450 = vector.broadcast %449 : f32 to vector<8x128xf32>
    %451 = arith.mulf %434, %450 : vector<8x128xf32>
    %452 = arith.addf %448, %451 : vector<8x128xf32>
    %c52 = arith.constant 52 : index
    %453 = memref.load %arg2[%c52] : memref<64xf32, #tpu.memory_space<smem>>
    %454 = vector.broadcast %453 : f32 to vector<8x128xf32>
    %455 = arith.mulf %433, %454 : vector<8x128xf32>
    %cst_127 = arith.constant 0.000000e+00 : f32
    %456 = vector.broadcast %cst_127 : f32 to vector<8x128xf32>
    %457 = arith.addf %456, %455 : vector<8x128xf32>
    %c53 = arith.constant 53 : index
    %458 = memref.load %arg2[%c53] : memref<64xf32, #tpu.memory_space<smem>>
    %459 = vector.broadcast %458 : f32 to vector<8x128xf32>
    %460 = arith.mulf %434, %459 : vector<8x128xf32>
    %461 = arith.addf %457, %460 : vector<8x128xf32>
    %c54 = arith.constant 54 : index
    %462 = memref.load %arg2[%c54] : memref<64xf32, #tpu.memory_space<smem>>
    %463 = vector.broadcast %462 : f32 to vector<8x128xf32>
    %464 = arith.mulf %433, %463 : vector<8x128xf32>
    %cst_128 = arith.constant 0.000000e+00 : f32
    %465 = vector.broadcast %cst_128 : f32 to vector<8x128xf32>
    %466 = arith.addf %465, %464 : vector<8x128xf32>
    %c55 = arith.constant 55 : index
    %467 = memref.load %arg2[%c55] : memref<64xf32, #tpu.memory_space<smem>>
    %468 = vector.broadcast %467 : f32 to vector<8x128xf32>
    %469 = arith.mulf %434, %468 : vector<8x128xf32>
    %470 = arith.addf %466, %469 : vector<8x128xf32>
    %471 = arith.mulf %400, %443 : vector<8x128xf32>
    %cst_129 = arith.constant 0.000000e+00 : f32
    %472 = vector.broadcast %cst_129 : f32 to vector<8x128xf32>
    %473 = arith.addf %472, %471 : vector<8x128xf32>
    %474 = arith.mulf %405, %461 : vector<8x128xf32>
    %475 = arith.addf %473, %474 : vector<8x128xf32>
    %476 = arith.mulf %400, %452 : vector<8x128xf32>
    %cst_130 = arith.constant 0.000000e+00 : f32
    %477 = vector.broadcast %cst_130 : f32 to vector<8x128xf32>
    %478 = arith.addf %477, %476 : vector<8x128xf32>
    %479 = arith.mulf %405, %470 : vector<8x128xf32>
    %480 = arith.addf %478, %479 : vector<8x128xf32>
    %481 = arith.mulf %475, %475 : vector<8x128xf32>
    %cst_131 = arith.constant 0.000000e+00 : f32
    %482 = vector.broadcast %cst_131 : f32 to vector<8x128xf32>
    %483 = arith.addf %482, %481 : vector<8x128xf32>
    %484 = arith.mulf %480, %480 : vector<8x128xf32>
    %485 = arith.addf %483, %484 : vector<8x128xf32>
    %486 = math.sqrt %485 : vector<8x128xf32>
    %cst_132 = arith.constant 9.99999997E-7 : f32
    %487 = vector.broadcast %cst_132 : f32 to vector<8x128xf32>
    %488 = arith.addf %486, %487 : vector<8x128xf32>
    %489 = tpu.reciprocal %488 : vector<8x128xf32> -> vector<8x128xf32>
    %490 = arith.mulf %475, %489 : vector<8x128xf32>
    %c12_133 = arith.constant 12 : index
    %c0_134 = arith.constant 0 : index
    %c0_135 = arith.constant 0 : index
    %491 = vector.load %arg6[%c12_133, %c0_134, %c0_135] : memref<14x8x128xf32, #tpu.memory_space<vmem>>, vector<1x8x128xf32>
    %492 = vector.shape_cast %491 : vector<1x8x128xf32> to vector<8x128xf32>
    %493 = vector.shape_cast %490 : vector<8x128xf32> to vector<1x8x128xf32>
    tpu.vector_store %arg6[%c12_133, %c0_134, %c0_135], %493 {strides = array<i32>} : memref<14x8x128xf32, #tpu.memory_space<vmem>>, vector<1x8x128xf32>,
    %494 = arith.mulf %480, %489 : vector<8x128xf32>
    %c13_136 = arith.constant 13 : index
    %c0_137 = arith.constant 0 : index
    %c0_138 = arith.constant 0 : index
    %495 = vector.load %arg6[%c13_136, %c0_137, %c0_138] : memref<14x8x128xf32, #tpu.memory_space<vmem>>, vector<1x8x128xf32>
    %496 = vector.shape_cast %495 : vector<1x8x128xf32> to vector<8x128xf32>
    %497 = vector.shape_cast %494 : vector<8x128xf32> to vector<1x8x128xf32>
    tpu.vector_store %arg6[%c13_136, %c0_137, %c0_138], %497 {strides = array<i32>} : memref<14x8x128xf32, #tpu.memory_space<vmem>>, vector<1x8x128xf32>,
    %c14_139 = arith.constant 14 : index
    %c0_140 = arith.constant 0 : index
    %c0_141 = arith.constant 0 : index
    %498 = vector.load %arg1[%c14_139, %c0_140, %c0_141] : memref<16x8x128xf32, #tpu.memory_space<vmem>>, vector<1x8x128xf32>
    %499 = vector.shape_cast %498 : vector<1x8x128xf32> to vector<8x128xf32>
    %c15_142 = arith.constant 15 : index
    %c0_143 = arith.constant 0 : index
    %c0_144 = arith.constant 0 : index
    %500 = vector.load %arg1[%c15_142, %c0_143, %c0_144] : memref<16x8x128xf32, #tpu.memory_space<vmem>>, vector<1x8x128xf32>
    %501 = vector.shape_cast %500 : vector<1x8x128xf32> to vector<8x128xf32>
    %502 = arith.mulf %499, %499 : vector<8x128xf32>
    %cst_145 = arith.constant 0.000000e+00 : f32
    %503 = vector.broadcast %cst_145 : f32 to vector<8x128xf32>
    %504 = arith.addf %503, %502 : vector<8x128xf32>
    %505 = arith.mulf %501, %501 : vector<8x128xf32>
    %506 = arith.addf %504, %505 : vector<8x128xf32>
    %507 = math.rsqrt %506 : vector<8x128xf32>
    %508 = arith.mulf %499, %507 : vector<8x128xf32>
    %509 = arith.mulf %501, %507 : vector<8x128xf32>
    %c56 = arith.constant 56 : index
    %510 = memref.load %arg2[%c56] : memref<64xf32, #tpu.memory_space<smem>>
    %511 = vector.broadcast %510 : f32 to vector<8x128xf32>
    %512 = arith.mulf %508, %511 : vector<8x128xf32>
    %cst_146 = arith.constant 0.000000e+00 : f32
    %513 = vector.broadcast %cst_146 : f32 to vector<8x128xf32>
    %514 = arith.addf %513, %512 : vector<8x128xf32>
    %c57 = arith.constant 57 : index
    %515 = memref.load %arg2[%c57] : memref<64xf32, #tpu.memory_space<smem>>
    %516 = vector.broadcast %515 : f32 to vector<8x128xf32>
    %517 = arith.mulf %509, %516 : vector<8x128xf32>
    %518 = arith.addf %514, %517 : vector<8x128xf32>
    %c60 = arith.constant 60 : index
    %519 = memref.load %arg2[%c60] : memref<64xf32, #tpu.memory_space<smem>>
    %520 = vector.broadcast %519 : f32 to vector<8x128xf32>
    %521 = arith.mulf %508, %520 : vector<8x128xf32>
    %cst_147 = arith.constant 0.000000e+00 : f32
    %522 = vector.broadcast %cst_147 : f32 to vector<8x128xf32>
    %523 = arith.addf %522, %521 : vector<8x128xf32>
    %c61 = arith.constant 61 : index
    %524 = memref.load %arg2[%c61] : memref<64xf32, #tpu.memory_space<smem>>
    %525 = vector.broadcast %524 : f32 to vector<8x128xf32>
    %526 = arith.mulf %509, %525 : vector<8x128xf32>
    %527 = arith.addf %523, %526 : vector<8x128xf32>
    %528 = arith.mulf %518, %518 : vector<8x128xf32>
    %cst_148 = arith.constant 0.000000e+00 : f32
    %529 = vector.broadcast %cst_148 : f32 to vector<8x128xf32>
    %530 = arith.addf %529, %528 : vector<8x128xf32>
    %531 = arith.mulf %527, %527 : vector<8x128xf32>
    %532 = arith.addf %530, %531 : vector<8x128xf32>
    %533 = math.sqrt %532 : vector<8x128xf32>
    %cst_149 = arith.constant 9.99999997E-7 : f32
    %534 = vector.broadcast %cst_149 : f32 to vector<8x128xf32>
    %535 = arith.addf %533, %534 : vector<8x128xf32>
    %536 = tpu.reciprocal %535 : vector<8x128xf32> -> vector<8x128xf32>
    %537 = arith.mulf %518, %536 : vector<8x128xf32>
    %c12_150 = arith.constant 12 : index
    %c0_151 = arith.constant 0 : index
    %c0_152 = arith.constant 0 : index
    %538 = vector.load %arg7[%c12_150, %c0_151, %c0_152] : memref<14x8x128xf32, #tpu.memory_space<vmem>>, vector<1x8x128xf32>
    %539 = vector.shape_cast %538 : vector<1x8x128xf32> to vector<8x128xf32>
    %540 = vector.shape_cast %537 : vector<8x128xf32> to vector<1x8x128xf32>
    tpu.vector_store %arg7[%c12_150, %c0_151, %c0_152], %540 {strides = array<i32>} : memref<14x8x128xf32, #tpu.memory_space<vmem>>, vector<1x8x128xf32>,
    %541 = arith.mulf %527, %536 : vector<8x128xf32>
    %c13_153 = arith.constant 13 : index
    %c0_154 = arith.constant 0 : index
    %c0_155 = arith.constant 0 : index
    %542 = vector.load %arg7[%c13_153, %c0_154, %c0_155] : memref<14x8x128xf32, #tpu.memory_space<vmem>>, vector<1x8x128xf32>
    %543 = vector.shape_cast %542 : vector<1x8x128xf32> to vector<8x128xf32>
    %544 = vector.shape_cast %541 : vector<8x128xf32> to vector<1x8x128xf32>
    tpu.vector_store %arg7[%c13_153, %c0_154, %c0_155], %544 {strides = array<i32>} : memref<14x8x128xf32, #tpu.memory_space<vmem>>, vector<1x8x128xf32>,
    %c12_156 = arith.constant 12 : index
    %c0_157 = arith.constant 0 : index
    %c0_158 = arith.constant 0 : index
    %545 = vector.load %arg1[%c12_156, %c0_157, %c0_158] : memref<16x8x128xf32, #tpu.memory_space<vmem>>, vector<1x8x128xf32>
    %546 = vector.shape_cast %545 : vector<1x8x128xf32> to vector<8x128xf32>
    %c13_159 = arith.constant 13 : index
    %c0_160 = arith.constant 0 : index
    %c0_161 = arith.constant 0 : index
    %547 = vector.load %arg1[%c13_159, %c0_160, %c0_161] : memref<16x8x128xf32, #tpu.memory_space<vmem>>, vector<1x8x128xf32>
    %548 = vector.shape_cast %547 : vector<1x8x128xf32> to vector<8x128xf32>
    %549 = arith.mulf %546, %546 : vector<8x128xf32>
    %cst_162 = arith.constant 0.000000e+00 : f32
    %550 = vector.broadcast %cst_162 : f32 to vector<8x128xf32>
    %551 = arith.addf %550, %549 : vector<8x128xf32>
    %552 = arith.mulf %548, %548 : vector<8x128xf32>
    %553 = arith.addf %551, %552 : vector<8x128xf32>
    %554 = math.rsqrt %553 : vector<8x128xf32>
    %555 = arith.mulf %546, %554 : vector<8x128xf32>
    %556 = arith.mulf %548, %554 : vector<8x128xf32>
    %c48_163 = arith.constant 48 : index
    %557 = memref.load %arg2[%c48_163] : memref<64xf32, #tpu.memory_space<smem>>
    %558 = vector.broadcast %557 : f32 to vector<8x128xf32>
    %559 = arith.mulf %555, %558 : vector<8x128xf32>
    %cst_164 = arith.constant 0.000000e+00 : f32
    %560 = vector.broadcast %cst_164 : f32 to vector<8x128xf32>
    %561 = arith.addf %560, %559 : vector<8x128xf32>
    %c49_165 = arith.constant 49 : index
    %562 = memref.load %arg2[%c49_165] : memref<64xf32, #tpu.memory_space<smem>>
    %563 = vector.broadcast %562 : f32 to vector<8x128xf32>
    %564 = arith.mulf %556, %563 : vector<8x128xf32>
    %565 = arith.addf %561, %564 : vector<8x128xf32>
    %c50_166 = arith.constant 50 : index
    %566 = memref.load %arg2[%c50_166] : memref<64xf32, #tpu.memory_space<smem>>
    %567 = vector.broadcast %566 : f32 to vector<8x128xf32>
    %568 = arith.mulf %555, %567 : vector<8x128xf32>
    %cst_167 = arith.constant 0.000000e+00 : f32
    %569 = vector.broadcast %cst_167 : f32 to vector<8x128xf32>
    %570 = arith.addf %569, %568 : vector<8x128xf32>
    %c51_168 = arith.constant 51 : index
    %571 = memref.load %arg2[%c51_168] : memref<64xf32, #tpu.memory_space<smem>>
    %572 = vector.broadcast %571 : f32 to vector<8x128xf32>
    %573 = arith.mulf %556, %572 : vector<8x128xf32>
    %574 = arith.addf %570, %573 : vector<8x128xf32>
    %c52_169 = arith.constant 52 : index
    %575 = memref.load %arg2[%c52_169] : memref<64xf32, #tpu.memory_space<smem>>
    %576 = vector.broadcast %575 : f32 to vector<8x128xf32>
    %577 = arith.mulf %555, %576 : vector<8x128xf32>
    %cst_170 = arith.constant 0.000000e+00 : f32
    %578 = vector.broadcast %cst_170 : f32 to vector<8x128xf32>
    %579 = arith.addf %578, %577 : vector<8x128xf32>
    %c53_171 = arith.constant 53 : index
    %580 = memref.load %arg2[%c53_171] : memref<64xf32, #tpu.memory_space<smem>>
    %581 = vector.broadcast %580 : f32 to vector<8x128xf32>
    %582 = arith.mulf %556, %581 : vector<8x128xf32>
    %583 = arith.addf %579, %582 : vector<8x128xf32>
    %c54_172 = arith.constant 54 : index
    %584 = memref.load %arg2[%c54_172] : memref<64xf32, #tpu.memory_space<smem>>
    %585 = vector.broadcast %584 : f32 to vector<8x128xf32>
    %586 = arith.mulf %555, %585 : vector<8x128xf32>
    %cst_173 = arith.constant 0.000000e+00 : f32
    %587 = vector.broadcast %cst_173 : f32 to vector<8x128xf32>
    %588 = arith.addf %587, %586 : vector<8x128xf32>
    %c55_174 = arith.constant 55 : index
    %589 = memref.load %arg2[%c55_174] : memref<64xf32, #tpu.memory_space<smem>>
    %590 = vector.broadcast %589 : f32 to vector<8x128xf32>
    %591 = arith.mulf %556, %590 : vector<8x128xf32>
    %592 = arith.addf %588, %591 : vector<8x128xf32>
    %593 = arith.mulf %565, %518 : vector<8x128xf32>
    %cst_175 = arith.constant 0.000000e+00 : f32
    %594 = vector.broadcast %cst_175 : f32 to vector<8x128xf32>
    %595 = arith.addf %594, %593 : vector<8x128xf32>
    %596 = arith.mulf %574, %527 : vector<8x128xf32>
    %597 = arith.addf %595, %596 : vector<8x128xf32>
    %598 = arith.mulf %583, %518 : vector<8x128xf32>
    %cst_176 = arith.constant 0.000000e+00 : f32
    %599 = vector.broadcast %cst_176 : f32 to vector<8x128xf32>
    %600 = arith.addf %599, %598 : vector<8x128xf32>
    %601 = arith.mulf %592, %527 : vector<8x128xf32>
    %602 = arith.addf %600, %601 : vector<8x128xf32>
    %603 = arith.mulf %597, %597 : vector<8x128xf32>
    %cst_177 = arith.constant 0.000000e+00 : f32
    %604 = vector.broadcast %cst_177 : f32 to vector<8x128xf32>
    %605 = arith.addf %604, %603 : vector<8x128xf32>
    %606 = arith.mulf %602, %602 : vector<8x128xf32>
    %607 = arith.addf %605, %606 : vector<8x128xf32>
    %608 = math.sqrt %607 : vector<8x128xf32>
    %cst_178 = arith.constant 9.99999997E-7 : f32
    %609 = vector.broadcast %cst_178 : f32 to vector<8x128xf32>
    %610 = arith.addf %608, %609 : vector<8x128xf32>
    %611 = tpu.reciprocal %610 : vector<8x128xf32> -> vector<8x128xf32>
    %612 = arith.mulf %597, %611 : vector<8x128xf32>
    %c10_179 = arith.constant 10 : index
    %c0_180 = arith.constant 0 : index
    %c0_181 = arith.constant 0 : index
    %613 = vector.load %arg7[%c10_179, %c0_180, %c0_181] : memref<14x8x128xf32, #tpu.memory_space<vmem>>, vector<1x8x128xf32>
    %614 = vector.shape_cast %613 : vector<1x8x128xf32> to vector<8x128xf32>
    %615 = vector.shape_cast %612 : vector<8x128xf32> to vector<1x8x128xf32>
    tpu.vector_store %arg7[%c10_179, %c0_180, %c0_181], %615 {strides = array<i32>} : memref<14x8x128xf32, #tpu.memory_space<vmem>>, vector<1x8x128xf32>,
    %616 = arith.mulf %602, %611 : vector<8x128xf32>
    %c11_182 = arith.constant 11 : index
    %c0_183 = arith.constant 0 : index
    %c0_184 = arith.constant 0 : index
    %617 = vector.load %arg7[%c11_182, %c0_183, %c0_184] : memref<14x8x128xf32, #tpu.memory_space<vmem>>, vector<1x8x128xf32>
    %618 = vector.shape_cast %617 : vector<1x8x128xf32> to vector<8x128xf32>
    %619 = vector.shape_cast %616 : vector<8x128xf32> to vector<1x8x128xf32>
    tpu.vector_store %arg7[%c11_182, %c0_183, %c0_184], %619 {strides = array<i32>} : memref<14x8x128xf32, #tpu.memory_space<vmem>>, vector<1x8x128xf32>,
    %c10_185 = arith.constant 10 : index
    %c0_186 = arith.constant 0 : index
    %c0_187 = arith.constant 0 : index
    %620 = vector.load %arg1[%c10_185, %c0_186, %c0_187] : memref<16x8x128xf32, #tpu.memory_space<vmem>>, vector<1x8x128xf32>
    %621 = vector.shape_cast %620 : vector<1x8x128xf32> to vector<8x128xf32>
    %c11_188 = arith.constant 11 : index
    %c0_189 = arith.constant 0 : index
    %c0_190 = arith.constant 0 : index
    %622 = vector.load %arg1[%c11_188, %c0_189, %c0_190] : memref<16x8x128xf32, #tpu.memory_space<vmem>>, vector<1x8x128xf32>
    %623 = vector.shape_cast %622 : vector<1x8x128xf32> to vector<8x128xf32>
    %624 = arith.mulf %621, %621 : vector<8x128xf32>
    %cst_191 = arith.constant 0.000000e+00 : f32
    %625 = vector.broadcast %cst_191 : f32 to vector<8x128xf32>
    %626 = arith.addf %625, %624 : vector<8x128xf32>
    %627 = arith.mulf %623, %623 : vector<8x128xf32>
    %628 = arith.addf %626, %627 : vector<8x128xf32>
    %629 = math.rsqrt %628 : vector<8x128xf32>
    %630 = arith.mulf %621, %629 : vector<8x128xf32>
    %631 = arith.mulf %623, %629 : vector<8x128xf32>
    %c40_192 = arith.constant 40 : index
    %632 = memref.load %arg2[%c40_192] : memref<64xf32, #tpu.memory_space<smem>>
    %633 = vector.broadcast %632 : f32 to vector<8x128xf32>
    %634 = arith.mulf %630, %633 : vector<8x128xf32>
    %cst_193 = arith.constant 0.000000e+00 : f32
    %635 = vector.broadcast %cst_193 : f32 to vector<8x128xf32>
    %636 = arith.addf %635, %634 : vector<8x128xf32>
    %c41_194 = arith.constant 41 : index
    %637 = memref.load %arg2[%c41_194] : memref<64xf32, #tpu.memory_space<smem>>
    %638 = vector.broadcast %637 : f32 to vector<8x128xf32>
    %639 = arith.mulf %631, %638 : vector<8x128xf32>
    %640 = arith.addf %636, %639 : vector<8x128xf32>
    %c42_195 = arith.constant 42 : index
    %641 = memref.load %arg2[%c42_195] : memref<64xf32, #tpu.memory_space<smem>>
    %642 = vector.broadcast %641 : f32 to vector<8x128xf32>
    %643 = arith.mulf %630, %642 : vector<8x128xf32>
    %cst_196 = arith.constant 0.000000e+00 : f32
    %644 = vector.broadcast %cst_196 : f32 to vector<8x128xf32>
    %645 = arith.addf %644, %643 : vector<8x128xf32>
    %c43_197 = arith.constant 43 : index
    %646 = memref.load %arg2[%c43_197] : memref<64xf32, #tpu.memory_space<smem>>
    %647 = vector.broadcast %646 : f32 to vector<8x128xf32>
    %648 = arith.mulf %631, %647 : vector<8x128xf32>
    %649 = arith.addf %645, %648 : vector<8x128xf32>
    %c44_198 = arith.constant 44 : index
    %650 = memref.load %arg2[%c44_198] : memref<64xf32, #tpu.memory_space<smem>>
    %651 = vector.broadcast %650 : f32 to vector<8x128xf32>
    %652 = arith.mulf %630, %651 : vector<8x128xf32>
    %cst_199 = arith.constant 0.000000e+00 : f32
    %653 = vector.broadcast %cst_199 : f32 to vector<8x128xf32>
    %654 = arith.addf %653, %652 : vector<8x128xf32>
    %c45_200 = arith.constant 45 : index
    %655 = memref.load %arg2[%c45_200] : memref<64xf32, #tpu.memory_space<smem>>
    %656 = vector.broadcast %655 : f32 to vector<8x128xf32>
    %657 = arith.mulf %631, %656 : vector<8x128xf32>
    %658 = arith.addf %654, %657 : vector<8x128xf32>
    %c46_201 = arith.constant 46 : index
    %659 = memref.load %arg2[%c46_201] : memref<64xf32, #tpu.memory_space<smem>>
    %660 = vector.broadcast %659 : f32 to vector<8x128xf32>
    %661 = arith.mulf %630, %660 : vector<8x128xf32>
    %cst_202 = arith.constant 0.000000e+00 : f32
    %662 = vector.broadcast %cst_202 : f32 to vector<8x128xf32>
    %663 = arith.addf %662, %661 : vector<8x128xf32>
    %c47_203 = arith.constant 47 : index
    %664 = memref.load %arg2[%c47_203] : memref<64xf32, #tpu.memory_space<smem>>
    %665 = vector.broadcast %664 : f32 to vector<8x128xf32>
    %666 = arith.mulf %631, %665 : vector<8x128xf32>
    %667 = arith.addf %663, %666 : vector<8x128xf32>
    %668 = arith.mulf %640, %597 : vector<8x128xf32>
    %cst_204 = arith.constant 0.000000e+00 : f32
    %669 = vector.broadcast %cst_204 : f32 to vector<8x128xf32>
    %670 = arith.addf %669, %668 : vector<8x128xf32>
    %671 = arith.mulf %649, %602 : vector<8x128xf32>
    %672 = arith.addf %670, %671 : vector<8x128xf32>
    %673 = arith.mulf %658, %597 : vector<8x128xf32>
    %cst_205 = arith.constant 0.000000e+00 : f32
    %674 = vector.broadcast %cst_205 : f32 to vector<8x128xf32>
    %675 = arith.addf %674, %673 : vector<8x128xf32>
    %676 = arith.mulf %667, %602 : vector<8x128xf32>
    %677 = arith.addf %675, %676 : vector<8x128xf32>
    %678 = arith.mulf %672, %672 : vector<8x128xf32>
    %cst_206 = arith.constant 0.000000e+00 : f32
    %679 = vector.broadcast %cst_206 : f32 to vector<8x128xf32>
    %680 = arith.addf %679, %678 : vector<8x128xf32>
    %681 = arith.mulf %677, %677 : vector<8x128xf32>
    %682 = arith.addf %680, %681 : vector<8x128xf32>
    %683 = math.sqrt %682 : vector<8x128xf32>
    %cst_207 = arith.constant 9.99999997E-7 : f32
    %684 = vector.broadcast %cst_207 : f32 to vector<8x128xf32>
    %685 = arith.addf %683, %684 : vector<8x128xf32>
    %686 = tpu.reciprocal %685 : vector<8x128xf32> -> vector<8x128xf32>
    %687 = arith.mulf %672, %686 : vector<8x128xf32>
    %c8_208 = arith.constant 8 : index
    %c0_209 = arith.constant 0 : index
    %c0_210 = arith.constant 0 : index
    %688 = vector.load %arg7[%c8_208, %c0_209, %c0_210] : memref<14x8x128xf32, #tpu.memory_space<vmem>>, vector<1x8x128xf32>
    %689 = vector.shape_cast %688 : vector<1x8x128xf32> to vector<8x128xf32>
    %690 = vector.shape_cast %687 : vector<8x128xf32> to vector<1x8x128xf32>
    tpu.vector_store %arg7[%c8_208, %c0_209, %c0_210], %690 {strides = array<i32>} : memref<14x8x128xf32, #tpu.memory_space<vmem>>, vector<1x8x128xf32>,
    %691 = arith.mulf %677, %686 : vector<8x128xf32>
    %c9_211 = arith.constant 9 : index
    %c0_212 = arith.constant 0 : index
    %c0_213 = arith.constant 0 : index
    %692 = vector.load %arg7[%c9_211, %c0_212, %c0_213] : memref<14x8x128xf32, #tpu.memory_space<vmem>>, vector<1x8x128xf32>
    %693 = vector.shape_cast %692 : vector<1x8x128xf32> to vector<8x128xf32>
    %694 = vector.shape_cast %691 : vector<8x128xf32> to vector<1x8x128xf32>
    tpu.vector_store %arg7[%c9_211, %c0_212, %c0_213], %694 {strides = array<i32>} : memref<14x8x128xf32, #tpu.memory_space<vmem>>, vector<1x8x128xf32>,
    %c8_214 = arith.constant 8 : index
    %c0_215 = arith.constant 0 : index
    %c0_216 = arith.constant 0 : index
    %695 = vector.load %arg1[%c8_214, %c0_215, %c0_216] : memref<16x8x128xf32, #tpu.memory_space<vmem>>, vector<1x8x128xf32>
    %696 = vector.shape_cast %695 : vector<1x8x128xf32> to vector<8x128xf32>
    %c9_217 = arith.constant 9 : index
    %c0_218 = arith.constant 0 : index
    %c0_219 = arith.constant 0 : index
    %697 = vector.load %arg1[%c9_217, %c0_218, %c0_219] : memref<16x8x128xf32, #tpu.memory_space<vmem>>, vector<1x8x128xf32>
    %698 = vector.shape_cast %697 : vector<1x8x128xf32> to vector<8x128xf32>
    %699 = arith.mulf %696, %696 : vector<8x128xf32>
    %cst_220 = arith.constant 0.000000e+00 : f32
    %700 = vector.broadcast %cst_220 : f32 to vector<8x128xf32>
    %701 = arith.addf %700, %699 : vector<8x128xf32>
    %702 = arith.mulf %698, %698 : vector<8x128xf32>
    %703 = arith.addf %701, %702 : vector<8x128xf32>
    %704 = math.rsqrt %703 : vector<8x128xf32>
    %705 = arith.mulf %696, %704 : vector<8x128xf32>
    %706 = arith.mulf %698, %704 : vector<8x128xf32>
    %c32_221 = arith.constant 32 : index
    %707 = memref.load %arg2[%c32_221] : memref<64xf32, #tpu.memory_space<smem>>
    %708 = vector.broadcast %707 : f32 to vector<8x128xf32>
    %709 = arith.mulf %705, %708 : vector<8x128xf32>
    %cst_222 = arith.constant 0.000000e+00 : f32
    %710 = vector.broadcast %cst_222 : f32 to vector<8x128xf32>
    %711 = arith.addf %710, %709 : vector<8x128xf32>
    %c33_223 = arith.constant 33 : index
    %712 = memref.load %arg2[%c33_223] : memref<64xf32, #tpu.memory_space<smem>>
    %713 = vector.broadcast %712 : f32 to vector<8x128xf32>
    %714 = arith.mulf %706, %713 : vector<8x128xf32>
    %715 = arith.addf %711, %714 : vector<8x128xf32>
    %c34_224 = arith.constant 34 : index
    %716 = memref.load %arg2[%c34_224] : memref<64xf32, #tpu.memory_space<smem>>
    %717 = vector.broadcast %716 : f32 to vector<8x128xf32>
    %718 = arith.mulf %705, %717 : vector<8x128xf32>
    %cst_225 = arith.constant 0.000000e+00 : f32
    %719 = vector.broadcast %cst_225 : f32 to vector<8x128xf32>
    %720 = arith.addf %719, %718 : vector<8x128xf32>
    %c35_226 = arith.constant 35 : index
    %721 = memref.load %arg2[%c35_226] : memref<64xf32, #tpu.memory_space<smem>>
    %722 = vector.broadcast %721 : f32 to vector<8x128xf32>
    %723 = arith.mulf %706, %722 : vector<8x128xf32>
    %724 = arith.addf %720, %723 : vector<8x128xf32>
    %c36_227 = arith.constant 36 : index
    %725 = memref.load %arg2[%c36_227] : memref<64xf32, #tpu.memory_space<smem>>
    %726 = vector.broadcast %725 : f32 to vector<8x128xf32>
    %727 = arith.mulf %705, %726 : vector<8x128xf32>
    %cst_228 = arith.constant 0.000000e+00 : f32
    %728 = vector.broadcast %cst_228 : f32 to vector<8x128xf32>
    %729 = arith.addf %728, %727 : vector<8x128xf32>
    %c37_229 = arith.constant 37 : index
    %730 = memref.load %arg2[%c37_229] : memref<64xf32, #tpu.memory_space<smem>>
    %731 = vector.broadcast %730 : f32 to vector<8x128xf32>
    %732 = arith.mulf %706, %731 : vector<8x128xf32>
    %733 = arith.addf %729, %732 : vector<8x128xf32>
    %c38_230 = arith.constant 38 : index
    %734 = memref.load %arg2[%c38_230] : memref<64xf32, #tpu.memory_space<smem>>
    %735 = vector.broadcast %734 : f32 to vector<8x128xf32>
    %736 = arith.mulf %705, %735 : vector<8x128xf32>
    %cst_231 = arith.constant 0.000000e+00 : f32
    %737 = vector.broadcast %cst_231 : f32 to vector<8x128xf32>
    %738 = arith.addf %737, %736 : vector<8x128xf32>
    %c39_232 = arith.constant 39 : index
    %739 = memref.load %arg2[%c39_232] : memref<64xf32, #tpu.memory_space<smem>>
    %740 = vector.broadcast %739 : f32 to vector<8x128xf32>
    %741 = arith.mulf %706, %740 : vector<8x128xf32>
    %742 = arith.addf %738, %741 : vector<8x128xf32>
    %743 = arith.mulf %715, %672 : vector<8x128xf32>
    %cst_233 = arith.constant 0.000000e+00 : f32
    %744 = vector.broadcast %cst_233 : f32 to vector<8x128xf32>
    %745 = arith.addf %744, %743 : vector<8x128xf32>
    %746 = arith.mulf %724, %677 : vector<8x128xf32>
    %747 = arith.addf %745, %746 : vector<8x128xf32>
    %748 = arith.mulf %733, %672 : vector<8x128xf32>
    %cst_234 = arith.constant 0.000000e+00 : f32
    %749 = vector.broadcast %cst_234 : f32 to vector<8x128xf32>
    %750 = arith.addf %749, %748 : vector<8x128xf32>
    %751 = arith.mulf %742, %677 : vector<8x128xf32>
    %752 = arith.addf %750, %751 : vector<8x128xf32>
    %753 = arith.mulf %747, %747 : vector<8x128xf32>
    %cst_235 = arith.constant 0.000000e+00 : f32
    %754 = vector.broadcast %cst_235 : f32 to vector<8x128xf32>
    %755 = arith.addf %754, %753 : vector<8x128xf32>
    %756 = arith.mulf %752, %752 : vector<8x128xf32>
    %757 = arith.addf %755, %756 : vector<8x128xf32>
    %758 = math.sqrt %757 : vector<8x128xf32>
    %cst_236 = arith.constant 9.99999997E-7 : f32
    %759 = vector.broadcast %cst_236 : f32 to vector<8x128xf32>
    %760 = arith.addf %758, %759 : vector<8x128xf32>
    %761 = tpu.reciprocal %760 : vector<8x128xf32> -> vector<8x128xf32>
    %762 = arith.mulf %747, %761 : vector<8x128xf32>
    %c6_237 = arith.constant 6 : index
    %c0_238 = arith.constant 0 : index
    %c0_239 = arith.constant 0 : index
    %763 = vector.load %arg7[%c6_237, %c0_238, %c0_239] : memref<14x8x128xf32, #tpu.memory_space<vmem>>, vector<1x8x128xf32>
    %764 = vector.shape_cast %763 : vector<1x8x128xf32> to vector<8x128xf32>
    %765 = vector.shape_cast %762 : vector<8x128xf32> to vector<1x8x128xf32>
    tpu.vector_store %arg7[%c6_237, %c0_238, %c0_239], %765 {strides = array<i32>} : memref<14x8x128xf32, #tpu.memory_space<vmem>>, vector<1x8x128xf32>,
    %766 = arith.mulf %752, %761 : vector<8x128xf32>
    %c7_240 = arith.constant 7 : index
    %c0_241 = arith.constant 0 : index
    %c0_242 = arith.constant 0 : index
    %767 = vector.load %arg7[%c7_240, %c0_241, %c0_242] : memref<14x8x128xf32, #tpu.memory_space<vmem>>, vector<1x8x128xf32>
    %768 = vector.shape_cast %767 : vector<1x8x128xf32> to vector<8x128xf32>
    %769 = vector.shape_cast %766 : vector<8x128xf32> to vector<1x8x128xf32>
    tpu.vector_store %arg7[%c7_240, %c0_241, %c0_242], %769 {strides = array<i32>} : memref<14x8x128xf32, #tpu.memory_space<vmem>>, vector<1x8x128xf32>,
    %c6_243 = arith.constant 6 : index
    %c0_244 = arith.constant 0 : index
    %c0_245 = arith.constant 0 : index
    %770 = vector.load %arg1[%c6_243, %c0_244, %c0_245] : memref<16x8x128xf32, #tpu.memory_space<vmem>>, vector<1x8x128xf32>
    %771 = vector.shape_cast %770 : vector<1x8x128xf32> to vector<8x128xf32>
    %c7_246 = arith.constant 7 : index
    %c0_247 = arith.constant 0 : index
    %c0_248 = arith.constant 0 : index
    %772 = vector.load %arg1[%c7_246, %c0_247, %c0_248] : memref<16x8x128xf32, #tpu.memory_space<vmem>>, vector<1x8x128xf32>
    %773 = vector.shape_cast %772 : vector<1x8x128xf32> to vector<8x128xf32>
    %774 = arith.mulf %771, %771 : vector<8x128xf32>
    %cst_249 = arith.constant 0.000000e+00 : f32
    %775 = vector.broadcast %cst_249 : f32 to vector<8x128xf32>
    %776 = arith.addf %775, %774 : vector<8x128xf32>
    %777 = arith.mulf %773, %773 : vector<8x128xf32>
    %778 = arith.addf %776, %777 : vector<8x128xf32>
    %779 = math.rsqrt %778 : vector<8x128xf32>
    %780 = arith.mulf %771, %779 : vector<8x128xf32>
    %781 = arith.mulf %773, %779 : vector<8x128xf32>
    %c24_250 = arith.constant 24 : index
    %782 = memref.load %arg2[%c24_250] : memref<64xf32, #tpu.memory_space<smem>>
    %783 = vector.broadcast %782 : f32 to vector<8x128xf32>
    %784 = arith.mulf %780, %783 : vector<8x128xf32>
    %cst_251 = arith.constant 0.000000e+00 : f32
    %785 = vector.broadcast %cst_251 : f32 to vector<8x128xf32>
    %786 = arith.addf %785, %784 : vector<8x128xf32>
    %c25_252 = arith.constant 25 : index
    %787 = memref.load %arg2[%c25_252] : memref<64xf32, #tpu.memory_space<smem>>
    %788 = vector.broadcast %787 : f32 to vector<8x128xf32>
    %789 = arith.mulf %781, %788 : vector<8x128xf32>
    %790 = arith.addf %786, %789 : vector<8x128xf32>
    %c26_253 = arith.constant 26 : index
    %791 = memref.load %arg2[%c26_253] : memref<64xf32, #tpu.memory_space<smem>>
    %792 = vector.broadcast %791 : f32 to vector<8x128xf32>
    %793 = arith.mulf %780, %792 : vector<8x128xf32>
    %cst_254 = arith.constant 0.000000e+00 : f32
    %794 = vector.broadcast %cst_254 : f32 to vector<8x128xf32>
    %795 = arith.addf %794, %793 : vector<8x128xf32>
    %c27_255 = arith.constant 27 : index
    %796 = memref.load %arg2[%c27_255] : memref<64xf32, #tpu.memory_space<smem>>
    %797 = vector.broadcast %796 : f32 to vector<8x128xf32>
    %798 = arith.mulf %781, %797 : vector<8x128xf32>
    %799 = arith.addf %795, %798 : vector<8x128xf32>
    %c28_256 = arith.constant 28 : index
    %800 = memref.load %arg2[%c28_256] : memref<64xf32, #tpu.memory_space<smem>>
    %801 = vector.broadcast %800 : f32 to vector<8x128xf32>
    %802 = arith.mulf %780, %801 : vector<8x128xf32>
    %cst_257 = arith.constant 0.000000e+00 : f32
    %803 = vector.broadcast %cst_257 : f32 to vector<8x128xf32>
    %804 = arith.addf %803, %802 : vector<8x128xf32>
    %c29_258 = arith.constant 29 : index
    %805 = memref.load %arg2[%c29_258] : memref<64xf32, #tpu.memory_space<smem>>
    %806 = vector.broadcast %805 : f32 to vector<8x128xf32>
    %807 = arith.mulf %781, %806 : vector<8x128xf32>
    %808 = arith.addf %804, %807 : vector<8x128xf32>
    %c30_259 = arith.constant 30 : index
    %809 = memref.load %arg2[%c30_259] : memref<64xf32, #tpu.memory_space<smem>>
    %810 = vector.broadcast %809 : f32 to vector<8x128xf32>
    %811 = arith.mulf %780, %810 : vector<8x128xf32>
    %cst_260 = arith.constant 0.000000e+00 : f32
    %812 = vector.broadcast %cst_260 : f32 to vector<8x128xf32>
    %813 = arith.addf %812, %811 : vector<8x128xf32>
    %c31_261 = arith.constant 31 : index
    %814 = memref.load %arg2[%c31_261] : memref<64xf32, #tpu.memory_space<smem>>
    %815 = vector.broadcast %814 : f32 to vector<8x128xf32>
    %816 = arith.mulf %781, %815 : vector<8x128xf32>
    %817 = arith.addf %813, %816 : vector<8x128xf32>
    %818 = arith.mulf %790, %747 : vector<8x128xf32>
    %cst_262 = arith.constant 0.000000e+00 : f32
    %819 = vector.broadcast %cst_262 : f32 to vector<8x128xf32>
    %820 = arith.addf %819, %818 : vector<8x128xf32>
    %821 = arith.mulf %799, %752 : vector<8x128xf32>
    %822 = arith.addf %820, %821 : vector<8x128xf32>
    %823 = arith.mulf %808, %747 : vector<8x128xf32>
    %cst_263 = arith.constant 0.000000e+00 : f32
    %824 = vector.broadcast %cst_263 : f32 to vector<8x128xf32>
    %825 = arith.addf %824, %823 : vector<8x128xf32>
    %826 = arith.mulf %817, %752 : vector<8x128xf32>
    %827 = arith.addf %825, %826 : vector<8x128xf32>
    %828 = arith.mulf %822, %822 : vector<8x128xf32>
    %cst_264 = arith.constant 0.000000e+00 : f32
    %829 = vector.broadcast %cst_264 : f32 to vector<8x128xf32>
    %830 = arith.addf %829, %828 : vector<8x128xf32>
    %831 = arith.mulf %827, %827 : vector<8x128xf32>
    %832 = arith.addf %830, %831 : vector<8x128xf32>
    %833 = math.sqrt %832 : vector<8x128xf32>
    %cst_265 = arith.constant 9.99999997E-7 : f32
    %834 = vector.broadcast %cst_265 : f32 to vector<8x128xf32>
    %835 = arith.addf %833, %834 : vector<8x128xf32>
    %836 = tpu.reciprocal %835 : vector<8x128xf32> -> vector<8x128xf32>
    %837 = arith.mulf %822, %836 : vector<8x128xf32>
    %c4_266 = arith.constant 4 : index
    %c0_267 = arith.constant 0 : index
    %c0_268 = arith.constant 0 : index
    %838 = vector.load %arg7[%c4_266, %c0_267, %c0_268] : memref<14x8x128xf32, #tpu.memory_space<vmem>>, vector<1x8x128xf32>
    %839 = vector.shape_cast %838 : vector<1x8x128xf32> to vector<8x128xf32>
    %840 = vector.shape_cast %837 : vector<8x128xf32> to vector<1x8x128xf32>
    tpu.vector_store %arg7[%c4_266, %c0_267, %c0_268], %840 {strides = array<i32>} : memref<14x8x128xf32, #tpu.memory_space<vmem>>, vector<1x8x128xf32>,
    %841 = arith.mulf %827, %836 : vector<8x128xf32>
    %c5_269 = arith.constant 5 : index
    %c0_270 = arith.constant 0 : index
    %c0_271 = arith.constant 0 : index
    %842 = vector.load %arg7[%c5_269, %c0_270, %c0_271] : memref<14x8x128xf32, #tpu.memory_space<vmem>>, vector<1x8x128xf32>
    %843 = vector.shape_cast %842 : vector<1x8x128xf32> to vector<8x128xf32>
    %844 = vector.shape_cast %841 : vector<8x128xf32> to vector<1x8x128xf32>
    tpu.vector_store %arg7[%c5_269, %c0_270, %c0_271], %844 {strides = array<i32>} : memref<14x8x128xf32, #tpu.memory_space<vmem>>, vector<1x8x128xf32>,
    %c4_272 = arith.constant 4 : index
    %c0_273 = arith.constant 0 : index
    %c0_274 = arith.constant 0 : index
    %845 = vector.load %arg1[%c4_272, %c0_273, %c0_274] : memref<16x8x128xf32, #tpu.memory_space<vmem>>, vector<1x8x128xf32>
    %846 = vector.shape_cast %845 : vector<1x8x128xf32> to vector<8x128xf32>
    %c5_275 = arith.constant 5 : index
    %c0_276 = arith.constant 0 : index
    %c0_277 = arith.constant 0 : index
    %847 = vector.load %arg1[%c5_275, %c0_276, %c0_277] : memref<16x8x128xf32, #tpu.memory_space<vmem>>, vector<1x8x128xf32>
    %848 = vector.shape_cast %847 : vector<1x8x128xf32> to vector<8x128xf32>
    %849 = arith.mulf %846, %846 : vector<8x128xf32>
    %cst_278 = arith.constant 0.000000e+00 : f32
    %850 = vector.broadcast %cst_278 : f32 to vector<8x128xf32>
    %851 = arith.addf %850, %849 : vector<8x128xf32>
    %852 = arith.mulf %848, %848 : vector<8x128xf32>
    %853 = arith.addf %851, %852 : vector<8x128xf32>
    %854 = math.rsqrt %853 : vector<8x128xf32>
    %855 = arith.mulf %846, %854 : vector<8x128xf32>
    %856 = arith.mulf %848, %854 : vector<8x128xf32>
    %c16_279 = arith.constant 16 : index
    %857 = memref.load %arg2[%c16_279] : memref<64xf32, #tpu.memory_space<smem>>
    %858 = vector.broadcast %857 : f32 to vector<8x128xf32>
    %859 = arith.mulf %855, %858 : vector<8x128xf32>
    %cst_280 = arith.constant 0.000000e+00 : f32
    %860 = vector.broadcast %cst_280 : f32 to vector<8x128xf32>
    %861 = arith.addf %860, %859 : vector<8x128xf32>
    %c17_281 = arith.constant 17 : index
    %862 = memref.load %arg2[%c17_281] : memref<64xf32, #tpu.memory_space<smem>>
    %863 = vector.broadcast %862 : f32 to vector<8x128xf32>
    %864 = arith.mulf %856, %863 : vector<8x128xf32>
    %865 = arith.addf %861, %864 : vector<8x128xf32>
    %c18_282 = arith.constant 18 : index
    %866 = memref.load %arg2[%c18_282] : memref<64xf32, #tpu.memory_space<smem>>
    %867 = vector.broadcast %866 : f32 to vector<8x128xf32>
    %868 = arith.mulf %855, %867 : vector<8x128xf32>
    %cst_283 = arith.constant 0.000000e+00 : f32
    %869 = vector.broadcast %cst_283 : f32 to vector<8x128xf32>
    %870 = arith.addf %869, %868 : vector<8x128xf32>
    %c19_284 = arith.constant 19 : index
    %871 = memref.load %arg2[%c19_284] : memref<64xf32, #tpu.memory_space<smem>>
    %872 = vector.broadcast %871 : f32 to vector<8x128xf32>
    %873 = arith.mulf %856, %872 : vector<8x128xf32>
    %874 = arith.addf %870, %873 : vector<8x128xf32>
    %c20_285 = arith.constant 20 : index
    %875 = memref.load %arg2[%c20_285] : memref<64xf32, #tpu.memory_space<smem>>
    %876 = vector.broadcast %875 : f32 to vector<8x128xf32>
    %877 = arith.mulf %855, %876 : vector<8x128xf32>
    %cst_286 = arith.constant 0.000000e+00 : f32
    %878 = vector.broadcast %cst_286 : f32 to vector<8x128xf32>
    %879 = arith.addf %878, %877 : vector<8x128xf32>
    %c21_287 = arith.constant 21 : index
    %880 = memref.load %arg2[%c21_287] : memref<64xf32, #tpu.memory_space<smem>>
    %881 = vector.broadcast %880 : f32 to vector<8x128xf32>
    %882 = arith.mulf %856, %881 : vector<8x128xf32>
    %883 = arith.addf %879, %882 : vector<8x128xf32>
    %c22_288 = arith.constant 22 : index
    %884 = memref.load %arg2[%c22_288] : memref<64xf32, #tpu.memory_space<smem>>
    %885 = vector.broadcast %884 : f32 to vector<8x128xf32>
    %886 = arith.mulf %855, %885 : vector<8x128xf32>
    %cst_289 = arith.constant 0.000000e+00 : f32
    %887 = vector.broadcast %cst_289 : f32 to vector<8x128xf32>
    %888 = arith.addf %887, %886 : vector<8x128xf32>
    %c23_290 = arith.constant 23 : index
    %889 = memref.load %arg2[%c23_290] : memref<64xf32, #tpu.memory_space<smem>>
    %890 = vector.broadcast %889 : f32 to vector<8x128xf32>
    %891 = arith.mulf %856, %890 : vector<8x128xf32>
    %892 = arith.addf %888, %891 : vector<8x128xf32>
    %893 = arith.mulf %865, %822 : vector<8x128xf32>
    %cst_291 = arith.constant 0.000000e+00 : f32
    %894 = vector.broadcast %cst_291 : f32 to vector<8x128xf32>
    %895 = arith.addf %894, %893 : vector<8x128xf32>
    %896 = arith.mulf %874, %827 : vector<8x128xf32>
    %897 = arith.addf %895, %896 : vector<8x128xf32>
    %898 = arith.mulf %883, %822 : vector<8x128xf32>
    %cst_292 = arith.constant 0.000000e+00 : f32
    %899 = vector.broadcast %cst_292 : f32 to vector<8x128xf32>
    %900 = arith.addf %899, %898 : vector<8x128xf32>
    %901 = arith.mulf %892, %827 : vector<8x128xf32>
    %902 = arith.addf %900, %901 : vector<8x128xf32>
    %903 = arith.mulf %897, %897 : vector<8x128xf32>
    %cst_293 = arith.constant 0.000000e+00 : f32
    %904 = vector.broadcast %cst_293 : f32 to vector<8x128xf32>
    %905 = arith.addf %904, %903 : vector<8x128xf32>
    %906 = arith.mulf %902, %902 : vector<8x128xf32>
    %907 = arith.addf %905, %906 : vector<8x128xf32>
    %908 = math.sqrt %907 : vector<8x128xf32>
    %cst_294 = arith.constant 9.99999997E-7 : f32
    %909 = vector.broadcast %cst_294 : f32 to vector<8x128xf32>
    %910 = arith.addf %908, %909 : vector<8x128xf32>
    %911 = tpu.reciprocal %910 : vector<8x128xf32> -> vector<8x128xf32>
    %912 = arith.mulf %897, %911 : vector<8x128xf32>
    %c2_295 = arith.constant 2 : index
    %c0_296 = arith.constant 0 : index
    %c0_297 = arith.constant 0 : index
    %913 = vector.load %arg7[%c2_295, %c0_296, %c0_297] : memref<14x8x128xf32, #tpu.memory_space<vmem>>, vector<1x8x128xf32>
    %914 = vector.shape_cast %913 : vector<1x8x128xf32> to vector<8x128xf32>
    %915 = vector.shape_cast %912 : vector<8x128xf32> to vector<1x8x128xf32>
    tpu.vector_store %arg7[%c2_295, %c0_296, %c0_297], %915 {strides = array<i32>} : memref<14x8x128xf32, #tpu.memory_space<vmem>>, vector<1x8x128xf32>,
    %916 = arith.mulf %902, %911 : vector<8x128xf32>
    %c3_298 = arith.constant 3 : index
    %c0_299 = arith.constant 0 : index
    %c0_300 = arith.constant 0 : index
    %917 = vector.load %arg7[%c3_298, %c0_299, %c0_300] : memref<14x8x128xf32, #tpu.memory_space<vmem>>, vector<1x8x128xf32>
    %918 = vector.shape_cast %917 : vector<1x8x128xf32> to vector<8x128xf32>
    %919 = vector.shape_cast %916 : vector<8x128xf32> to vector<1x8x128xf32>
    tpu.vector_store %arg7[%c3_298, %c0_299, %c0_300], %919 {strides = array<i32>} : memref<14x8x128xf32, #tpu.memory_space<vmem>>, vector<1x8x128xf32>,
    %c2_301 = arith.constant 2 : index
    %c0_302 = arith.constant 0 : index
    %c0_303 = arith.constant 0 : index
    %920 = vector.load %arg1[%c2_301, %c0_302, %c0_303] : memref<16x8x128xf32, #tpu.memory_space<vmem>>, vector<1x8x128xf32>
    %921 = vector.shape_cast %920 : vector<1x8x128xf32> to vector<8x128xf32>
    %c3_304 = arith.constant 3 : index
    %c0_305 = arith.constant 0 : index
    %c0_306 = arith.constant 0 : index
    %922 = vector.load %arg1[%c3_304, %c0_305, %c0_306] : memref<16x8x128xf32, #tpu.memory_space<vmem>>, vector<1x8x128xf32>
    %923 = vector.shape_cast %922 : vector<1x8x128xf32> to vector<8x128xf32>
    %924 = arith.mulf %921, %921 : vector<8x128xf32>
    %cst_307 = arith.constant 0.000000e+00 : f32
    %925 = vector.broadcast %cst_307 : f32 to vector<8x128xf32>
    %926 = arith.addf %925, %924 : vector<8x128xf32>
    %927 = arith.mulf %923, %923 : vector<8x128xf32>
    %928 = arith.addf %926, %927 : vector<8x128xf32>
    %929 = math.rsqrt %928 : vector<8x128xf32>
    %930 = arith.mulf %921, %929 : vector<8x128xf32>
    %931 = arith.mulf %923, %929 : vector<8x128xf32>
    %c8_308 = arith.constant 8 : index
    %932 = memref.load %arg2[%c8_308] : memref<64xf32, #tpu.memory_space<smem>>
    %933 = vector.broadcast %932 : f32 to vector<8x128xf32>
    %934 = arith.mulf %930, %933 : vector<8x128xf32>
    %cst_309 = arith.constant 0.000000e+00 : f32
    %935 = vector.broadcast %cst_309 : f32 to vector<8x128xf32>
    %936 = arith.addf %935, %934 : vector<8x128xf32>
    %c9_310 = arith.constant 9 : index
    %937 = memref.load %arg2[%c9_310] : memref<64xf32, #tpu.memory_space<smem>>
    %938 = vector.broadcast %937 : f32 to vector<8x128xf32>
    %939 = arith.mulf %931, %938 : vector<8x128xf32>
    %940 = arith.addf %936, %939 : vector<8x128xf32>
    %c10_311 = arith.constant 10 : index
    %941 = memref.load %arg2[%c10_311] : memref<64xf32, #tpu.memory_space<smem>>
    %942 = vector.broadcast %941 : f32 to vector<8x128xf32>
    %943 = arith.mulf %930, %942 : vector<8x128xf32>
    %cst_312 = arith.constant 0.000000e+00 : f32
    %944 = vector.broadcast %cst_312 : f32 to vector<8x128xf32>
    %945 = arith.addf %944, %943 : vector<8x128xf32>
    %c11_313 = arith.constant 11 : index
    %946 = memref.load %arg2[%c11_313] : memref<64xf32, #tpu.memory_space<smem>>
    %947 = vector.broadcast %946 : f32 to vector<8x128xf32>
    %948 = arith.mulf %931, %947 : vector<8x128xf32>
    %949 = arith.addf %945, %948 : vector<8x128xf32>
    %c12_314 = arith.constant 12 : index
    %950 = memref.load %arg2[%c12_314] : memref<64xf32, #tpu.memory_space<smem>>
    %951 = vector.broadcast %950 : f32 to vector<8x128xf32>
    %952 = arith.mulf %930, %951 : vector<8x128xf32>
    %cst_315 = arith.constant 0.000000e+00 : f32
    %953 = vector.broadcast %cst_315 : f32 to vector<8x128xf32>
    %954 = arith.addf %953, %952 : vector<8x128xf32>
    %c13_316 = arith.constant 13 : index
    %955 = memref.load %arg2[%c13_316] : memref<64xf32, #tpu.memory_space<smem>>
    %956 = vector.broadcast %955 : f32 to vector<8x128xf32>
    %957 = arith.mulf %931, %956 : vector<8x128xf32>
    %958 = arith.addf %954, %957 : vector<8x128xf32>
    %c14_317 = arith.constant 14 : index
    %959 = memref.load %arg2[%c14_317] : memref<64xf32, #tpu.memory_space<smem>>
    %960 = vector.broadcast %959 : f32 to vector<8x128xf32>
    %961 = arith.mulf %930, %960 : vector<8x128xf32>
    %cst_318 = arith.constant 0.000000e+00 : f32
    %962 = vector.broadcast %cst_318 : f32 to vector<8x128xf32>
    %963 = arith.addf %962, %961 : vector<8x128xf32>
    %c15_319 = arith.constant 15 : index
    %964 = memref.load %arg2[%c15_319] : memref<64xf32, #tpu.memory_space<smem>>
    %965 = vector.broadcast %964 : f32 to vector<8x128xf32>
    %966 = arith.mulf %931, %965 : vector<8x128xf32>
    %967 = arith.addf %963, %966 : vector<8x128xf32>
    %968 = arith.mulf %940, %897 : vector<8x128xf32>
    %cst_320 = arith.constant 0.000000e+00 : f32
    %969 = vector.broadcast %cst_320 : f32 to vector<8x128xf32>
    %970 = arith.addf %969, %968 : vector<8x128xf32>
    %971 = arith.mulf %949, %902 : vector<8x128xf32>
    %972 = arith.addf %970, %971 : vector<8x128xf32>
    %973 = arith.mulf %958, %897 : vector<8x128xf32>
    %cst_321 = arith.constant 0.000000e+00 : f32
    %974 = vector.broadcast %cst_321 : f32 to vector<8x128xf32>
    %975 = arith.addf %974, %973 : vector<8x128xf32>
    %976 = arith.mulf %967, %902 : vector<8x128xf32>
    %977 = arith.addf %975, %976 : vector<8x128xf32>
    %978 = arith.mulf %972, %972 : vector<8x128xf32>
    %cst_322 = arith.constant 0.000000e+00 : f32
    %979 = vector.broadcast %cst_322 : f32 to vector<8x128xf32>
    %980 = arith.addf %979, %978 : vector<8x128xf32>
    %981 = arith.mulf %977, %977 : vector<8x128xf32>
    %982 = arith.addf %980, %981 : vector<8x128xf32>
    %983 = math.sqrt %982 : vector<8x128xf32>
    %cst_323 = arith.constant 9.99999997E-7 : f32
    %984 = vector.broadcast %cst_323 : f32 to vector<8x128xf32>
    %985 = arith.addf %983, %984 : vector<8x128xf32>
    %986 = tpu.reciprocal %985 : vector<8x128xf32> -> vector<8x128xf32>
    %987 = arith.mulf %972, %986 : vector<8x128xf32>
    %c0_324 = arith.constant 0 : index
    %c0_325 = arith.constant 0 : index
    %c0_326 = arith.constant 0 : index
    %988 = vector.load %arg7[%c0_324, %c0_325, %c0_326] : memref<14x8x128xf32, #tpu.memory_space<vmem>>, vector<1x8x128xf32>
    %989 = vector.shape_cast %988 : vector<1x8x128xf32> to vector<8x128xf32>
    %990 = vector.shape_cast %987 : vector<8x128xf32> to vector<1x8x128xf32>
    tpu.vector_store %arg7[%c0_324, %c0_325, %c0_326], %990 {strides = array<i32>} : memref<14x8x128xf32, #tpu.memory_space<vmem>>, vector<1x8x128xf32>,
    %991 = arith.mulf %977, %986 : vector<8x128xf32>
    %c1_327 = arith.constant 1 : index
    %c0_328 = arith.constant 0 : index
    %c0_329 = arith.constant 0 : index
    %992 = vector.load %arg7[%c1_327, %c0_328, %c0_329] : memref<14x8x128xf32, #tpu.memory_space<vmem>>, vector<1x8x128xf32>
    %993 = vector.shape_cast %992 : vector<1x8x128xf32> to vector<8x128xf32>
    %994 = vector.shape_cast %991 : vector<8x128xf32> to vector<1x8x128xf32>
    tpu.vector_store %arg7[%c1_327, %c0_328, %c0_329], %994 {strides = array<i32>} : memref<14x8x128xf32, #tpu.memory_space<vmem>>, vector<1x8x128xf32>,
    %c0_330 = arith.constant 0 : index
    %c0_331 = arith.constant 0 : index
    %c0_332 = arith.constant 0 : index
    %995 = vector.load %arg1[%c0_330, %c0_331, %c0_332] : memref<16x8x128xf32, #tpu.memory_space<vmem>>, vector<1x8x128xf32>
    %996 = vector.shape_cast %995 : vector<1x8x128xf32> to vector<8x128xf32>
    %c1_333 = arith.constant 1 : index
    %c0_334 = arith.constant 0 : index
    %c0_335 = arith.constant 0 : index
    %997 = vector.load %arg1[%c1_333, %c0_334, %c0_335] : memref<16x8x128xf32, #tpu.memory_space<vmem>>, vector<1x8x128xf32>
    %998 = vector.shape_cast %997 : vector<1x8x128xf32> to vector<8x128xf32>
    %c0_336 = arith.constant 0 : index
    %c0_337 = arith.constant 0 : index
    %c0_338 = arith.constant 0 : index
    %999 = vector.load %arg7[%c0_336, %c0_337, %c0_338] : memref<14x8x128xf32, #tpu.memory_space<vmem>>, vector<1x8x128xf32>
    %1000 = vector.shape_cast %999 : vector<1x8x128xf32> to vector<8x128xf32>
    %c1_339 = arith.constant 1 : index
    %c0_340 = arith.constant 0 : index
    %c0_341 = arith.constant 0 : index
    %1001 = vector.load %arg7[%c1_339, %c0_340, %c0_341] : memref<14x8x128xf32, #tpu.memory_space<vmem>>, vector<1x8x128xf32>
    %1002 = vector.shape_cast %1001 : vector<1x8x128xf32> to vector<8x128xf32>
    %c0_342 = arith.constant 0 : index
    %1003 = memref.load %arg3[%c0_342] : memref<128xf32, #tpu.memory_space<smem>>
    %1004 = vector.broadcast %1003 : f32 to vector<8x128xf32>
    %1005 = arith.mulf %1004, %1000 : vector<8x128xf32>
    %cst_343 = arith.constant 0.000000e+00 : f32
    %1006 = vector.broadcast %cst_343 : f32 to vector<8x128xf32>
    %1007 = arith.addf %1006, %1005 : vector<8x128xf32>
    %c4_344 = arith.constant 4 : index
    %1008 = memref.load %arg3[%c4_344] : memref<128xf32, #tpu.memory_space<smem>>
    %1009 = vector.broadcast %1008 : f32 to vector<8x128xf32>
    %1010 = arith.mulf %1009, %1002 : vector<8x128xf32>
    %1011 = arith.addf %1007, %1010 : vector<8x128xf32>
    %c1_345 = arith.constant 1 : index
    %1012 = memref.load %arg3[%c1_345] : memref<128xf32, #tpu.memory_space<smem>>
    %1013 = vector.broadcast %1012 : f32 to vector<8x128xf32>
    %1014 = arith.mulf %1013, %1000 : vector<8x128xf32>
    %cst_346 = arith.constant 0.000000e+00 : f32
    %1015 = vector.broadcast %cst_346 : f32 to vector<8x128xf32>
    %1016 = arith.addf %1015, %1014 : vector<8x128xf32>
    %c5_347 = arith.constant 5 : index
    %1017 = memref.load %arg3[%c5_347] : memref<128xf32, #tpu.memory_space<smem>>
    %1018 = vector.broadcast %1017 : f32 to vector<8x128xf32>
    %1019 = arith.mulf %1018, %1002 : vector<8x128xf32>
    %1020 = arith.addf %1016, %1019 : vector<8x128xf32>
    %c2_348 = arith.constant 2 : index
    %1021 = memref.load %arg3[%c2_348] : memref<128xf32, #tpu.memory_space<smem>>
    %1022 = vector.broadcast %1021 : f32 to vector<8x128xf32>
    %1023 = arith.mulf %1022, %1000 : vector<8x128xf32>
    %cst_349 = arith.constant 0.000000e+00 : f32
    %1024 = vector.broadcast %cst_349 : f32 to vector<8x128xf32>
    %1025 = arith.addf %1024, %1023 : vector<8x128xf32>
    %c6_350 = arith.constant 6 : index
    %1026 = memref.load %arg3[%c6_350] : memref<128xf32, #tpu.memory_space<smem>>
    %1027 = vector.broadcast %1026 : f32 to vector<8x128xf32>
    %1028 = arith.mulf %1027, %1002 : vector<8x128xf32>
    %1029 = arith.addf %1025, %1028 : vector<8x128xf32>
    %c3_351 = arith.constant 3 : index
    %1030 = memref.load %arg3[%c3_351] : memref<128xf32, #tpu.memory_space<smem>>
    %1031 = vector.broadcast %1030 : f32 to vector<8x128xf32>
    %1032 = arith.mulf %1031, %1000 : vector<8x128xf32>
    %cst_352 = arith.constant 0.000000e+00 : f32
    %1033 = vector.broadcast %cst_352 : f32 to vector<8x128xf32>
    %1034 = arith.addf %1033, %1032 : vector<8x128xf32>
    %c7_353 = arith.constant 7 : index
    %1035 = memref.load %arg3[%c7_353] : memref<128xf32, #tpu.memory_space<smem>>
    %1036 = vector.broadcast %1035 : f32 to vector<8x128xf32>
    %1037 = arith.mulf %1036, %1002 : vector<8x128xf32>
    %1038 = arith.addf %1034, %1037 : vector<8x128xf32>
    %1039 = arith.mulf %1011, %1011 : vector<8x128xf32>
    %cst_354 = arith.constant 0.000000e+00 : f32
    %1040 = vector.broadcast %cst_354 : f32 to vector<8x128xf32>
    %1041 = arith.addf %1040, %1039 : vector<8x128xf32>
    %1042 = arith.mulf %1020, %1020 : vector<8x128xf32>
    %1043 = arith.addf %1041, %1042 : vector<8x128xf32>
    %1044 = arith.mulf %1029, %1029 : vector<8x128xf32>
    %1045 = arith.addf %1043, %1044 : vector<8x128xf32>
    %1046 = arith.mulf %1038, %1038 : vector<8x128xf32>
    %1047 = arith.addf %1045, %1046 : vector<8x128xf32>
    %1048 = math.sqrt %1047 : vector<8x128xf32>
    %cst_355 = arith.constant 9.99999997E-7 : f32
    %1049 = vector.broadcast %cst_355 : f32 to vector<8x128xf32>
    %1050 = arith.addf %1048, %1049 : vector<8x128xf32>
    %1051 = tpu.reciprocal %1050 : vector<8x128xf32> -> vector<8x128xf32>
    %1052 = vector.broadcast %0 : f32 to vector<8x128xf32>
    %1053 = arith.mulf %1052, %1051 : vector<8x128xf32>
    %cst_356 = arith.constant 0x7F800000 : f32
    %1054 = vector.broadcast %cst_356 : f32 to vector<8x128xf32>
    %1055 = arith.cmpf olt, %1050, %1054 : vector<8x128xf32>
    %1056 = arith.mulf %1011, %996 : vector<8x128xf32>
    %cst_357 = arith.constant 0.000000e+00 : f32
    %1057 = vector.broadcast %cst_357 : f32 to vector<8x128xf32>
    %1058 = arith.addf %1057, %1056 : vector<8x128xf32>
    %1059 = arith.mulf %1020, %998 : vector<8x128xf32>
    %1060 = arith.addf %1058, %1059 : vector<8x128xf32>
    %1061 = arith.mulf %1060, %1053 : vector<8x128xf32>
    %cst_358 = arith.constant 0.000000e+00 : f32
    %1062 = vector.broadcast %cst_358 : f32 to vector<8x128xf32>
    %1063 = arith.select %1055, %1061, %1062 : vector<8x128xi1>, vector<8x128xf32>
    %cst_359 = arith.constant 0.000000e+00 : f32
    %1064 = vector.broadcast %cst_359 : f32 to vector<8x128xf32>
    %1065 = arith.cmpf oge, %1063, %1064 : vector<8x128xf32>
    %cst_360 = arith.constant 9.99999974E-6 : f32
    %1066 = vector.broadcast %cst_360 : f32 to vector<8x128xf32>
    %1067 = arith.mulf %1066, %1063 : vector<8x128xf32>
    %1068 = arith.select %1065, %1063, %1067 : vector<8x128xi1>, vector<8x128xf32>
    %1069 = math.absf %1068 : vector<8x128xf32>
    %1070 = arith.mulf %1029, %996 : vector<8x128xf32>
    %cst_361 = arith.constant 0.000000e+00 : f32
    %1071 = vector.broadcast %cst_361 : f32 to vector<8x128xf32>
    %1072 = arith.addf %1071, %1070 : vector<8x128xf32>
    %1073 = arith.mulf %1038, %998 : vector<8x128xf32>
    %1074 = arith.addf %1072, %1073 : vector<8x128xf32>
    %1075 = arith.mulf %1074, %1053 : vector<8x128xf32>
    %cst_362 = arith.constant 0.000000e+00 : f32
    %1076 = vector.broadcast %cst_362 : f32 to vector<8x128xf32>
    %1077 = arith.select %1055, %1075, %1076 : vector<8x128xi1>, vector<8x128xf32>
    %cst_363 = arith.constant 0.000000e+00 : f32
    %1078 = vector.broadcast %cst_363 : f32 to vector<8x128xf32>
    %1079 = arith.cmpf oge, %1077, %1078 : vector<8x128xf32>
    %cst_364 = arith.constant 9.99999974E-6 : f32
    %1080 = vector.broadcast %cst_364 : f32 to vector<8x128xf32>
    %1081 = arith.mulf %1080, %1077 : vector<8x128xf32>
    %1082 = arith.select %1079, %1077, %1081 : vector<8x128xi1>, vector<8x128xf32>
    %1083 = math.absf %1082 : vector<8x128xf32>
    %cst_365 = arith.constant 0.000000e+00 : f32
    %1084 = vector.broadcast %cst_365 : f32 to vector<8x128xf32>
    %1085 = arith.addf %1084, %1069 : vector<8x128xf32>
    %1086 = arith.addf %1085, %1083 : vector<8x128xf32>
    %1087 = tpu.reciprocal %1086 : vector<8x128xf32> -> vector<8x128xf32>
    %1088 = arith.mulf %1069, %1087 : vector<8x128xf32>
    %c0_366 = arith.constant 0 : index
    %c0_367 = arith.constant 0 : index
    %c0_368 = arith.constant 0 : index
    %1089 = vector.load %arg5[%c0_366, %c0_367, %c0_368] : memref<16x8x128xf32, #tpu.memory_space<vmem>>, vector<1x8x128xf32>
    %1090 = vector.shape_cast %1089 : vector<1x8x128xf32> to vector<8x128xf32>
    %1091 = vector.shape_cast %1088 : vector<8x128xf32> to vector<1x8x128xf32>
    tpu.vector_store %arg5[%c0_366, %c0_367, %c0_368], %1091 {strides = array<i32>} : memref<16x8x128xf32, #tpu.memory_space<vmem>>, vector<1x8x128xf32>,
    %1092 = arith.mulf %1083, %1087 : vector<8x128xf32>
    %c1_369 = arith.constant 1 : index
    %c0_370 = arith.constant 0 : index
    %c0_371 = arith.constant 0 : index
    %1093 = vector.load %arg5[%c1_369, %c0_370, %c0_371] : memref<16x8x128xf32, #tpu.memory_space<vmem>>, vector<1x8x128xf32>
    %1094 = vector.shape_cast %1093 : vector<1x8x128xf32> to vector<8x128xf32>
    %1095 = vector.shape_cast %1092 : vector<8x128xf32> to vector<1x8x128xf32>
    tpu.vector_store %arg5[%c1_369, %c0_370, %c0_371], %1095 {strides = array<i32>} : memref<16x8x128xf32, #tpu.memory_space<vmem>>, vector<1x8x128xf32>,
    %c2_372 = arith.constant 2 : index
    %c0_373 = arith.constant 0 : index
    %c0_374 = arith.constant 0 : index
    %1096 = vector.load %arg1[%c2_372, %c0_373, %c0_374] : memref<16x8x128xf32, #tpu.memory_space<vmem>>, vector<1x8x128xf32>
    %1097 = vector.shape_cast %1096 : vector<1x8x128xf32> to vector<8x128xf32>
    %c3_375 = arith.constant 3 : index
    %c0_376 = arith.constant 0 : index
    %c0_377 = arith.constant 0 : index
    %1098 = vector.load %arg1[%c3_375, %c0_376, %c0_377] : memref<16x8x128xf32, #tpu.memory_space<vmem>>, vector<1x8x128xf32>
    %1099 = vector.shape_cast %1098 : vector<1x8x128xf32> to vector<8x128xf32>
    %c0_378 = arith.constant 0 : index
    %c0_379 = arith.constant 0 : index
    %c0_380 = arith.constant 0 : index
    %1100 = vector.load %arg6[%c0_378, %c0_379, %c0_380] : memref<14x8x128xf32, #tpu.memory_space<vmem>>, vector<1x8x128xf32>
    %1101 = vector.shape_cast %1100 : vector<1x8x128xf32> to vector<8x128xf32>
    %c1_381 = arith.constant 1 : index
    %c0_382 = arith.constant 0 : index
    %c0_383 = arith.constant 0 : index
    %1102 = vector.load %arg6[%c1_381, %c0_382, %c0_383] : memref<14x8x128xf32, #tpu.memory_space<vmem>>, vector<1x8x128xf32>
    %1103 = vector.shape_cast %1102 : vector<1x8x128xf32> to vector<8x128xf32>
    %c2_384 = arith.constant 2 : index
    %c0_385 = arith.constant 0 : index
    %c0_386 = arith.constant 0 : index
    %1104 = vector.load %arg7[%c2_384, %c0_385, %c0_386] : memref<14x8x128xf32, #tpu.memory_space<vmem>>, vector<1x8x128xf32>
    %1105 = vector.shape_cast %1104 : vector<1x8x128xf32> to vector<8x128xf32>
    %c3_387 = arith.constant 3 : index
    %c0_388 = arith.constant 0 : index
    %c0_389 = arith.constant 0 : index
    %1106 = vector.load %arg7[%c3_387, %c0_388, %c0_389] : memref<14x8x128xf32, #tpu.memory_space<vmem>>, vector<1x8x128xf32>
    %1107 = vector.shape_cast %1106 : vector<1x8x128xf32> to vector<8x128xf32>
    %c16_390 = arith.constant 16 : index
    %1108 = memref.load %arg3[%c16_390] : memref<128xf32, #tpu.memory_space<smem>>
    %1109 = vector.broadcast %1108 : f32 to vector<8x128xf32>
    %1110 = arith.mulf %1101, %1109 : vector<8x128xf32>
    %1111 = arith.mulf %1110, %1105 : vector<8x128xf32>
    %cst_391 = arith.constant 0.000000e+00 : f32
    %1112 = vector.broadcast %cst_391 : f32 to vector<8x128xf32>
    %1113 = arith.addf %1112, %1111 : vector<8x128xf32>
    %c20_392 = arith.constant 20 : index
    %1114 = memref.load %arg3[%c20_392] : memref<128xf32, #tpu.memory_space<smem>>
    %1115 = vector.broadcast %1114 : f32 to vector<8x128xf32>
    %1116 = arith.mulf %1101, %1115 : vector<8x128xf32>
    %1117 = arith.mulf %1116, %1107 : vector<8x128xf32>
    %1118 = arith.addf %1113, %1117 : vector<8x128xf32>
    %c24_393 = arith.constant 24 : index
    %1119 = memref.load %arg3[%c24_393] : memref<128xf32, #tpu.memory_space<smem>>
    %1120 = vector.broadcast %1119 : f32 to vector<8x128xf32>
    %1121 = arith.mulf %1103, %1120 : vector<8x128xf32>
    %1122 = arith.mulf %1121, %1105 : vector<8x128xf32>
    %1123 = arith.addf %1118, %1122 : vector<8x128xf32>
    %c28_394 = arith.constant 28 : index
    %1124 = memref.load %arg3[%c28_394] : memref<128xf32, #tpu.memory_space<smem>>
    %1125 = vector.broadcast %1124 : f32 to vector<8x128xf32>
    %1126 = arith.mulf %1103, %1125 : vector<8x128xf32>
    %1127 = arith.mulf %1126, %1107 : vector<8x128xf32>
    %1128 = arith.addf %1123, %1127 : vector<8x128xf32>
    %c17_395 = arith.constant 17 : index
    %1129 = memref.load %arg3[%c17_395] : memref<128xf32, #tpu.memory_space<smem>>
    %1130 = vector.broadcast %1129 : f32 to vector<8x128xf32>
    %1131 = arith.mulf %1101, %1130 : vector<8x128xf32>
    %1132 = arith.mulf %1131, %1105 : vector<8x128xf32>
    %cst_396 = arith.constant 0.000000e+00 : f32
    %1133 = vector.broadcast %cst_396 : f32 to vector<8x128xf32>
    %1134 = arith.addf %1133, %1132 : vector<8x128xf32>
    %c21_397 = arith.constant 21 : index
    %1135 = memref.load %arg3[%c21_397] : memref<128xf32, #tpu.memory_space<smem>>
    %1136 = vector.broadcast %1135 : f32 to vector<8x128xf32>
    %1137 = arith.mulf %1101, %1136 : vector<8x128xf32>
    %1138 = arith.mulf %1137, %1107 : vector<8x128xf32>
    %1139 = arith.addf %1134, %1138 : vector<8x128xf32>
    %c25_398 = arith.constant 25 : index
    %1140 = memref.load %arg3[%c25_398] : memref<128xf32, #tpu.memory_space<smem>>
    %1141 = vector.broadcast %1140 : f32 to vector<8x128xf32>
    %1142 = arith.mulf %1103, %1141 : vector<8x128xf32>
    %1143 = arith.mulf %1142, %1105 : vector<8x128xf32>
    %1144 = arith.addf %1139, %1143 : vector<8x128xf32>
    %c29_399 = arith.constant 29 : index
    %1145 = memref.load %arg3[%c29_399] : memref<128xf32, #tpu.memory_space<smem>>
    %1146 = vector.broadcast %1145 : f32 to vector<8x128xf32>
    %1147 = arith.mulf %1103, %1146 : vector<8x128xf32>
    %1148 = arith.mulf %1147, %1107 : vector<8x128xf32>
    %1149 = arith.addf %1144, %1148 : vector<8x128xf32>
    %c18_400 = arith.constant 18 : index
    %1150 = memref.load %arg3[%c18_400] : memref<128xf32, #tpu.memory_space<smem>>
    %1151 = vector.broadcast %1150 : f32 to vector<8x128xf32>
    %1152 = arith.mulf %1101, %1151 : vector<8x128xf32>
    %1153 = arith.mulf %1152, %1105 : vector<8x128xf32>
    %cst_401 = arith.constant 0.000000e+00 : f32
    %1154 = vector.broadcast %cst_401 : f32 to vector<8x128xf32>
    %1155 = arith.addf %1154, %1153 : vector<8x128xf32>
    %c22_402 = arith.constant 22 : index
    %1156 = memref.load %arg3[%c22_402] : memref<128xf32, #tpu.memory_space<smem>>
    %1157 = vector.broadcast %1156 : f32 to vector<8x128xf32>
    %1158 = arith.mulf %1101, %1157 : vector<8x128xf32>
    %1159 = arith.mulf %1158, %1107 : vector<8x128xf32>
    %1160 = arith.addf %1155, %1159 : vector<8x128xf32>
    %c26_403 = arith.constant 26 : index
    %1161 = memref.load %arg3[%c26_403] : memref<128xf32, #tpu.memory_space<smem>>
    %1162 = vector.broadcast %1161 : f32 to vector<8x128xf32>
    %1163 = arith.mulf %1103, %1162 : vector<8x128xf32>
    %1164 = arith.mulf %1163, %1105 : vector<8x128xf32>
    %1165 = arith.addf %1160, %1164 : vector<8x128xf32>
    %c30_404 = arith.constant 30 : index
    %1166 = memref.load %arg3[%c30_404] : memref<128xf32, #tpu.memory_space<smem>>
    %1167 = vector.broadcast %1166 : f32 to vector<8x128xf32>
    %1168 = arith.mulf %1103, %1167 : vector<8x128xf32>
    %1169 = arith.mulf %1168, %1107 : vector<8x128xf32>
    %1170 = arith.addf %1165, %1169 : vector<8x128xf32>
    %c19_405 = arith.constant 19 : index
    %1171 = memref.load %arg3[%c19_405] : memref<128xf32, #tpu.memory_space<smem>>
    %1172 = vector.broadcast %1171 : f32 to vector<8x128xf32>
    %1173 = arith.mulf %1101, %1172 : vector<8x128xf32>
    %1174 = arith.mulf %1173, %1105 : vector<8x128xf32>
    %cst_406 = arith.constant 0.000000e+00 : f32
    %1175 = vector.broadcast %cst_406 : f32 to vector<8x128xf32>
    %1176 = arith.addf %1175, %1174 : vector<8x128xf32>
    %c23_407 = arith.constant 23 : index
    %1177 = memref.load %arg3[%c23_407] : memref<128xf32, #tpu.memory_space<smem>>
    %1178 = vector.broadcast %1177 : f32 to vector<8x128xf32>
    %1179 = arith.mulf %1101, %1178 : vector<8x128xf32>
    %1180 = arith.mulf %1179, %1107 : vector<8x128xf32>
    %1181 = arith.addf %1176, %1180 : vector<8x128xf32>
    %c27_408 = arith.constant 27 : index
    %1182 = memref.load %arg3[%c27_408] : memref<128xf32, #tpu.memory_space<smem>>
    %1183 = vector.broadcast %1182 : f32 to vector<8x128xf32>
    %1184 = arith.mulf %1103, %1183 : vector<8x128xf32>
    %1185 = arith.mulf %1184, %1105 : vector<8x128xf32>
    %1186 = arith.addf %1181, %1185 : vector<8x128xf32>
    %c31_409 = arith.constant 31 : index
    %1187 = memref.load %arg3[%c31_409] : memref<128xf32, #tpu.memory_space<smem>>
    %1188 = vector.broadcast %1187 : f32 to vector<8x128xf32>
    %1189 = arith.mulf %1103, %1188 : vector<8x128xf32>
    %1190 = arith.mulf %1189, %1107 : vector<8x128xf32>
    %1191 = arith.addf %1186, %1190 : vector<8x128xf32>
    %1192 = arith.mulf %1128, %1128 : vector<8x128xf32>
    %cst_410 = arith.constant 0.000000e+00 : f32
    %1193 = vector.broadcast %cst_410 : f32 to vector<8x128xf32>
    %1194 = arith.addf %1193, %1192 : vector<8x128xf32>
    %1195 = arith.mulf %1149, %1149 : vector<8x128xf32>
    %1196 = arith.addf %1194, %1195 : vector<8x128xf32>
    %1197 = arith.mulf %1170, %1170 : vector<8x128xf32>
    %1198 = arith.addf %1196, %1197 : vector<8x128xf32>
    %1199 = arith.mulf %1191, %1191 : vector<8x128xf32>
    %1200 = arith.addf %1198, %1199 : vector<8x128xf32>
    %1201 = math.sqrt %1200 : vector<8x128xf32>
    %cst_411 = arith.constant 9.99999997E-7 : f32
    %1202 = vector.broadcast %cst_411 : f32 to vector<8x128xf32>
    %1203 = arith.addf %1201, %1202 : vector<8x128xf32>
    %1204 = tpu.reciprocal %1203 : vector<8x128xf32> -> vector<8x128xf32>
    %1205 = vector.broadcast %0 : f32 to vector<8x128xf32>
    %1206 = arith.mulf %1205, %1204 : vector<8x128xf32>
    %cst_412 = arith.constant 0x7F800000 : f32
    %1207 = vector.broadcast %cst_412 : f32 to vector<8x128xf32>
    %1208 = arith.cmpf olt, %1203, %1207 : vector<8x128xf32>
    %1209 = arith.mulf %1128, %1097 : vector<8x128xf32>
    %cst_413 = arith.constant 0.000000e+00 : f32
    %1210 = vector.broadcast %cst_413 : f32 to vector<8x128xf32>
    %1211 = arith.addf %1210, %1209 : vector<8x128xf32>
    %1212 = arith.mulf %1149, %1099 : vector<8x128xf32>
    %1213 = arith.addf %1211, %1212 : vector<8x128xf32>
    %1214 = arith.mulf %1213, %1206 : vector<8x128xf32>
    %cst_414 = arith.constant 0.000000e+00 : f32
    %1215 = vector.broadcast %cst_414 : f32 to vector<8x128xf32>
    %1216 = arith.select %1208, %1214, %1215 : vector<8x128xi1>, vector<8x128xf32>
    %cst_415 = arith.constant 0.000000e+00 : f32
    %1217 = vector.broadcast %cst_415 : f32 to vector<8x128xf32>
    %1218 = arith.cmpf oge, %1216, %1217 : vector<8x128xf32>
    %cst_416 = arith.constant 9.99999974E-6 : f32
    %1219 = vector.broadcast %cst_416 : f32 to vector<8x128xf32>
    %1220 = arith.mulf %1219, %1216 : vector<8x128xf32>
    %1221 = arith.select %1218, %1216, %1220 : vector<8x128xi1>, vector<8x128xf32>
    %1222 = math.absf %1221 : vector<8x128xf32>
    %1223 = arith.mulf %1170, %1097 : vector<8x128xf32>
    %cst_417 = arith.constant 0.000000e+00 : f32
    %1224 = vector.broadcast %cst_417 : f32 to vector<8x128xf32>
    %1225 = arith.addf %1224, %1223 : vector<8x128xf32>
    %1226 = arith.mulf %1191, %1099 : vector<8x128xf32>
    %1227 = arith.addf %1225, %1226 : vector<8x128xf32>
    %1228 = arith.mulf %1227, %1206 : vector<8x128xf32>
    %cst_418 = arith.constant 0.000000e+00 : f32
    %1229 = vector.broadcast %cst_418 : f32 to vector<8x128xf32>
    %1230 = arith.select %1208, %1228, %1229 : vector<8x128xi1>, vector<8x128xf32>
    %cst_419 = arith.constant 0.000000e+00 : f32
    %1231 = vector.broadcast %cst_419 : f32 to vector<8x128xf32>
    %1232 = arith.cmpf oge, %1230, %1231 : vector<8x128xf32>
    %cst_420 = arith.constant 9.99999974E-6 : f32
    %1233 = vector.broadcast %cst_420 : f32 to vector<8x128xf32>
    %1234 = arith.mulf %1233, %1230 : vector<8x128xf32>
    %1235 = arith.select %1232, %1230, %1234 : vector<8x128xi1>, vector<8x128xf32>
    %1236 = math.absf %1235 : vector<8x128xf32>
    %cst_421 = arith.constant 0.000000e+00 : f32
    %1237 = vector.broadcast %cst_421 : f32 to vector<8x128xf32>
    %1238 = arith.addf %1237, %1222 : vector<8x128xf32>
    %1239 = arith.addf %1238, %1236 : vector<8x128xf32>
    %1240 = tpu.reciprocal %1239 : vector<8x128xf32> -> vector<8x128xf32>
    %1241 = arith.mulf %1222, %1240 : vector<8x128xf32>
    %c2_422 = arith.constant 2 : index
    %c0_423 = arith.constant 0 : index
    %c0_424 = arith.constant 0 : index
    %1242 = vector.load %arg5[%c2_422, %c0_423, %c0_424] : memref<16x8x128xf32, #tpu.memory_space<vmem>>, vector<1x8x128xf32>
    %1243 = vector.shape_cast %1242 : vector<1x8x128xf32> to vector<8x128xf32>
    %1244 = vector.shape_cast %1241 : vector<8x128xf32> to vector<1x8x128xf32>
    tpu.vector_store %arg5[%c2_422, %c0_423, %c0_424], %1244 {strides = array<i32>} : memref<16x8x128xf32, #tpu.memory_space<vmem>>, vector<1x8x128xf32>,
    %1245 = arith.mulf %1236, %1240 : vector<8x128xf32>
    %c3_425 = arith.constant 3 : index
    %c0_426 = arith.constant 0 : index
    %c0_427 = arith.constant 0 : index
    %1246 = vector.load %arg5[%c3_425, %c0_426, %c0_427] : memref<16x8x128xf32, #tpu.memory_space<vmem>>, vector<1x8x128xf32>
    %1247 = vector.shape_cast %1246 : vector<1x8x128xf32> to vector<8x128xf32>
    %1248 = vector.shape_cast %1245 : vector<8x128xf32> to vector<1x8x128xf32>
    tpu.vector_store %arg5[%c3_425, %c0_426, %c0_427], %1248 {strides = array<i32>} : memref<16x8x128xf32, #tpu.memory_space<vmem>>, vector<1x8x128xf32>,
    %c4_428 = arith.constant 4 : index
    %c0_429 = arith.constant 0 : index
    %c0_430 = arith.constant 0 : index
    %1249 = vector.load %arg1[%c4_428, %c0_429, %c0_430] : memref<16x8x128xf32, #tpu.memory_space<vmem>>, vector<1x8x128xf32>
    %1250 = vector.shape_cast %1249 : vector<1x8x128xf32> to vector<8x128xf32>
    %c5_431 = arith.constant 5 : index
    %c0_432 = arith.constant 0 : index
    %c0_433 = arith.constant 0 : index
    %1251 = vector.load %arg1[%c5_431, %c0_432, %c0_433] : memref<16x8x128xf32, #tpu.memory_space<vmem>>, vector<1x8x128xf32>
    %1252 = vector.shape_cast %1251 : vector<1x8x128xf32> to vector<8x128xf32>
    %c2_434 = arith.constant 2 : index
    %c0_435 = arith.constant 0 : index
    %c0_436 = arith.constant 0 : index
    %1253 = vector.load %arg6[%c2_434, %c0_435, %c0_436] : memref<14x8x128xf32, #tpu.memory_space<vmem>>, vector<1x8x128xf32>
    %1254 = vector.shape_cast %1253 : vector<1x8x128xf32> to vector<8x128xf32>
    %c3_437 = arith.constant 3 : index
    %c0_438 = arith.constant 0 : index
    %c0_439 = arith.constant 0 : index
    %1255 = vector.load %arg6[%c3_437, %c0_438, %c0_439] : memref<14x8x128xf32, #tpu.memory_space<vmem>>, vector<1x8x128xf32>
    %1256 = vector.shape_cast %1255 : vector<1x8x128xf32> to vector<8x128xf32>
    %c4_440 = arith.constant 4 : index
    %c0_441 = arith.constant 0 : index
    %c0_442 = arith.constant 0 : index
    %1257 = vector.load %arg7[%c4_440, %c0_441, %c0_442] : memref<14x8x128xf32, #tpu.memory_space<vmem>>, vector<1x8x128xf32>
    %1258 = vector.shape_cast %1257 : vector<1x8x128xf32> to vector<8x128xf32>
    %c5_443 = arith.constant 5 : index
    %c0_444 = arith.constant 0 : index
    %c0_445 = arith.constant 0 : index
    %1259 = vector.load %arg7[%c5_443, %c0_444, %c0_445] : memref<14x8x128xf32, #tpu.memory_space<vmem>>, vector<1x8x128xf32>
    %1260 = vector.shape_cast %1259 : vector<1x8x128xf32> to vector<8x128xf32>
    %c32_446 = arith.constant 32 : index
    %1261 = memref.load %arg3[%c32_446] : memref<128xf32, #tpu.memory_space<smem>>
    %1262 = vector.broadcast %1261 : f32 to vector<8x128xf32>
    %1263 = arith.mulf %1254, %1262 : vector<8x128xf32>
    %1264 = arith.mulf %1263, %1258 : vector<8x128xf32>
    %cst_447 = arith.constant 0.000000e+00 : f32
    %1265 = vector.broadcast %cst_447 : f32 to vector<8x128xf32>
    %1266 = arith.addf %1265, %1264 : vector<8x128xf32>
    %c36_448 = arith.constant 36 : index
    %1267 = memref.load %arg3[%c36_448] : memref<128xf32, #tpu.memory_space<smem>>
    %1268 = vector.broadcast %1267 : f32 to vector<8x128xf32>
    %1269 = arith.mulf %1254, %1268 : vector<8x128xf32>
    %1270 = arith.mulf %1269, %1260 : vector<8x128xf32>
    %1271 = arith.addf %1266, %1270 : vector<8x128xf32>
    %c40_449 = arith.constant 40 : index
    %1272 = memref.load %arg3[%c40_449] : memref<128xf32, #tpu.memory_space<smem>>
    %1273 = vector.broadcast %1272 : f32 to vector<8x128xf32>
    %1274 = arith.mulf %1256, %1273 : vector<8x128xf32>
    %1275 = arith.mulf %1274, %1258 : vector<8x128xf32>
    %1276 = arith.addf %1271, %1275 : vector<8x128xf32>
    %c44_450 = arith.constant 44 : index
    %1277 = memref.load %arg3[%c44_450] : memref<128xf32, #tpu.memory_space<smem>>
    %1278 = vector.broadcast %1277 : f32 to vector<8x128xf32>
    %1279 = arith.mulf %1256, %1278 : vector<8x128xf32>
    %1280 = arith.mulf %1279, %1260 : vector<8x128xf32>
    %1281 = arith.addf %1276, %1280 : vector<8x128xf32>
    %c33_451 = arith.constant 33 : index
    %1282 = memref.load %arg3[%c33_451] : memref<128xf32, #tpu.memory_space<smem>>
    %1283 = vector.broadcast %1282 : f32 to vector<8x128xf32>
    %1284 = arith.mulf %1254, %1283 : vector<8x128xf32>
    %1285 = arith.mulf %1284, %1258 : vector<8x128xf32>
    %cst_452 = arith.constant 0.000000e+00 : f32
    %1286 = vector.broadcast %cst_452 : f32 to vector<8x128xf32>
    %1287 = arith.addf %1286, %1285 : vector<8x128xf32>
    %c37_453 = arith.constant 37 : index
    %1288 = memref.load %arg3[%c37_453] : memref<128xf32, #tpu.memory_space<smem>>
    %1289 = vector.broadcast %1288 : f32 to vector<8x128xf32>
    %1290 = arith.mulf %1254, %1289 : vector<8x128xf32>
    %1291 = arith.mulf %1290, %1260 : vector<8x128xf32>
    %1292 = arith.addf %1287, %1291 : vector<8x128xf32>
    %c41_454 = arith.constant 41 : index
    %1293 = memref.load %arg3[%c41_454] : memref<128xf32, #tpu.memory_space<smem>>
    %1294 = vector.broadcast %1293 : f32 to vector<8x128xf32>
    %1295 = arith.mulf %1256, %1294 : vector<8x128xf32>
    %1296 = arith.mulf %1295, %1258 : vector<8x128xf32>
    %1297 = arith.addf %1292, %1296 : vector<8x128xf32>
    %c45_455 = arith.constant 45 : index
    %1298 = memref.load %arg3[%c45_455] : memref<128xf32, #tpu.memory_space<smem>>
    %1299 = vector.broadcast %1298 : f32 to vector<8x128xf32>
    %1300 = arith.mulf %1256, %1299 : vector<8x128xf32>
    %1301 = arith.mulf %1300, %1260 : vector<8x128xf32>
    %1302 = arith.addf %1297, %1301 : vector<8x128xf32>
    %c34_456 = arith.constant 34 : index
    %1303 = memref.load %arg3[%c34_456] : memref<128xf32, #tpu.memory_space<smem>>
    %1304 = vector.broadcast %1303 : f32 to vector<8x128xf32>
    %1305 = arith.mulf %1254, %1304 : vector<8x128xf32>
    %1306 = arith.mulf %1305, %1258 : vector<8x128xf32>
    %cst_457 = arith.constant 0.000000e+00 : f32
    %1307 = vector.broadcast %cst_457 : f32 to vector<8x128xf32>
    %1308 = arith.addf %1307, %1306 : vector<8x128xf32>
    %c38_458 = arith.constant 38 : index
    %1309 = memref.load %arg3[%c38_458] : memref<128xf32, #tpu.memory_space<smem>>
    %1310 = vector.broadcast %1309 : f32 to vector<8x128xf32>
    %1311 = arith.mulf %1254, %1310 : vector<8x128xf32>
    %1312 = arith.mulf %1311, %1260 : vector<8x128xf32>
    %1313 = arith.addf %1308, %1312 : vector<8x128xf32>
    %c42_459 = arith.constant 42 : index
    %1314 = memref.load %arg3[%c42_459] : memref<128xf32, #tpu.memory_space<smem>>
    %1315 = vector.broadcast %1314 : f32 to vector<8x128xf32>
    %1316 = arith.mulf %1256, %1315 : vector<8x128xf32>
    %1317 = arith.mulf %1316, %1258 : vector<8x128xf32>
    %1318 = arith.addf %1313, %1317 : vector<8x128xf32>
    %c46_460 = arith.constant 46 : index
    %1319 = memref.load %arg3[%c46_460] : memref<128xf32, #tpu.memory_space<smem>>
    %1320 = vector.broadcast %1319 : f32 to vector<8x128xf32>
    %1321 = arith.mulf %1256, %1320 : vector<8x128xf32>
    %1322 = arith.mulf %1321, %1260 : vector<8x128xf32>
    %1323 = arith.addf %1318, %1322 : vector<8x128xf32>
    %c35_461 = arith.constant 35 : index
    %1324 = memref.load %arg3[%c35_461] : memref<128xf32, #tpu.memory_space<smem>>
    %1325 = vector.broadcast %1324 : f32 to vector<8x128xf32>
    %1326 = arith.mulf %1254, %1325 : vector<8x128xf32>
    %1327 = arith.mulf %1326, %1258 : vector<8x128xf32>
    %cst_462 = arith.constant 0.000000e+00 : f32
    %1328 = vector.broadcast %cst_462 : f32 to vector<8x128xf32>
    %1329 = arith.addf %1328, %1327 : vector<8x128xf32>
    %c39_463 = arith.constant 39 : index
    %1330 = memref.load %arg3[%c39_463] : memref<128xf32, #tpu.memory_space<smem>>
    %1331 = vector.broadcast %1330 : f32 to vector<8x128xf32>
    %1332 = arith.mulf %1254, %1331 : vector<8x128xf32>
    %1333 = arith.mulf %1332, %1260 : vector<8x128xf32>
    %1334 = arith.addf %1329, %1333 : vector<8x128xf32>
    %c43_464 = arith.constant 43 : index
    %1335 = memref.load %arg3[%c43_464] : memref<128xf32, #tpu.memory_space<smem>>
    %1336 = vector.broadcast %1335 : f32 to vector<8x128xf32>
    %1337 = arith.mulf %1256, %1336 : vector<8x128xf32>
    %1338 = arith.mulf %1337, %1258 : vector<8x128xf32>
    %1339 = arith.addf %1334, %1338 : vector<8x128xf32>
    %c47_465 = arith.constant 47 : index
    %1340 = memref.load %arg3[%c47_465] : memref<128xf32, #tpu.memory_space<smem>>
    %1341 = vector.broadcast %1340 : f32 to vector<8x128xf32>
    %1342 = arith.mulf %1256, %1341 : vector<8x128xf32>
    %1343 = arith.mulf %1342, %1260 : vector<8x128xf32>
    %1344 = arith.addf %1339, %1343 : vector<8x128xf32>
    %1345 = arith.mulf %1281, %1281 : vector<8x128xf32>
    %cst_466 = arith.constant 0.000000e+00 : f32
    %1346 = vector.broadcast %cst_466 : f32 to vector<8x128xf32>
    %1347 = arith.addf %1346, %1345 : vector<8x128xf32>
    %1348 = arith.mulf %1302, %1302 : vector<8x128xf32>
    %1349 = arith.addf %1347, %1348 : vector<8x128xf32>
    %1350 = arith.mulf %1323, %1323 : vector<8x128xf32>
    %1351 = arith.addf %1349, %1350 : vector<8x128xf32>
    %1352 = arith.mulf %1344, %1344 : vector<8x128xf32>
    %1353 = arith.addf %1351, %1352 : vector<8x128xf32>
    %1354 = math.sqrt %1353 : vector<8x128xf32>
    %cst_467 = arith.constant 9.99999997E-7 : f32
    %1355 = vector.broadcast %cst_467 : f32 to vector<8x128xf32>
    %1356 = arith.addf %1354, %1355 : vector<8x128xf32>
    %1357 = tpu.reciprocal %1356 : vector<8x128xf32> -> vector<8x128xf32>
    %1358 = vector.broadcast %0 : f32 to vector<8x128xf32>
    %1359 = arith.mulf %1358, %1357 : vector<8x128xf32>
    %cst_468 = arith.constant 0x7F800000 : f32
    %1360 = vector.broadcast %cst_468 : f32 to vector<8x128xf32>
    %1361 = arith.cmpf olt, %1356, %1360 : vector<8x128xf32>
    %1362 = arith.mulf %1281, %1250 : vector<8x128xf32>
    %cst_469 = arith.constant 0.000000e+00 : f32
    %1363 = vector.broadcast %cst_469 : f32 to vector<8x128xf32>
    %1364 = arith.addf %1363, %1362 : vector<8x128xf32>
    %1365 = arith.mulf %1302, %1252 : vector<8x128xf32>
    %1366 = arith.addf %1364, %1365 : vector<8x128xf32>
    %1367 = arith.mulf %1366, %1359 : vector<8x128xf32>
    %cst_470 = arith.constant 0.000000e+00 : f32
    %1368 = vector.broadcast %cst_470 : f32 to vector<8x128xf32>
    %1369 = arith.select %1361, %1367, %1368 : vector<8x128xi1>, vector<8x128xf32>
    %cst_471 = arith.constant 0.000000e+00 : f32
    %1370 = vector.broadcast %cst_471 : f32 to vector<8x128xf32>
    %1371 = arith.cmpf oge, %1369, %1370 : vector<8x128xf32>
    %cst_472 = arith.constant 9.99999974E-6 : f32
    %1372 = vector.broadcast %cst_472 : f32 to vector<8x128xf32>
    %1373 = arith.mulf %1372, %1369 : vector<8x128xf32>
    %1374 = arith.select %1371, %1369, %1373 : vector<8x128xi1>, vector<8x128xf32>
    %1375 = math.absf %1374 : vector<8x128xf32>
    %1376 = arith.mulf %1323, %1250 : vector<8x128xf32>
    %cst_473 = arith.constant 0.000000e+00 : f32
    %1377 = vector.broadcast %cst_473 : f32 to vector<8x128xf32>
    %1378 = arith.addf %1377, %1376 : vector<8x128xf32>
    %1379 = arith.mulf %1344, %1252 : vector<8x128xf32>
    %1380 = arith.addf %1378, %1379 : vector<8x128xf32>
    %1381 = arith.mulf %1380, %1359 : vector<8x128xf32>
    %cst_474 = arith.constant 0.000000e+00 : f32
    %1382 = vector.broadcast %cst_474 : f32 to vector<8x128xf32>
    %1383 = arith.select %1361, %1381, %1382 : vector<8x128xi1>, vector<8x128xf32>
    %cst_475 = arith.constant 0.000000e+00 : f32
    %1384 = vector.broadcast %cst_475 : f32 to vector<8x128xf32>
    %1385 = arith.cmpf oge, %1383, %1384 : vector<8x128xf32>
    %cst_476 = arith.constant 9.99999974E-6 : f32
    %1386 = vector.broadcast %cst_476 : f32 to vector<8x128xf32>
    %1387 = arith.mulf %1386, %1383 : vector<8x128xf32>
    %1388 = arith.select %1385, %1383, %1387 : vector<8x128xi1>, vector<8x128xf32>
    %1389 = math.absf %1388 : vector<8x128xf32>
    %cst_477 = arith.constant 0.000000e+00 : f32
    %1390 = vector.broadcast %cst_477 : f32 to vector<8x128xf32>
    %1391 = arith.addf %1390, %1375 : vector<8x128xf32>
    %1392 = arith.addf %1391, %1389 : vector<8x128xf32>
    %1393 = tpu.reciprocal %1392 : vector<8x128xf32> -> vector<8x128xf32>
    %1394 = arith.mulf %1375, %1393 : vector<8x128xf32>
    %c4_478 = arith.constant 4 : index
    %c0_479 = arith.constant 0 : index
    %c0_480 = arith.constant 0 : index
    %1395 = vector.load %arg5[%c4_478, %c0_479, %c0_480] : memref<16x8x128xf32, #tpu.memory_space<vmem>>, vector<1x8x128xf32>
    %1396 = vector.shape_cast %1395 : vector<1x8x128xf32> to vector<8x128xf32>
    %1397 = vector.shape_cast %1394 : vector<8x128xf32> to vector<1x8x128xf32>
    tpu.vector_store %arg5[%c4_478, %c0_479, %c0_480], %1397 {strides = array<i32>} : memref<16x8x128xf32, #tpu.memory_space<vmem>>, vector<1x8x128xf32>,
    %1398 = arith.mulf %1389, %1393 : vector<8x128xf32>
    %c5_481 = arith.constant 5 : index
    %c0_482 = arith.constant 0 : index
    %c0_483 = arith.constant 0 : index
    %1399 = vector.load %arg5[%c5_481, %c0_482, %c0_483] : memref<16x8x128xf32, #tpu.memory_space<vmem>>, vector<1x8x128xf32>
    %1400 = vector.shape_cast %1399 : vector<1x8x128xf32> to vector<8x128xf32>
    %1401 = vector.shape_cast %1398 : vector<8x128xf32> to vector<1x8x128xf32>
    tpu.vector_store %arg5[%c5_481, %c0_482, %c0_483], %1401 {strides = array<i32>} : memref<16x8x128xf32, #tpu.memory_space<vmem>>, vector<1x8x128xf32>,
    %c6_484 = arith.constant 6 : index
    %c0_485 = arith.constant 0 : index
    %c0_486 = arith.constant 0 : index
    %1402 = vector.load %arg1[%c6_484, %c0_485, %c0_486] : memref<16x8x128xf32, #tpu.memory_space<vmem>>, vector<1x8x128xf32>
    %1403 = vector.shape_cast %1402 : vector<1x8x128xf32> to vector<8x128xf32>
    %c7_487 = arith.constant 7 : index
    %c0_488 = arith.constant 0 : index
    %c0_489 = arith.constant 0 : index
    %1404 = vector.load %arg1[%c7_487, %c0_488, %c0_489] : memref<16x8x128xf32, #tpu.memory_space<vmem>>, vector<1x8x128xf32>
    %1405 = vector.shape_cast %1404 : vector<1x8x128xf32> to vector<8x128xf32>
    %c4_490 = arith.constant 4 : index
    %c0_491 = arith.constant 0 : index
    %c0_492 = arith.constant 0 : index
    %1406 = vector.load %arg6[%c4_490, %c0_491, %c0_492] : memref<14x8x128xf32, #tpu.memory_space<vmem>>, vector<1x8x128xf32>
    %1407 = vector.shape_cast %1406 : vector<1x8x128xf32> to vector<8x128xf32>
    %c5_493 = arith.constant 5 : index
    %c0_494 = arith.constant 0 : index
    %c0_495 = arith.constant 0 : index
    %1408 = vector.load %arg6[%c5_493, %c0_494, %c0_495] : memref<14x8x128xf32, #tpu.memory_space<vmem>>, vector<1x8x128xf32>
    %1409 = vector.shape_cast %1408 : vector<1x8x128xf32> to vector<8x128xf32>
    %c6_496 = arith.constant 6 : index
    %c0_497 = arith.constant 0 : index
    %c0_498 = arith.constant 0 : index
    %1410 = vector.load %arg7[%c6_496, %c0_497, %c0_498] : memref<14x8x128xf32, #tpu.memory_space<vmem>>, vector<1x8x128xf32>
    %1411 = vector.shape_cast %1410 : vector<1x8x128xf32> to vector<8x128xf32>
    %c7_499 = arith.constant 7 : index
    %c0_500 = arith.constant 0 : index
    %c0_501 = arith.constant 0 : index
    %1412 = vector.load %arg7[%c7_499, %c0_500, %c0_501] : memref<14x8x128xf32, #tpu.memory_space<vmem>>, vector<1x8x128xf32>
    %1413 = vector.shape_cast %1412 : vector<1x8x128xf32> to vector<8x128xf32>
    %c48_502 = arith.constant 48 : index
    %1414 = memref.load %arg3[%c48_502] : memref<128xf32, #tpu.memory_space<smem>>
    %1415 = vector.broadcast %1414 : f32 to vector<8x128xf32>
    %1416 = arith.mulf %1407, %1415 : vector<8x128xf32>
    %1417 = arith.mulf %1416, %1411 : vector<8x128xf32>
    %cst_503 = arith.constant 0.000000e+00 : f32
    %1418 = vector.broadcast %cst_503 : f32 to vector<8x128xf32>
    %1419 = arith.addf %1418, %1417 : vector<8x128xf32>
    %c52_504 = arith.constant 52 : index
    %1420 = memref.load %arg3[%c52_504] : memref<128xf32, #tpu.memory_space<smem>>
    %1421 = vector.broadcast %1420 : f32 to vector<8x128xf32>
    %1422 = arith.mulf %1407, %1421 : vector<8x128xf32>
    %1423 = arith.mulf %1422, %1413 : vector<8x128xf32>
    %1424 = arith.addf %1419, %1423 : vector<8x128xf32>
    %c56_505 = arith.constant 56 : index
    %1425 = memref.load %arg3[%c56_505] : memref<128xf32, #tpu.memory_space<smem>>
    %1426 = vector.broadcast %1425 : f32 to vector<8x128xf32>
    %1427 = arith.mulf %1409, %1426 : vector<8x128xf32>
    %1428 = arith.mulf %1427, %1411 : vector<8x128xf32>
    %1429 = arith.addf %1424, %1428 : vector<8x128xf32>
    %c60_506 = arith.constant 60 : index
    %1430 = memref.load %arg3[%c60_506] : memref<128xf32, #tpu.memory_space<smem>>
    %1431 = vector.broadcast %1430 : f32 to vector<8x128xf32>
    %1432 = arith.mulf %1409, %1431 : vector<8x128xf32>
    %1433 = arith.mulf %1432, %1413 : vector<8x128xf32>
    %1434 = arith.addf %1429, %1433 : vector<8x128xf32>
    %c49_507 = arith.constant 49 : index
    %1435 = memref.load %arg3[%c49_507] : memref<128xf32, #tpu.memory_space<smem>>
    %1436 = vector.broadcast %1435 : f32 to vector<8x128xf32>
    %1437 = arith.mulf %1407, %1436 : vector<8x128xf32>
    %1438 = arith.mulf %1437, %1411 : vector<8x128xf32>
    %cst_508 = arith.constant 0.000000e+00 : f32
    %1439 = vector.broadcast %cst_508 : f32 to vector<8x128xf32>
    %1440 = arith.addf %1439, %1438 : vector<8x128xf32>
    %c53_509 = arith.constant 53 : index
    %1441 = memref.load %arg3[%c53_509] : memref<128xf32, #tpu.memory_space<smem>>
    %1442 = vector.broadcast %1441 : f32 to vector<8x128xf32>
    %1443 = arith.mulf %1407, %1442 : vector<8x128xf32>
    %1444 = arith.mulf %1443, %1413 : vector<8x128xf32>
    %1445 = arith.addf %1440, %1444 : vector<8x128xf32>
    %c57_510 = arith.constant 57 : index
    %1446 = memref.load %arg3[%c57_510] : memref<128xf32, #tpu.memory_space<smem>>
    %1447 = vector.broadcast %1446 : f32 to vector<8x128xf32>
    %1448 = arith.mulf %1409, %1447 : vector<8x128xf32>
    %1449 = arith.mulf %1448, %1411 : vector<8x128xf32>
    %1450 = arith.addf %1445, %1449 : vector<8x128xf32>
    %c61_511 = arith.constant 61 : index
    %1451 = memref.load %arg3[%c61_511] : memref<128xf32, #tpu.memory_space<smem>>
    %1452 = vector.broadcast %1451 : f32 to vector<8x128xf32>
    %1453 = arith.mulf %1409, %1452 : vector<8x128xf32>
    %1454 = arith.mulf %1453, %1413 : vector<8x128xf32>
    %1455 = arith.addf %1450, %1454 : vector<8x128xf32>
    %c50_512 = arith.constant 50 : index
    %1456 = memref.load %arg3[%c50_512] : memref<128xf32, #tpu.memory_space<smem>>
    %1457 = vector.broadcast %1456 : f32 to vector<8x128xf32>
    %1458 = arith.mulf %1407, %1457 : vector<8x128xf32>
    %1459 = arith.mulf %1458, %1411 : vector<8x128xf32>
    %cst_513 = arith.constant 0.000000e+00 : f32
    %1460 = vector.broadcast %cst_513 : f32 to vector<8x128xf32>
    %1461 = arith.addf %1460, %1459 : vector<8x128xf32>
    %c54_514 = arith.constant 54 : index
    %1462 = memref.load %arg3[%c54_514] : memref<128xf32, #tpu.memory_space<smem>>
    %1463 = vector.broadcast %1462 : f32 to vector<8x128xf32>
    %1464 = arith.mulf %1407, %1463 : vector<8x128xf32>
    %1465 = arith.mulf %1464, %1413 : vector<8x128xf32>
    %1466 = arith.addf %1461, %1465 : vector<8x128xf32>
    %c58 = arith.constant 58 : index
    %1467 = memref.load %arg3[%c58] : memref<128xf32, #tpu.memory_space<smem>>
    %1468 = vector.broadcast %1467 : f32 to vector<8x128xf32>
    %1469 = arith.mulf %1409, %1468 : vector<8x128xf32>
    %1470 = arith.mulf %1469, %1411 : vector<8x128xf32>
    %1471 = arith.addf %1466, %1470 : vector<8x128xf32>
    %c62 = arith.constant 62 : index
    %1472 = memref.load %arg3[%c62] : memref<128xf32, #tpu.memory_space<smem>>
    %1473 = vector.broadcast %1472 : f32 to vector<8x128xf32>
    %1474 = arith.mulf %1409, %1473 : vector<8x128xf32>
    %1475 = arith.mulf %1474, %1413 : vector<8x128xf32>
    %1476 = arith.addf %1471, %1475 : vector<8x128xf32>
    %c51_515 = arith.constant 51 : index
    %1477 = memref.load %arg3[%c51_515] : memref<128xf32, #tpu.memory_space<smem>>
    %1478 = vector.broadcast %1477 : f32 to vector<8x128xf32>
    %1479 = arith.mulf %1407, %1478 : vector<8x128xf32>
    %1480 = arith.mulf %1479, %1411 : vector<8x128xf32>
    %cst_516 = arith.constant 0.000000e+00 : f32
    %1481 = vector.broadcast %cst_516 : f32 to vector<8x128xf32>
    %1482 = arith.addf %1481, %1480 : vector<8x128xf32>
    %c55_517 = arith.constant 55 : index
    %1483 = memref.load %arg3[%c55_517] : memref<128xf32, #tpu.memory_space<smem>>
    %1484 = vector.broadcast %1483 : f32 to vector<8x128xf32>
    %1485 = arith.mulf %1407, %1484 : vector<8x128xf32>
    %1486 = arith.mulf %1485, %1413 : vector<8x128xf32>
    %1487 = arith.addf %1482, %1486 : vector<8x128xf32>
    %c59 = arith.constant 59 : index
    %1488 = memref.load %arg3[%c59] : memref<128xf32, #tpu.memory_space<smem>>
    %1489 = vector.broadcast %1488 : f32 to vector<8x128xf32>
    %1490 = arith.mulf %1409, %1489 : vector<8x128xf32>
    %1491 = arith.mulf %1490, %1411 : vector<8x128xf32>
    %1492 = arith.addf %1487, %1491 : vector<8x128xf32>
    %c63 = arith.constant 63 : index
    %1493 = memref.load %arg3[%c63] : memref<128xf32, #tpu.memory_space<smem>>
    %1494 = vector.broadcast %1493 : f32 to vector<8x128xf32>
    %1495 = arith.mulf %1409, %1494 : vector<8x128xf32>
    %1496 = arith.mulf %1495, %1413 : vector<8x128xf32>
    %1497 = arith.addf %1492, %1496 : vector<8x128xf32>
    %1498 = arith.mulf %1434, %1434 : vector<8x128xf32>
    %cst_518 = arith.constant 0.000000e+00 : f32
    %1499 = vector.broadcast %cst_518 : f32 to vector<8x128xf32>
    %1500 = arith.addf %1499, %1498 : vector<8x128xf32>
    %1501 = arith.mulf %1455, %1455 : vector<8x128xf32>
    %1502 = arith.addf %1500, %1501 : vector<8x128xf32>
    %1503 = arith.mulf %1476, %1476 : vector<8x128xf32>
    %1504 = arith.addf %1502, %1503 : vector<8x128xf32>
    %1505 = arith.mulf %1497, %1497 : vector<8x128xf32>
    %1506 = arith.addf %1504, %1505 : vector<8x128xf32>
    %1507 = math.sqrt %1506 : vector<8x128xf32>
    %cst_519 = arith.constant 9.99999997E-7 : f32
    %1508 = vector.broadcast %cst_519 : f32 to vector<8x128xf32>
    %1509 = arith.addf %1507, %1508 : vector<8x128xf32>
    %1510 = tpu.reciprocal %1509 : vector<8x128xf32> -> vector<8x128xf32>
    %1511 = vector.broadcast %0 : f32 to vector<8x128xf32>
    %1512 = arith.mulf %1511, %1510 : vector<8x128xf32>
    %cst_520 = arith.constant 0x7F800000 : f32
    %1513 = vector.broadcast %cst_520 : f32 to vector<8x128xf32>
    %1514 = arith.cmpf olt, %1509, %1513 : vector<8x128xf32>
    %1515 = arith.mulf %1434, %1403 : vector<8x128xf32>
    %cst_521 = arith.constant 0.000000e+00 : f32
    %1516 = vector.broadcast %cst_521 : f32 to vector<8x128xf32>
    %1517 = arith.addf %1516, %1515 : vector<8x128xf32>
    %1518 = arith.mulf %1455, %1405 : vector<8x128xf32>
    %1519 = arith.addf %1517, %1518 : vector<8x128xf32>
    %1520 = arith.mulf %1519, %1512 : vector<8x128xf32>
    %cst_522 = arith.constant 0.000000e+00 : f32
    %1521 = vector.broadcast %cst_522 : f32 to vector<8x128xf32>
    %1522 = arith.select %1514, %1520, %1521 : vector<8x128xi1>, vector<8x128xf32>
    %cst_523 = arith.constant 0.000000e+00 : f32
    %1523 = vector.broadcast %cst_523 : f32 to vector<8x128xf32>
    %1524 = arith.cmpf oge, %1522, %1523 : vector<8x128xf32>
    %cst_524 = arith.constant 9.99999974E-6 : f32
    %1525 = vector.broadcast %cst_524 : f32 to vector<8x128xf32>
    %1526 = arith.mulf %1525, %1522 : vector<8x128xf32>
    %1527 = arith.select %1524, %1522, %1526 : vector<8x128xi1>, vector<8x128xf32>
    %1528 = math.absf %1527 : vector<8x128xf32>
    %1529 = arith.mulf %1476, %1403 : vector<8x128xf32>
    %cst_525 = arith.constant 0.000000e+00 : f32
    %1530 = vector.broadcast %cst_525 : f32 to vector<8x128xf32>
    %1531 = arith.addf %1530, %1529 : vector<8x128xf32>
    %1532 = arith.mulf %1497, %1405 : vector<8x128xf32>
    %1533 = arith.addf %1531, %1532 : vector<8x128xf32>
    %1534 = arith.mulf %1533, %1512 : vector<8x128xf32>
    %cst_526 = arith.constant 0.000000e+00 : f32
    %1535 = vector.broadcast %cst_526 : f32 to vector<8x128xf32>
    %1536 = arith.select %1514, %1534, %1535 : vector<8x128xi1>, vector<8x128xf32>
    %cst_527 = arith.constant 0.000000e+00 : f32
    %1537 = vector.broadcast %cst_527 : f32 to vector<8x128xf32>
    %1538 = arith.cmpf oge, %1536, %1537 : vector<8x128xf32>
    %cst_528 = arith.constant 9.99999974E-6 : f32
    %1539 = vector.broadcast %cst_528 : f32 to vector<8x128xf32>
    %1540 = arith.mulf %1539, %1536 : vector<8x128xf32>
    %1541 = arith.select %1538, %1536, %1540 : vector<8x128xi1>, vector<8x128xf32>
    %1542 = math.absf %1541 : vector<8x128xf32>
    %cst_529 = arith.constant 0.000000e+00 : f32
    %1543 = vector.broadcast %cst_529 : f32 to vector<8x128xf32>
    %1544 = arith.addf %1543, %1528 : vector<8x128xf32>
    %1545 = arith.addf %1544, %1542 : vector<8x128xf32>
    %1546 = tpu.reciprocal %1545 : vector<8x128xf32> -> vector<8x128xf32>
    %1547 = arith.mulf %1528, %1546 : vector<8x128xf32>
    %c6_530 = arith.constant 6 : index
    %c0_531 = arith.constant 0 : index
    %c0_532 = arith.constant 0 : index
    %1548 = vector.load %arg5[%c6_530, %c0_531, %c0_532] : memref<16x8x128xf32, #tpu.memory_space<vmem>>, vector<1x8x128xf32>
    %1549 = vector.shape_cast %1548 : vector<1x8x128xf32> to vector<8x128xf32>
    %1550 = vector.shape_cast %1547 : vector<8x128xf32> to vector<1x8x128xf32>
    tpu.vector_store %arg5[%c6_530, %c0_531, %c0_532], %1550 {strides = array<i32>} : memref<16x8x128xf32, #tpu.memory_space<vmem>>, vector<1x8x128xf32>,
    %1551 = arith.mulf %1542, %1546 : vector<8x128xf32>
    %c7_533 = arith.constant 7 : index
    %c0_534 = arith.constant 0 : index
    %c0_535 = arith.constant 0 : index
    %1552 = vector.load %arg5[%c7_533, %c0_534, %c0_535] : memref<16x8x128xf32, #tpu.memory_space<vmem>>, vector<1x8x128xf32>
    %1553 = vector.shape_cast %1552 : vector<1x8x128xf32> to vector<8x128xf32>
    %1554 = vector.shape_cast %1551 : vector<8x128xf32> to vector<1x8x128xf32>
    tpu.vector_store %arg5[%c7_533, %c0_534, %c0_535], %1554 {strides = array<i32>} : memref<16x8x128xf32, #tpu.memory_space<vmem>>, vector<1x8x128xf32>,
    %c8_536 = arith.constant 8 : index
    %c0_537 = arith.constant 0 : index
    %c0_538 = arith.constant 0 : index
    %1555 = vector.load %arg1[%c8_536, %c0_537, %c0_538] : memref<16x8x128xf32, #tpu.memory_space<vmem>>, vector<1x8x128xf32>
    %1556 = vector.shape_cast %1555 : vector<1x8x128xf32> to vector<8x128xf32>
    %c9_539 = arith.constant 9 : index
    %c0_540 = arith.constant 0 : index
    %c0_541 = arith.constant 0 : index
    %1557 = vector.load %arg1[%c9_539, %c0_540, %c0_541] : memref<16x8x128xf32, #tpu.memory_space<vmem>>, vector<1x8x128xf32>
    %1558 = vector.shape_cast %1557 : vector<1x8x128xf32> to vector<8x128xf32>
    %c6_542 = arith.constant 6 : index
    %c0_543 = arith.constant 0 : index
    %c0_544 = arith.constant 0 : index
    %1559 = vector.load %arg6[%c6_542, %c0_543, %c0_544] : memref<14x8x128xf32, #tpu.memory_space<vmem>>, vector<1x8x128xf32>
    %1560 = vector.shape_cast %1559 : vector<1x8x128xf32> to vector<8x128xf32>
    %c7_545 = arith.constant 7 : index
    %c0_546 = arith.constant 0 : index
    %c0_547 = arith.constant 0 : index
    %1561 = vector.load %arg6[%c7_545, %c0_546, %c0_547] : memref<14x8x128xf32, #tpu.memory_space<vmem>>, vector<1x8x128xf32>
    %1562 = vector.shape_cast %1561 : vector<1x8x128xf32> to vector<8x128xf32>
    %c8_548 = arith.constant 8 : index
    %c0_549 = arith.constant 0 : index
    %c0_550 = arith.constant 0 : index
    %1563 = vector.load %arg7[%c8_548, %c0_549, %c0_550] : memref<14x8x128xf32, #tpu.memory_space<vmem>>, vector<1x8x128xf32>
    %1564 = vector.shape_cast %1563 : vector<1x8x128xf32> to vector<8x128xf32>
    %c9_551 = arith.constant 9 : index
    %c0_552 = arith.constant 0 : index
    %c0_553 = arith.constant 0 : index
    %1565 = vector.load %arg7[%c9_551, %c0_552, %c0_553] : memref<14x8x128xf32, #tpu.memory_space<vmem>>, vector<1x8x128xf32>
    %1566 = vector.shape_cast %1565 : vector<1x8x128xf32> to vector<8x128xf32>
    %c64 = arith.constant 64 : index
    %1567 = memref.load %arg3[%c64] : memref<128xf32, #tpu.memory_space<smem>>
    %1568 = vector.broadcast %1567 : f32 to vector<8x128xf32>
    %1569 = arith.mulf %1560, %1568 : vector<8x128xf32>
    %1570 = arith.mulf %1569, %1564 : vector<8x128xf32>
    %cst_554 = arith.constant 0.000000e+00 : f32
    %1571 = vector.broadcast %cst_554 : f32 to vector<8x128xf32>
    %1572 = arith.addf %1571, %1570 : vector<8x128xf32>
    %c68 = arith.constant 68 : index
    %1573 = memref.load %arg3[%c68] : memref<128xf32, #tpu.memory_space<smem>>
    %1574 = vector.broadcast %1573 : f32 to vector<8x128xf32>
    %1575 = arith.mulf %1560, %1574 : vector<8x128xf32>
    %1576 = arith.mulf %1575, %1566 : vector<8x128xf32>
    %1577 = arith.addf %1572, %1576 : vector<8x128xf32>
    %c72 = arith.constant 72 : index
    %1578 = memref.load %arg3[%c72] : memref<128xf32, #tpu.memory_space<smem>>
    %1579 = vector.broadcast %1578 : f32 to vector<8x128xf32>
    %1580 = arith.mulf %1562, %1579 : vector<8x128xf32>
    %1581 = arith.mulf %1580, %1564 : vector<8x128xf32>
    %1582 = arith.addf %1577, %1581 : vector<8x128xf32>
    %c76 = arith.constant 76 : index
    %1583 = memref.load %arg3[%c76] : memref<128xf32, #tpu.memory_space<smem>>
    %1584 = vector.broadcast %1583 : f32 to vector<8x128xf32>
    %1585 = arith.mulf %1562, %1584 : vector<8x128xf32>
    %1586 = arith.mulf %1585, %1566 : vector<8x128xf32>
    %1587 = arith.addf %1582, %1586 : vector<8x128xf32>
    %c65 = arith.constant 65 : index
    %1588 = memref.load %arg3[%c65] : memref<128xf32, #tpu.memory_space<smem>>
    %1589 = vector.broadcast %1588 : f32 to vector<8x128xf32>
    %1590 = arith.mulf %1560, %1589 : vector<8x128xf32>
    %1591 = arith.mulf %1590, %1564 : vector<8x128xf32>
    %cst_555 = arith.constant 0.000000e+00 : f32
    %1592 = vector.broadcast %cst_555 : f32 to vector<8x128xf32>
    %1593 = arith.addf %1592, %1591 : vector<8x128xf32>
    %c69 = arith.constant 69 : index
    %1594 = memref.load %arg3[%c69] : memref<128xf32, #tpu.memory_space<smem>>
    %1595 = vector.broadcast %1594 : f32 to vector<8x128xf32>
    %1596 = arith.mulf %1560, %1595 : vector<8x128xf32>
    %1597 = arith.mulf %1596, %1566 : vector<8x128xf32>
    %1598 = arith.addf %1593, %1597 : vector<8x128xf32>
    %c73 = arith.constant 73 : index
    %1599 = memref.load %arg3[%c73] : memref<128xf32, #tpu.memory_space<smem>>
    %1600 = vector.broadcast %1599 : f32 to vector<8x128xf32>
    %1601 = arith.mulf %1562, %1600 : vector<8x128xf32>
    %1602 = arith.mulf %1601, %1564 : vector<8x128xf32>
    %1603 = arith.addf %1598, %1602 : vector<8x128xf32>
    %c77 = arith.constant 77 : index
    %1604 = memref.load %arg3[%c77] : memref<128xf32, #tpu.memory_space<smem>>
    %1605 = vector.broadcast %1604 : f32 to vector<8x128xf32>
    %1606 = arith.mulf %1562, %1605 : vector<8x128xf32>
    %1607 = arith.mulf %1606, %1566 : vector<8x128xf32>
    %1608 = arith.addf %1603, %1607 : vector<8x128xf32>
    %c66 = arith.constant 66 : index
    %1609 = memref.load %arg3[%c66] : memref<128xf32, #tpu.memory_space<smem>>
    %1610 = vector.broadcast %1609 : f32 to vector<8x128xf32>
    %1611 = arith.mulf %1560, %1610 : vector<8x128xf32>
    %1612 = arith.mulf %1611, %1564 : vector<8x128xf32>
    %cst_556 = arith.constant 0.000000e+00 : f32
    %1613 = vector.broadcast %cst_556 : f32 to vector<8x128xf32>
    %1614 = arith.addf %1613, %1612 : vector<8x128xf32>
    %c70 = arith.constant 70 : index
    %1615 = memref.load %arg3[%c70] : memref<128xf32, #tpu.memory_space<smem>>
    %1616 = vector.broadcast %1615 : f32 to vector<8x128xf32>
    %1617 = arith.mulf %1560, %1616 : vector<8x128xf32>
    %1618 = arith.mulf %1617, %1566 : vector<8x128xf32>
    %1619 = arith.addf %1614, %1618 : vector<8x128xf32>
    %c74 = arith.constant 74 : index
    %1620 = memref.load %arg3[%c74] : memref<128xf32, #tpu.memory_space<smem>>
    %1621 = vector.broadcast %1620 : f32 to vector<8x128xf32>
    %1622 = arith.mulf %1562, %1621 : vector<8x128xf32>
    %1623 = arith.mulf %1622, %1564 : vector<8x128xf32>
    %1624 = arith.addf %1619, %1623 : vector<8x128xf32>
    %c78 = arith.constant 78 : index
    %1625 = memref.load %arg3[%c78] : memref<128xf32, #tpu.memory_space<smem>>
    %1626 = vector.broadcast %1625 : f32 to vector<8x128xf32>
    %1627 = arith.mulf %1562, %1626 : vector<8x128xf32>
    %1628 = arith.mulf %1627, %1566 : vector<8x128xf32>
    %1629 = arith.addf %1624, %1628 : vector<8x128xf32>
    %c67 = arith.constant 67 : index
    %1630 = memref.load %arg3[%c67] : memref<128xf32, #tpu.memory_space<smem>>
    %1631 = vector.broadcast %1630 : f32 to vector<8x128xf32>
    %1632 = arith.mulf %1560, %1631 : vector<8x128xf32>
    %1633 = arith.mulf %1632, %1564 : vector<8x128xf32>
    %cst_557 = arith.constant 0.000000e+00 : f32
    %1634 = vector.broadcast %cst_557 : f32 to vector<8x128xf32>
    %1635 = arith.addf %1634, %1633 : vector<8x128xf32>
    %c71 = arith.constant 71 : index
    %1636 = memref.load %arg3[%c71] : memref<128xf32, #tpu.memory_space<smem>>
    %1637 = vector.broadcast %1636 : f32 to vector<8x128xf32>
    %1638 = arith.mulf %1560, %1637 : vector<8x128xf32>
    %1639 = arith.mulf %1638, %1566 : vector<8x128xf32>
    %1640 = arith.addf %1635, %1639 : vector<8x128xf32>
    %c75 = arith.constant 75 : index
    %1641 = memref.load %arg3[%c75] : memref<128xf32, #tpu.memory_space<smem>>
    %1642 = vector.broadcast %1641 : f32 to vector<8x128xf32>
    %1643 = arith.mulf %1562, %1642 : vector<8x128xf32>
    %1644 = arith.mulf %1643, %1564 : vector<8x128xf32>
    %1645 = arith.addf %1640, %1644 : vector<8x128xf32>
    %c79 = arith.constant 79 : index
    %1646 = memref.load %arg3[%c79] : memref<128xf32, #tpu.memory_space<smem>>
    %1647 = vector.broadcast %1646 : f32 to vector<8x128xf32>
    %1648 = arith.mulf %1562, %1647 : vector<8x128xf32>
    %1649 = arith.mulf %1648, %1566 : vector<8x128xf32>
    %1650 = arith.addf %1645, %1649 : vector<8x128xf32>
    %1651 = arith.mulf %1587, %1587 : vector<8x128xf32>
    %cst_558 = arith.constant 0.000000e+00 : f32
    %1652 = vector.broadcast %cst_558 : f32 to vector<8x128xf32>
    %1653 = arith.addf %1652, %1651 : vector<8x128xf32>
    %1654 = arith.mulf %1608, %1608 : vector<8x128xf32>
    %1655 = arith.addf %1653, %1654 : vector<8x128xf32>
    %1656 = arith.mulf %1629, %1629 : vector<8x128xf32>
    %1657 = arith.addf %1655, %1656 : vector<8x128xf32>
    %1658 = arith.mulf %1650, %1650 : vector<8x128xf32>
    %1659 = arith.addf %1657, %1658 : vector<8x128xf32>
    %1660 = math.sqrt %1659 : vector<8x128xf32>
    %cst_559 = arith.constant 9.99999997E-7 : f32
    %1661 = vector.broadcast %cst_559 : f32 to vector<8x128xf32>
    %1662 = arith.addf %1660, %1661 : vector<8x128xf32>
    %1663 = tpu.reciprocal %1662 : vector<8x128xf32> -> vector<8x128xf32>
    %1664 = vector.broadcast %0 : f32 to vector<8x128xf32>
    %1665 = arith.mulf %1664, %1663 : vector<8x128xf32>
    %cst_560 = arith.constant 0x7F800000 : f32
    %1666 = vector.broadcast %cst_560 : f32 to vector<8x128xf32>
    %1667 = arith.cmpf olt, %1662, %1666 : vector<8x128xf32>
    %1668 = arith.mulf %1587, %1556 : vector<8x128xf32>
    %cst_561 = arith.constant 0.000000e+00 : f32
    %1669 = vector.broadcast %cst_561 : f32 to vector<8x128xf32>
    %1670 = arith.addf %1669, %1668 : vector<8x128xf32>
    %1671 = arith.mulf %1608, %1558 : vector<8x128xf32>
    %1672 = arith.addf %1670, %1671 : vector<8x128xf32>
    %1673 = arith.mulf %1672, %1665 : vector<8x128xf32>
    %cst_562 = arith.constant 0.000000e+00 : f32
    %1674 = vector.broadcast %cst_562 : f32 to vector<8x128xf32>
    %1675 = arith.select %1667, %1673, %1674 : vector<8x128xi1>, vector<8x128xf32>
    %cst_563 = arith.constant 0.000000e+00 : f32
    %1676 = vector.broadcast %cst_563 : f32 to vector<8x128xf32>
    %1677 = arith.cmpf oge, %1675, %1676 : vector<8x128xf32>
    %cst_564 = arith.constant 9.99999974E-6 : f32
    %1678 = vector.broadcast %cst_564 : f32 to vector<8x128xf32>
    %1679 = arith.mulf %1678, %1675 : vector<8x128xf32>
    %1680 = arith.select %1677, %1675, %1679 : vector<8x128xi1>, vector<8x128xf32>
    %1681 = math.absf %1680 : vector<8x128xf32>
    %1682 = arith.mulf %1629, %1556 : vector<8x128xf32>
    %cst_565 = arith.constant 0.000000e+00 : f32
    %1683 = vector.broadcast %cst_565 : f32 to vector<8x128xf32>
    %1684 = arith.addf %1683, %1682 : vector<8x128xf32>
    %1685 = arith.mulf %1650, %1558 : vector<8x128xf32>
    %1686 = arith.addf %1684, %1685 : vector<8x128xf32>
    %1687 = arith.mulf %1686, %1665 : vector<8x128xf32>
    %cst_566 = arith.constant 0.000000e+00 : f32
    %1688 = vector.broadcast %cst_566 : f32 to vector<8x128xf32>
    %1689 = arith.select %1667, %1687, %1688 : vector<8x128xi1>, vector<8x128xf32>
    %cst_567 = arith.constant 0.000000e+00 : f32
    %1690 = vector.broadcast %cst_567 : f32 to vector<8x128xf32>
    %1691 = arith.cmpf oge, %1689, %1690 : vector<8x128xf32>
    %cst_568 = arith.constant 9.99999974E-6 : f32
    %1692 = vector.broadcast %cst_568 : f32 to vector<8x128xf32>
    %1693 = arith.mulf %1692, %1689 : vector<8x128xf32>
    %1694 = arith.select %1691, %1689, %1693 : vector<8x128xi1>, vector<8x128xf32>
    %1695 = math.absf %1694 : vector<8x128xf32>
    %cst_569 = arith.constant 0.000000e+00 : f32
    %1696 = vector.broadcast %cst_569 : f32 to vector<8x128xf32>
    %1697 = arith.addf %1696, %1681 : vector<8x128xf32>
    %1698 = arith.addf %1697, %1695 : vector<8x128xf32>
    %1699 = tpu.reciprocal %1698 : vector<8x128xf32> -> vector<8x128xf32>
    %1700 = arith.mulf %1681, %1699 : vector<8x128xf32>
    %c8_570 = arith.constant 8 : index
    %c0_571 = arith.constant 0 : index
    %c0_572 = arith.constant 0 : index
    %1701 = vector.load %arg5[%c8_570, %c0_571, %c0_572] : memref<16x8x128xf32, #tpu.memory_space<vmem>>, vector<1x8x128xf32>
    %1702 = vector.shape_cast %1701 : vector<1x8x128xf32> to vector<8x128xf32>
    %1703 = vector.shape_cast %1700 : vector<8x128xf32> to vector<1x8x128xf32>
    tpu.vector_store %arg5[%c8_570, %c0_571, %c0_572], %1703 {strides = array<i32>} : memref<16x8x128xf32, #tpu.memory_space<vmem>>, vector<1x8x128xf32>,
    %1704 = arith.mulf %1695, %1699 : vector<8x128xf32>
    %c9_573 = arith.constant 9 : index
    %c0_574 = arith.constant 0 : index
    %c0_575 = arith.constant 0 : index
    %1705 = vector.load %arg5[%c9_573, %c0_574, %c0_575] : memref<16x8x128xf32, #tpu.memory_space<vmem>>, vector<1x8x128xf32>
    %1706 = vector.shape_cast %1705 : vector<1x8x128xf32> to vector<8x128xf32>
    %1707 = vector.shape_cast %1704 : vector<8x128xf32> to vector<1x8x128xf32>
    tpu.vector_store %arg5[%c9_573, %c0_574, %c0_575], %1707 {strides = array<i32>} : memref<16x8x128xf32, #tpu.memory_space<vmem>>, vector<1x8x128xf32>,
    %c10_576 = arith.constant 10 : index
    %c0_577 = arith.constant 0 : index
    %c0_578 = arith.constant 0 : index
    %1708 = vector.load %arg1[%c10_576, %c0_577, %c0_578] : memref<16x8x128xf32, #tpu.memory_space<vmem>>, vector<1x8x128xf32>
    %1709 = vector.shape_cast %1708 : vector<1x8x128xf32> to vector<8x128xf32>
    %c11_579 = arith.constant 11 : index
    %c0_580 = arith.constant 0 : index
    %c0_581 = arith.constant 0 : index
    %1710 = vector.load %arg1[%c11_579, %c0_580, %c0_581] : memref<16x8x128xf32, #tpu.memory_space<vmem>>, vector<1x8x128xf32>
    %1711 = vector.shape_cast %1710 : vector<1x8x128xf32> to vector<8x128xf32>
    %c8_582 = arith.constant 8 : index
    %c0_583 = arith.constant 0 : index
    %c0_584 = arith.constant 0 : index
    %1712 = vector.load %arg6[%c8_582, %c0_583, %c0_584] : memref<14x8x128xf32, #tpu.memory_space<vmem>>, vector<1x8x128xf32>
    %1713 = vector.shape_cast %1712 : vector<1x8x128xf32> to vector<8x128xf32>
    %c9_585 = arith.constant 9 : index
    %c0_586 = arith.constant 0 : index
    %c0_587 = arith.constant 0 : index
    %1714 = vector.load %arg6[%c9_585, %c0_586, %c0_587] : memref<14x8x128xf32, #tpu.memory_space<vmem>>, vector<1x8x128xf32>
    %1715 = vector.shape_cast %1714 : vector<1x8x128xf32> to vector<8x128xf32>
    %c10_588 = arith.constant 10 : index
    %c0_589 = arith.constant 0 : index
    %c0_590 = arith.constant 0 : index
    %1716 = vector.load %arg7[%c10_588, %c0_589, %c0_590] : memref<14x8x128xf32, #tpu.memory_space<vmem>>, vector<1x8x128xf32>
    %1717 = vector.shape_cast %1716 : vector<1x8x128xf32> to vector<8x128xf32>
    %c11_591 = arith.constant 11 : index
    %c0_592 = arith.constant 0 : index
    %c0_593 = arith.constant 0 : index
    %1718 = vector.load %arg7[%c11_591, %c0_592, %c0_593] : memref<14x8x128xf32, #tpu.memory_space<vmem>>, vector<1x8x128xf32>
    %1719 = vector.shape_cast %1718 : vector<1x8x128xf32> to vector<8x128xf32>
    %c80 = arith.constant 80 : index
    %1720 = memref.load %arg3[%c80] : memref<128xf32, #tpu.memory_space<smem>>
    %1721 = vector.broadcast %1720 : f32 to vector<8x128xf32>
    %1722 = arith.mulf %1713, %1721 : vector<8x128xf32>
    %1723 = arith.mulf %1722, %1717 : vector<8x128xf32>
    %cst_594 = arith.constant 0.000000e+00 : f32
    %1724 = vector.broadcast %cst_594 : f32 to vector<8x128xf32>
    %1725 = arith.addf %1724, %1723 : vector<8x128xf32>
    %c84 = arith.constant 84 : index
    %1726 = memref.load %arg3[%c84] : memref<128xf32, #tpu.memory_space<smem>>
    %1727 = vector.broadcast %1726 : f32 to vector<8x128xf32>
    %1728 = arith.mulf %1713, %1727 : vector<8x128xf32>
    %1729 = arith.mulf %1728, %1719 : vector<8x128xf32>
    %1730 = arith.addf %1725, %1729 : vector<8x128xf32>
    %c88 = arith.constant 88 : index
    %1731 = memref.load %arg3[%c88] : memref<128xf32, #tpu.memory_space<smem>>
    %1732 = vector.broadcast %1731 : f32 to vector<8x128xf32>
    %1733 = arith.mulf %1715, %1732 : vector<8x128xf32>
    %1734 = arith.mulf %1733, %1717 : vector<8x128xf32>
    %1735 = arith.addf %1730, %1734 : vector<8x128xf32>
    %c92 = arith.constant 92 : index
    %1736 = memref.load %arg3[%c92] : memref<128xf32, #tpu.memory_space<smem>>
    %1737 = vector.broadcast %1736 : f32 to vector<8x128xf32>
    %1738 = arith.mulf %1715, %1737 : vector<8x128xf32>
    %1739 = arith.mulf %1738, %1719 : vector<8x128xf32>
    %1740 = arith.addf %1735, %1739 : vector<8x128xf32>
    %c81 = arith.constant 81 : index
    %1741 = memref.load %arg3[%c81] : memref<128xf32, #tpu.memory_space<smem>>
    %1742 = vector.broadcast %1741 : f32 to vector<8x128xf32>
    %1743 = arith.mulf %1713, %1742 : vector<8x128xf32>
    %1744 = arith.mulf %1743, %1717 : vector<8x128xf32>
    %cst_595 = arith.constant 0.000000e+00 : f32
    %1745 = vector.broadcast %cst_595 : f32 to vector<8x128xf32>
    %1746 = arith.addf %1745, %1744 : vector<8x128xf32>
    %c85 = arith.constant 85 : index
    %1747 = memref.load %arg3[%c85] : memref<128xf32, #tpu.memory_space<smem>>
    %1748 = vector.broadcast %1747 : f32 to vector<8x128xf32>
    %1749 = arith.mulf %1713, %1748 : vector<8x128xf32>
    %1750 = arith.mulf %1749, %1719 : vector<8x128xf32>
    %1751 = arith.addf %1746, %1750 : vector<8x128xf32>
    %c89 = arith.constant 89 : index
    %1752 = memref.load %arg3[%c89] : memref<128xf32, #tpu.memory_space<smem>>
    %1753 = vector.broadcast %1752 : f32 to vector<8x128xf32>
    %1754 = arith.mulf %1715, %1753 : vector<8x128xf32>
    %1755 = arith.mulf %1754, %1717 : vector<8x128xf32>
    %1756 = arith.addf %1751, %1755 : vector<8x128xf32>
    %c93 = arith.constant 93 : index
    %1757 = memref.load %arg3[%c93] : memref<128xf32, #tpu.memory_space<smem>>
    %1758 = vector.broadcast %1757 : f32 to vector<8x128xf32>
    %1759 = arith.mulf %1715, %1758 : vector<8x128xf32>
    %1760 = arith.mulf %1759, %1719 : vector<8x128xf32>
    %1761 = arith.addf %1756, %1760 : vector<8x128xf32>
    %c82 = arith.constant 82 : index
    %1762 = memref.load %arg3[%c82] : memref<128xf32, #tpu.memory_space<smem>>
    %1763 = vector.broadcast %1762 : f32 to vector<8x128xf32>
    %1764 = arith.mulf %1713, %1763 : vector<8x128xf32>
    %1765 = arith.mulf %1764, %1717 : vector<8x128xf32>
    %cst_596 = arith.constant 0.000000e+00 : f32
    %1766 = vector.broadcast %cst_596 : f32 to vector<8x128xf32>
    %1767 = arith.addf %1766, %1765 : vector<8x128xf32>
    %c86 = arith.constant 86 : index
    %1768 = memref.load %arg3[%c86] : memref<128xf32, #tpu.memory_space<smem>>
    %1769 = vector.broadcast %1768 : f32 to vector<8x128xf32>
    %1770 = arith.mulf %1713, %1769 : vector<8x128xf32>
    %1771 = arith.mulf %1770, %1719 : vector<8x128xf32>
    %1772 = arith.addf %1767, %1771 : vector<8x128xf32>
    %c90 = arith.constant 90 : index
    %1773 = memref.load %arg3[%c90] : memref<128xf32, #tpu.memory_space<smem>>
    %1774 = vector.broadcast %1773 : f32 to vector<8x128xf32>
    %1775 = arith.mulf %1715, %1774 : vector<8x128xf32>
    %1776 = arith.mulf %1775, %1717 : vector<8x128xf32>
    %1777 = arith.addf %1772, %1776 : vector<8x128xf32>
    %c94 = arith.constant 94 : index
    %1778 = memref.load %arg3[%c94] : memref<128xf32, #tpu.memory_space<smem>>
    %1779 = vector.broadcast %1778 : f32 to vector<8x128xf32>
    %1780 = arith.mulf %1715, %1779 : vector<8x128xf32>
    %1781 = arith.mulf %1780, %1719 : vector<8x128xf32>
    %1782 = arith.addf %1777, %1781 : vector<8x128xf32>
    %c83 = arith.constant 83 : index
    %1783 = memref.load %arg3[%c83] : memref<128xf32, #tpu.memory_space<smem>>
    %1784 = vector.broadcast %1783 : f32 to vector<8x128xf32>
    %1785 = arith.mulf %1713, %1784 : vector<8x128xf32>
    %1786 = arith.mulf %1785, %1717 : vector<8x128xf32>
    %cst_597 = arith.constant 0.000000e+00 : f32
    %1787 = vector.broadcast %cst_597 : f32 to vector<8x128xf32>
    %1788 = arith.addf %1787, %1786 : vector<8x128xf32>
    %c87 = arith.constant 87 : index
    %1789 = memref.load %arg3[%c87] : memref<128xf32, #tpu.memory_space<smem>>
    %1790 = vector.broadcast %1789 : f32 to vector<8x128xf32>
    %1791 = arith.mulf %1713, %1790 : vector<8x128xf32>
    %1792 = arith.mulf %1791, %1719 : vector<8x128xf32>
    %1793 = arith.addf %1788, %1792 : vector<8x128xf32>
    %c91 = arith.constant 91 : index
    %1794 = memref.load %arg3[%c91] : memref<128xf32, #tpu.memory_space<smem>>
    %1795 = vector.broadcast %1794 : f32 to vector<8x128xf32>
    %1796 = arith.mulf %1715, %1795 : vector<8x128xf32>
    %1797 = arith.mulf %1796, %1717 : vector<8x128xf32>
    %1798 = arith.addf %1793, %1797 : vector<8x128xf32>
    %c95 = arith.constant 95 : index
    %1799 = memref.load %arg3[%c95] : memref<128xf32, #tpu.memory_space<smem>>
    %1800 = vector.broadcast %1799 : f32 to vector<8x128xf32>
    %1801 = arith.mulf %1715, %1800 : vector<8x128xf32>
    %1802 = arith.mulf %1801, %1719 : vector<8x128xf32>
    %1803 = arith.addf %1798, %1802 : vector<8x128xf32>
    %1804 = arith.mulf %1740, %1740 : vector<8x128xf32>
    %cst_598 = arith.constant 0.000000e+00 : f32
    %1805 = vector.broadcast %cst_598 : f32 to vector<8x128xf32>
    %1806 = arith.addf %1805, %1804 : vector<8x128xf32>
    %1807 = arith.mulf %1761, %1761 : vector<8x128xf32>
    %1808 = arith.addf %1806, %1807 : vector<8x128xf32>
    %1809 = arith.mulf %1782, %1782 : vector<8x128xf32>
    %1810 = arith.addf %1808, %1809 : vector<8x128xf32>
    %1811 = arith.mulf %1803, %1803 : vector<8x128xf32>
    %1812 = arith.addf %1810, %1811 : vector<8x128xf32>
    %1813 = math.sqrt %1812 : vector<8x128xf32>
    %cst_599 = arith.constant 9.99999997E-7 : f32
    %1814 = vector.broadcast %cst_599 : f32 to vector<8x128xf32>
    %1815 = arith.addf %1813, %1814 : vector<8x128xf32>
    %1816 = tpu.reciprocal %1815 : vector<8x128xf32> -> vector<8x128xf32>
    %1817 = vector.broadcast %0 : f32 to vector<8x128xf32>
    %1818 = arith.mulf %1817, %1816 : vector<8x128xf32>
    %cst_600 = arith.constant 0x7F800000 : f32
    %1819 = vector.broadcast %cst_600 : f32 to vector<8x128xf32>
    %1820 = arith.cmpf olt, %1815, %1819 : vector<8x128xf32>
    %1821 = arith.mulf %1740, %1709 : vector<8x128xf32>
    %cst_601 = arith.constant 0.000000e+00 : f32
    %1822 = vector.broadcast %cst_601 : f32 to vector<8x128xf32>
    %1823 = arith.addf %1822, %1821 : vector<8x128xf32>
    %1824 = arith.mulf %1761, %1711 : vector<8x128xf32>
    %1825 = arith.addf %1823, %1824 : vector<8x128xf32>
    %1826 = arith.mulf %1825, %1818 : vector<8x128xf32>
    %cst_602 = arith.constant 0.000000e+00 : f32
    %1827 = vector.broadcast %cst_602 : f32 to vector<8x128xf32>
    %1828 = arith.select %1820, %1826, %1827 : vector<8x128xi1>, vector<8x128xf32>
    %cst_603 = arith.constant 0.000000e+00 : f32
    %1829 = vector.broadcast %cst_603 : f32 to vector<8x128xf32>
    %1830 = arith.cmpf oge, %1828, %1829 : vector<8x128xf32>
    %cst_604 = arith.constant 9.99999974E-6 : f32
    %1831 = vector.broadcast %cst_604 : f32 to vector<8x128xf32>
    %1832 = arith.mulf %1831, %1828 : vector<8x128xf32>
    %1833 = arith.select %1830, %1828, %1832 : vector<8x128xi1>, vector<8x128xf32>
    %1834 = math.absf %1833 : vector<8x128xf32>
    %1835 = arith.mulf %1782, %1709 : vector<8x128xf32>
    %cst_605 = arith.constant 0.000000e+00 : f32
    %1836 = vector.broadcast %cst_605 : f32 to vector<8x128xf32>
    %1837 = arith.addf %1836, %1835 : vector<8x128xf32>
    %1838 = arith.mulf %1803, %1711 : vector<8x128xf32>
    %1839 = arith.addf %1837, %1838 : vector<8x128xf32>
    %1840 = arith.mulf %1839, %1818 : vector<8x128xf32>
    %cst_606 = arith.constant 0.000000e+00 : f32
    %1841 = vector.broadcast %cst_606 : f32 to vector<8x128xf32>
    %1842 = arith.select %1820, %1840, %1841 : vector<8x128xi1>, vector<8x128xf32>
    %cst_607 = arith.constant 0.000000e+00 : f32
    %1843 = vector.broadcast %cst_607 : f32 to vector<8x128xf32>
    %1844 = arith.cmpf oge, %1842, %1843 : vector<8x128xf32>
    %cst_608 = arith.constant 9.99999974E-6 : f32
    %1845 = vector.broadcast %cst_608 : f32 to vector<8x128xf32>
    %1846 = arith.mulf %1845, %1842 : vector<8x128xf32>
    %1847 = arith.select %1844, %1842, %1846 : vector<8x128xi1>, vector<8x128xf32>
    %1848 = math.absf %1847 : vector<8x128xf32>
    %cst_609 = arith.constant 0.000000e+00 : f32
    %1849 = vector.broadcast %cst_609 : f32 to vector<8x128xf32>
    %1850 = arith.addf %1849, %1834 : vector<8x128xf32>
    %1851 = arith.addf %1850, %1848 : vector<8x128xf32>
    %1852 = tpu.reciprocal %1851 : vector<8x128xf32> -> vector<8x128xf32>
    %1853 = arith.mulf %1834, %1852 : vector<8x128xf32>
    %c10_610 = arith.constant 10 : index
    %c0_611 = arith.constant 0 : index
    %c0_612 = arith.constant 0 : index
    %1854 = vector.load %arg5[%c10_610, %c0_611, %c0_612] : memref<16x8x128xf32, #tpu.memory_space<vmem>>, vector<1x8x128xf32>
    %1855 = vector.shape_cast %1854 : vector<1x8x128xf32> to vector<8x128xf32>
    %1856 = vector.shape_cast %1853 : vector<8x128xf32> to vector<1x8x128xf32>
    tpu.vector_store %arg5[%c10_610, %c0_611, %c0_612], %1856 {strides = array<i32>} : memref<16x8x128xf32, #tpu.memory_space<vmem>>, vector<1x8x128xf32>,
    %1857 = arith.mulf %1848, %1852 : vector<8x128xf32>
    %c11_613 = arith.constant 11 : index
    %c0_614 = arith.constant 0 : index
    %c0_615 = arith.constant 0 : index
    %1858 = vector.load %arg5[%c11_613, %c0_614, %c0_615] : memref<16x8x128xf32, #tpu.memory_space<vmem>>, vector<1x8x128xf32>
    %1859 = vector.shape_cast %1858 : vector<1x8x128xf32> to vector<8x128xf32>
    %1860 = vector.shape_cast %1857 : vector<8x128xf32> to vector<1x8x128xf32>
    tpu.vector_store %arg5[%c11_613, %c0_614, %c0_615], %1860 {strides = array<i32>} : memref<16x8x128xf32, #tpu.memory_space<vmem>>, vector<1x8x128xf32>,
    %c12_616 = arith.constant 12 : index
    %c0_617 = arith.constant 0 : index
    %c0_618 = arith.constant 0 : index
    %1861 = vector.load %arg1[%c12_616, %c0_617, %c0_618] : memref<16x8x128xf32, #tpu.memory_space<vmem>>, vector<1x8x128xf32>
    %1862 = vector.shape_cast %1861 : vector<1x8x128xf32> to vector<8x128xf32>
    %c13_619 = arith.constant 13 : index
    %c0_620 = arith.constant 0 : index
    %c0_621 = arith.constant 0 : index
    %1863 = vector.load %arg1[%c13_619, %c0_620, %c0_621] : memref<16x8x128xf32, #tpu.memory_space<vmem>>, vector<1x8x128xf32>
    %1864 = vector.shape_cast %1863 : vector<1x8x128xf32> to vector<8x128xf32>
    %c10_622 = arith.constant 10 : index
    %c0_623 = arith.constant 0 : index
    %c0_624 = arith.constant 0 : index
    %1865 = vector.load %arg6[%c10_622, %c0_623, %c0_624] : memref<14x8x128xf32, #tpu.memory_space<vmem>>, vector<1x8x128xf32>
    %1866 = vector.shape_cast %1865 : vector<1x8x128xf32> to vector<8x128xf32>
    %c11_625 = arith.constant 11 : index
    %c0_626 = arith.constant 0 : index
    %c0_627 = arith.constant 0 : index
    %1867 = vector.load %arg6[%c11_625, %c0_626, %c0_627] : memref<14x8x128xf32, #tpu.memory_space<vmem>>, vector<1x8x128xf32>
    %1868 = vector.shape_cast %1867 : vector<1x8x128xf32> to vector<8x128xf32>
    %c12_628 = arith.constant 12 : index
    %c0_629 = arith.constant 0 : index
    %c0_630 = arith.constant 0 : index
    %1869 = vector.load %arg7[%c12_628, %c0_629, %c0_630] : memref<14x8x128xf32, #tpu.memory_space<vmem>>, vector<1x8x128xf32>
    %1870 = vector.shape_cast %1869 : vector<1x8x128xf32> to vector<8x128xf32>
    %c13_631 = arith.constant 13 : index
    %c0_632 = arith.constant 0 : index
    %c0_633 = arith.constant 0 : index
    %1871 = vector.load %arg7[%c13_631, %c0_632, %c0_633] : memref<14x8x128xf32, #tpu.memory_space<vmem>>, vector<1x8x128xf32>
    %1872 = vector.shape_cast %1871 : vector<1x8x128xf32> to vector<8x128xf32>
    %c96 = arith.constant 96 : index
    %1873 = memref.load %arg3[%c96] : memref<128xf32, #tpu.memory_space<smem>>
    %1874 = vector.broadcast %1873 : f32 to vector<8x128xf32>
    %1875 = arith.mulf %1866, %1874 : vector<8x128xf32>
    %1876 = arith.mulf %1875, %1870 : vector<8x128xf32>
    %cst_634 = arith.constant 0.000000e+00 : f32
    %1877 = vector.broadcast %cst_634 : f32 to vector<8x128xf32>
    %1878 = arith.addf %1877, %1876 : vector<8x128xf32>
    %c100 = arith.constant 100 : index
    %1879 = memref.load %arg3[%c100] : memref<128xf32, #tpu.memory_space<smem>>
    %1880 = vector.broadcast %1879 : f32 to vector<8x128xf32>
    %1881 = arith.mulf %1866, %1880 : vector<8x128xf32>
    %1882 = arith.mulf %1881, %1872 : vector<8x128xf32>
    %1883 = arith.addf %1878, %1882 : vector<8x128xf32>
    %c104 = arith.constant 104 : index
    %1884 = memref.load %arg3[%c104] : memref<128xf32, #tpu.memory_space<smem>>
    %1885 = vector.broadcast %1884 : f32 to vector<8x128xf32>
    %1886 = arith.mulf %1868, %1885 : vector<8x128xf32>
    %1887 = arith.mulf %1886, %1870 : vector<8x128xf32>
    %1888 = arith.addf %1883, %1887 : vector<8x128xf32>
    %c108 = arith.constant 108 : index
    %1889 = memref.load %arg3[%c108] : memref<128xf32, #tpu.memory_space<smem>>
    %1890 = vector.broadcast %1889 : f32 to vector<8x128xf32>
    %1891 = arith.mulf %1868, %1890 : vector<8x128xf32>
    %1892 = arith.mulf %1891, %1872 : vector<8x128xf32>
    %1893 = arith.addf %1888, %1892 : vector<8x128xf32>
    %c97 = arith.constant 97 : index
    %1894 = memref.load %arg3[%c97] : memref<128xf32, #tpu.memory_space<smem>>
    %1895 = vector.broadcast %1894 : f32 to vector<8x128xf32>
    %1896 = arith.mulf %1866, %1895 : vector<8x128xf32>
    %1897 = arith.mulf %1896, %1870 : vector<8x128xf32>
    %cst_635 = arith.constant 0.000000e+00 : f32
    %1898 = vector.broadcast %cst_635 : f32 to vector<8x128xf32>
    %1899 = arith.addf %1898, %1897 : vector<8x128xf32>
    %c101 = arith.constant 101 : index
    %1900 = memref.load %arg3[%c101] : memref<128xf32, #tpu.memory_space<smem>>
    %1901 = vector.broadcast %1900 : f32 to vector<8x128xf32>
    %1902 = arith.mulf %1866, %1901 : vector<8x128xf32>
    %1903 = arith.mulf %1902, %1872 : vector<8x128xf32>
    %1904 = arith.addf %1899, %1903 : vector<8x128xf32>
    %c105 = arith.constant 105 : index
    %1905 = memref.load %arg3[%c105] : memref<128xf32, #tpu.memory_space<smem>>
    %1906 = vector.broadcast %1905 : f32 to vector<8x128xf32>
    %1907 = arith.mulf %1868, %1906 : vector<8x128xf32>
    %1908 = arith.mulf %1907, %1870 : vector<8x128xf32>
    %1909 = arith.addf %1904, %1908 : vector<8x128xf32>
    %c109 = arith.constant 109 : index
    %1910 = memref.load %arg3[%c109] : memref<128xf32, #tpu.memory_space<smem>>
    %1911 = vector.broadcast %1910 : f32 to vector<8x128xf32>
    %1912 = arith.mulf %1868, %1911 : vector<8x128xf32>
    %1913 = arith.mulf %1912, %1872 : vector<8x128xf32>
    %1914 = arith.addf %1909, %1913 : vector<8x128xf32>
    %c98 = arith.constant 98 : index
    %1915 = memref.load %arg3[%c98] : memref<128xf32, #tpu.memory_space<smem>>
    %1916 = vector.broadcast %1915 : f32 to vector<8x128xf32>
    %1917 = arith.mulf %1866, %1916 : vector<8x128xf32>
    %1918 = arith.mulf %1917, %1870 : vector<8x128xf32>
    %cst_636 = arith.constant 0.000000e+00 : f32
    %1919 = vector.broadcast %cst_636 : f32 to vector<8x128xf32>
    %1920 = arith.addf %1919, %1918 : vector<8x128xf32>
    %c102 = arith.constant 102 : index
    %1921 = memref.load %arg3[%c102] : memref<128xf32, #tpu.memory_space<smem>>
    %1922 = vector.broadcast %1921 : f32 to vector<8x128xf32>
    %1923 = arith.mulf %1866, %1922 : vector<8x128xf32>
    %1924 = arith.mulf %1923, %1872 : vector<8x128xf32>
    %1925 = arith.addf %1920, %1924 : vector<8x128xf32>
    %c106 = arith.constant 106 : index
    %1926 = memref.load %arg3[%c106] : memref<128xf32, #tpu.memory_space<smem>>
    %1927 = vector.broadcast %1926 : f32 to vector<8x128xf32>
    %1928 = arith.mulf %1868, %1927 : vector<8x128xf32>
    %1929 = arith.mulf %1928, %1870 : vector<8x128xf32>
    %1930 = arith.addf %1925, %1929 : vector<8x128xf32>
    %c110 = arith.constant 110 : index
    %1931 = memref.load %arg3[%c110] : memref<128xf32, #tpu.memory_space<smem>>
    %1932 = vector.broadcast %1931 : f32 to vector<8x128xf32>
    %1933 = arith.mulf %1868, %1932 : vector<8x128xf32>
    %1934 = arith.mulf %1933, %1872 : vector<8x128xf32>
    %1935 = arith.addf %1930, %1934 : vector<8x128xf32>
    %c99 = arith.constant 99 : index
    %1936 = memref.load %arg3[%c99] : memref<128xf32, #tpu.memory_space<smem>>
    %1937 = vector.broadcast %1936 : f32 to vector<8x128xf32>
    %1938 = arith.mulf %1866, %1937 : vector<8x128xf32>
    %1939 = arith.mulf %1938, %1870 : vector<8x128xf32>
    %cst_637 = arith.constant 0.000000e+00 : f32
    %1940 = vector.broadcast %cst_637 : f32 to vector<8x128xf32>
    %1941 = arith.addf %1940, %1939 : vector<8x128xf32>
    %c103 = arith.constant 103 : index
    %1942 = memref.load %arg3[%c103] : memref<128xf32, #tpu.memory_space<smem>>
    %1943 = vector.broadcast %1942 : f32 to vector<8x128xf32>
    %1944 = arith.mulf %1866, %1943 : vector<8x128xf32>
    %1945 = arith.mulf %1944, %1872 : vector<8x128xf32>
    %1946 = arith.addf %1941, %1945 : vector<8x128xf32>
    %c107 = arith.constant 107 : index
    %1947 = memref.load %arg3[%c107] : memref<128xf32, #tpu.memory_space<smem>>
    %1948 = vector.broadcast %1947 : f32 to vector<8x128xf32>
    %1949 = arith.mulf %1868, %1948 : vector<8x128xf32>
    %1950 = arith.mulf %1949, %1870 : vector<8x128xf32>
    %1951 = arith.addf %1946, %1950 : vector<8x128xf32>
    %c111 = arith.constant 111 : index
    %1952 = memref.load %arg3[%c111] : memref<128xf32, #tpu.memory_space<smem>>
    %1953 = vector.broadcast %1952 : f32 to vector<8x128xf32>
    %1954 = arith.mulf %1868, %1953 : vector<8x128xf32>
    %1955 = arith.mulf %1954, %1872 : vector<8x128xf32>
    %1956 = arith.addf %1951, %1955 : vector<8x128xf32>
    %1957 = arith.mulf %1893, %1893 : vector<8x128xf32>
    %cst_638 = arith.constant 0.000000e+00 : f32
    %1958 = vector.broadcast %cst_638 : f32 to vector<8x128xf32>
    %1959 = arith.addf %1958, %1957 : vector<8x128xf32>
    %1960 = arith.mulf %1914, %1914 : vector<8x128xf32>
    %1961 = arith.addf %1959, %1960 : vector<8x128xf32>
    %1962 = arith.mulf %1935, %1935 : vector<8x128xf32>
    %1963 = arith.addf %1961, %1962 : vector<8x128xf32>
    %1964 = arith.mulf %1956, %1956 : vector<8x128xf32>
    %1965 = arith.addf %1963, %1964 : vector<8x128xf32>
    %1966 = math.sqrt %1965 : vector<8x128xf32>
    %cst_639 = arith.constant 9.99999997E-7 : f32
    %1967 = vector.broadcast %cst_639 : f32 to vector<8x128xf32>
    %1968 = arith.addf %1966, %1967 : vector<8x128xf32>
    %1969 = tpu.reciprocal %1968 : vector<8x128xf32> -> vector<8x128xf32>
    %1970 = vector.broadcast %0 : f32 to vector<8x128xf32>
    %1971 = arith.mulf %1970, %1969 : vector<8x128xf32>
    %cst_640 = arith.constant 0x7F800000 : f32
    %1972 = vector.broadcast %cst_640 : f32 to vector<8x128xf32>
    %1973 = arith.cmpf olt, %1968, %1972 : vector<8x128xf32>
    %1974 = arith.mulf %1893, %1862 : vector<8x128xf32>
    %cst_641 = arith.constant 0.000000e+00 : f32
    %1975 = vector.broadcast %cst_641 : f32 to vector<8x128xf32>
    %1976 = arith.addf %1975, %1974 : vector<8x128xf32>
    %1977 = arith.mulf %1914, %1864 : vector<8x128xf32>
    %1978 = arith.addf %1976, %1977 : vector<8x128xf32>
    %1979 = arith.mulf %1978, %1971 : vector<8x128xf32>
    %cst_642 = arith.constant 0.000000e+00 : f32
    %1980 = vector.broadcast %cst_642 : f32 to vector<8x128xf32>
    %1981 = arith.select %1973, %1979, %1980 : vector<8x128xi1>, vector<8x128xf32>
    %cst_643 = arith.constant 0.000000e+00 : f32
    %1982 = vector.broadcast %cst_643 : f32 to vector<8x128xf32>
    %1983 = arith.cmpf oge, %1981, %1982 : vector<8x128xf32>
    %cst_644 = arith.constant 9.99999974E-6 : f32
    %1984 = vector.broadcast %cst_644 : f32 to vector<8x128xf32>
    %1985 = arith.mulf %1984, %1981 : vector<8x128xf32>
    %1986 = arith.select %1983, %1981, %1985 : vector<8x128xi1>, vector<8x128xf32>
    %1987 = math.absf %1986 : vector<8x128xf32>
    %1988 = arith.mulf %1935, %1862 : vector<8x128xf32>
    %cst_645 = arith.constant 0.000000e+00 : f32
    %1989 = vector.broadcast %cst_645 : f32 to vector<8x128xf32>
    %1990 = arith.addf %1989, %1988 : vector<8x128xf32>
    %1991 = arith.mulf %1956, %1864 : vector<8x128xf32>
    %1992 = arith.addf %1990, %1991 : vector<8x128xf32>
    %1993 = arith.mulf %1992, %1971 : vector<8x128xf32>
    %cst_646 = arith.constant 0.000000e+00 : f32
    %1994 = vector.broadcast %cst_646 : f32 to vector<8x128xf32>
    %1995 = arith.select %1973, %1993, %1994 : vector<8x128xi1>, vector<8x128xf32>
    %cst_647 = arith.constant 0.000000e+00 : f32
    %1996 = vector.broadcast %cst_647 : f32 to vector<8x128xf32>
    %1997 = arith.cmpf oge, %1995, %1996 : vector<8x128xf32>
    %cst_648 = arith.constant 9.99999974E-6 : f32
    %1998 = vector.broadcast %cst_648 : f32 to vector<8x128xf32>
    %1999 = arith.mulf %1998, %1995 : vector<8x128xf32>
    %2000 = arith.select %1997, %1995, %1999 : vector<8x128xi1>, vector<8x128xf32>
    %2001 = math.absf %2000 : vector<8x128xf32>
    %cst_649 = arith.constant 0.000000e+00 : f32
    %2002 = vector.broadcast %cst_649 : f32 to vector<8x128xf32>
    %2003 = arith.addf %2002, %1987 : vector<8x128xf32>
    %2004 = arith.addf %2003, %2001 : vector<8x128xf32>
    %2005 = tpu.reciprocal %2004 : vector<8x128xf32> -> vector<8x128xf32>
    %2006 = arith.mulf %1987, %2005 : vector<8x128xf32>
    %c12_650 = arith.constant 12 : index
    %c0_651 = arith.constant 0 : index
    %c0_652 = arith.constant 0 : index
    %2007 = vector.load %arg5[%c12_650, %c0_651, %c0_652] : memref<16x8x128xf32, #tpu.memory_space<vmem>>, vector<1x8x128xf32>
    %2008 = vector.shape_cast %2007 : vector<1x8x128xf32> to vector<8x128xf32>
    %2009 = vector.shape_cast %2006 : vector<8x128xf32> to vector<1x8x128xf32>
    tpu.vector_store %arg5[%c12_650, %c0_651, %c0_652], %2009 {strides = array<i32>} : memref<16x8x128xf32, #tpu.memory_space<vmem>>, vector<1x8x128xf32>,
    %2010 = arith.mulf %2001, %2005 : vector<8x128xf32>
    %c13_653 = arith.constant 13 : index
    %c0_654 = arith.constant 0 : index
    %c0_655 = arith.constant 0 : index
    %2011 = vector.load %arg5[%c13_653, %c0_654, %c0_655] : memref<16x8x128xf32, #tpu.memory_space<vmem>>, vector<1x8x128xf32>
    %2012 = vector.shape_cast %2011 : vector<1x8x128xf32> to vector<8x128xf32>
    %2013 = vector.shape_cast %2010 : vector<8x128xf32> to vector<1x8x128xf32>
    tpu.vector_store %arg5[%c13_653, %c0_654, %c0_655], %2013 {strides = array<i32>} : memref<16x8x128xf32, #tpu.memory_space<vmem>>, vector<1x8x128xf32>,
    %c14_656 = arith.constant 14 : index
    %c0_657 = arith.constant 0 : index
    %c0_658 = arith.constant 0 : index
    %2014 = vector.load %arg1[%c14_656, %c0_657, %c0_658] : memref<16x8x128xf32, #tpu.memory_space<vmem>>, vector<1x8x128xf32>
    %2015 = vector.shape_cast %2014 : vector<1x8x128xf32> to vector<8x128xf32>
    %c15_659 = arith.constant 15 : index
    %c0_660 = arith.constant 0 : index
    %c0_661 = arith.constant 0 : index
    %2016 = vector.load %arg1[%c15_659, %c0_660, %c0_661] : memref<16x8x128xf32, #tpu.memory_space<vmem>>, vector<1x8x128xf32>
    %2017 = vector.shape_cast %2016 : vector<1x8x128xf32> to vector<8x128xf32>
    %c12_662 = arith.constant 12 : index
    %c0_663 = arith.constant 0 : index
    %c0_664 = arith.constant 0 : index
    %2018 = vector.load %arg6[%c12_662, %c0_663, %c0_664] : memref<14x8x128xf32, #tpu.memory_space<vmem>>, vector<1x8x128xf32>
    %2019 = vector.shape_cast %2018 : vector<1x8x128xf32> to vector<8x128xf32>
    %c13_665 = arith.constant 13 : index
    %c0_666 = arith.constant 0 : index
    %c0_667 = arith.constant 0 : index
    %2020 = vector.load %arg6[%c13_665, %c0_666, %c0_667] : memref<14x8x128xf32, #tpu.memory_space<vmem>>, vector<1x8x128xf32>
    %2021 = vector.shape_cast %2020 : vector<1x8x128xf32> to vector<8x128xf32>
    %c112 = arith.constant 112 : index
    %2022 = memref.load %arg3[%c112] : memref<128xf32, #tpu.memory_space<smem>>
    %2023 = vector.broadcast %2022 : f32 to vector<8x128xf32>
    %2024 = arith.mulf %2019, %2023 : vector<8x128xf32>
    %cst_668 = arith.constant 0.000000e+00 : f32
    %2025 = vector.broadcast %cst_668 : f32 to vector<8x128xf32>
    %2026 = arith.addf %2025, %2024 : vector<8x128xf32>
    %c120 = arith.constant 120 : index
    %2027 = memref.load %arg3[%c120] : memref<128xf32, #tpu.memory_space<smem>>
    %2028 = vector.broadcast %2027 : f32 to vector<8x128xf32>
    %2029 = arith.mulf %2021, %2028 : vector<8x128xf32>
    %2030 = arith.addf %2026, %2029 : vector<8x128xf32>
    %c113 = arith.constant 113 : index
    %2031 = memref.load %arg3[%c113] : memref<128xf32, #tpu.memory_space<smem>>
    %2032 = vector.broadcast %2031 : f32 to vector<8x128xf32>
    %2033 = arith.mulf %2019, %2032 : vector<8x128xf32>
    %cst_669 = arith.constant 0.000000e+00 : f32
    %2034 = vector.broadcast %cst_669 : f32 to vector<8x128xf32>
    %2035 = arith.addf %2034, %2033 : vector<8x128xf32>
    %c121 = arith.constant 121 : index
    %2036 = memref.load %arg3[%c121] : memref<128xf32, #tpu.memory_space<smem>>
    %2037 = vector.broadcast %2036 : f32 to vector<8x128xf32>
    %2038 = arith.mulf %2021, %2037 : vector<8x128xf32>
    %2039 = arith.addf %2035, %2038 : vector<8x128xf32>
    %c114 = arith.constant 114 : index
    %2040 = memref.load %arg3[%c114] : memref<128xf32, #tpu.memory_space<smem>>
    %2041 = vector.broadcast %2040 : f32 to vector<8x128xf32>
    %2042 = arith.mulf %2019, %2041 : vector<8x128xf32>
    %cst_670 = arith.constant 0.000000e+00 : f32
    %2043 = vector.broadcast %cst_670 : f32 to vector<8x128xf32>
    %2044 = arith.addf %2043, %2042 : vector<8x128xf32>
    %c122 = arith.constant 122 : index
    %2045 = memref.load %arg3[%c122] : memref<128xf32, #tpu.memory_space<smem>>
    %2046 = vector.broadcast %2045 : f32 to vector<8x128xf32>
    %2047 = arith.mulf %2021, %2046 : vector<8x128xf32>
    %2048 = arith.addf %2044, %2047 : vector<8x128xf32>
    %c115 = arith.constant 115 : index
    %2049 = memref.load %arg3[%c115] : memref<128xf32, #tpu.memory_space<smem>>
    %2050 = vector.broadcast %2049 : f32 to vector<8x128xf32>
    %2051 = arith.mulf %2019, %2050 : vector<8x128xf32>
    %cst_671 = arith.constant 0.000000e+00 : f32
    %2052 = vector.broadcast %cst_671 : f32 to vector<8x128xf32>
    %2053 = arith.addf %2052, %2051 : vector<8x128xf32>
    %c123 = arith.constant 123 : index
    %2054 = memref.load %arg3[%c123] : memref<128xf32, #tpu.memory_space<smem>>
    %2055 = vector.broadcast %2054 : f32 to vector<8x128xf32>
    %2056 = arith.mulf %2021, %2055 : vector<8x128xf32>
    %2057 = arith.addf %2053, %2056 : vector<8x128xf32>
    %2058 = arith.mulf %2030, %2030 : vector<8x128xf32>
    %cst_672 = arith.constant 0.000000e+00 : f32
    %2059 = vector.broadcast %cst_672 : f32 to vector<8x128xf32>
    %2060 = arith.addf %2059, %2058 : vector<8x128xf32>
    %2061 = arith.mulf %2039, %2039 : vector<8x128xf32>
    %2062 = arith.addf %2060, %2061 : vector<8x128xf32>
    %2063 = arith.mulf %2048, %2048 : vector<8x128xf32>
    %2064 = arith.addf %2062, %2063 : vector<8x128xf32>
    %2065 = arith.mulf %2057, %2057 : vector<8x128xf32>
    %2066 = arith.addf %2064, %2065 : vector<8x128xf32>
    %2067 = math.sqrt %2066 : vector<8x128xf32>
    %cst_673 = arith.constant 9.99999997E-7 : f32
    %2068 = vector.broadcast %cst_673 : f32 to vector<8x128xf32>
    %2069 = arith.addf %2067, %2068 : vector<8x128xf32>
    %2070 = tpu.reciprocal %2069 : vector<8x128xf32> -> vector<8x128xf32>
    %2071 = vector.broadcast %0 : f32 to vector<8x128xf32>
    %2072 = arith.mulf %2071, %2070 : vector<8x128xf32>
    %cst_674 = arith.constant 0x7F800000 : f32
    %2073 = vector.broadcast %cst_674 : f32 to vector<8x128xf32>
    %2074 = arith.cmpf olt, %2069, %2073 : vector<8x128xf32>
    %2075 = arith.mulf %2030, %2015 : vector<8x128xf32>
    %cst_675 = arith.constant 0.000000e+00 : f32
    %2076 = vector.broadcast %cst_675 : f32 to vector<8x128xf32>
    %2077 = arith.addf %2076, %2075 : vector<8x128xf32>
    %2078 = arith.mulf %2039, %2017 : vector<8x128xf32>
    %2079 = arith.addf %2077, %2078 : vector<8x128xf32>
    %2080 = arith.mulf %2079, %2072 : vector<8x128xf32>
    %cst_676 = arith.constant 0.000000e+00 : f32
    %2081 = vector.broadcast %cst_676 : f32 to vector<8x128xf32>
    %2082 = arith.select %2074, %2080, %2081 : vector<8x128xi1>, vector<8x128xf32>
    %cst_677 = arith.constant 0.000000e+00 : f32
    %2083 = vector.broadcast %cst_677 : f32 to vector<8x128xf32>
    %2084 = arith.cmpf oge, %2082, %2083 : vector<8x128xf32>
    %cst_678 = arith.constant 9.99999974E-6 : f32
    %2085 = vector.broadcast %cst_678 : f32 to vector<8x128xf32>
    %2086 = arith.mulf %2085, %2082 : vector<8x128xf32>
    %2087 = arith.select %2084, %2082, %2086 : vector<8x128xi1>, vector<8x128xf32>
    %2088 = math.absf %2087 : vector<8x128xf32>
    %2089 = arith.mulf %2048, %2015 : vector<8x128xf32>
    %cst_679 = arith.constant 0.000000e+00 : f32
    %2090 = vector.broadcast %cst_679 : f32 to vector<8x128xf32>
    %2091 = arith.addf %2090, %2089 : vector<8x128xf32>
    %2092 = arith.mulf %2057, %2017 : vector<8x128xf32>
    %2093 = arith.addf %2091, %2092 : vector<8x128xf32>
    %2094 = arith.mulf %2093, %2072 : vector<8x128xf32>
    %cst_680 = arith.constant 0.000000e+00 : f32
    %2095 = vector.broadcast %cst_680 : f32 to vector<8x128xf32>
    %2096 = arith.select %2074, %2094, %2095 : vector<8x128xi1>, vector<8x128xf32>
    %cst_681 = arith.constant 0.000000e+00 : f32
    %2097 = vector.broadcast %cst_681 : f32 to vector<8x128xf32>
    %2098 = arith.cmpf oge, %2096, %2097 : vector<8x128xf32>
    %cst_682 = arith.constant 9.99999974E-6 : f32
    %2099 = vector.broadcast %cst_682 : f32 to vector<8x128xf32>
    %2100 = arith.mulf %2099, %2096 : vector<8x128xf32>
    %2101 = arith.select %2098, %2096, %2100 : vector<8x128xi1>, vector<8x128xf32>
    %2102 = math.absf %2101 : vector<8x128xf32>
    %cst_683 = arith.constant 0.000000e+00 : f32
    %2103 = vector.broadcast %cst_683 : f32 to vector<8x128xf32>
    %2104 = arith.addf %2103, %2088 : vector<8x128xf32>
    %2105 = arith.addf %2104, %2102 : vector<8x128xf32>
    %2106 = tpu.reciprocal %2105 : vector<8x128xf32> -> vector<8x128xf32>
    %2107 = arith.mulf %2088, %2106 : vector<8x128xf32>
    %c14_684 = arith.constant 14 : index
    %c0_685 = arith.constant 0 : index
    %c0_686 = arith.constant 0 : index
    %2108 = vector.load %arg5[%c14_684, %c0_685, %c0_686] : memref<16x8x128xf32, #tpu.memory_space<vmem>>, vector<1x8x128xf32>
    %2109 = vector.shape_cast %2108 : vector<1x8x128xf32> to vector<8x128xf32>
    %2110 = vector.shape_cast %2107 : vector<8x128xf32> to vector<1x8x128xf32>
    tpu.vector_store %arg5[%c14_684, %c0_685, %c0_686], %2110 {strides = array<i32>} : memref<16x8x128xf32, #tpu.memory_space<vmem>>, vector<1x8x128xf32>,
    %2111 = arith.mulf %2102, %2106 : vector<8x128xf32>
    %c15_687 = arith.constant 15 : index
    %c0_688 = arith.constant 0 : index
    %c0_689 = arith.constant 0 : index
    %2112 = vector.load %arg5[%c15_687, %c0_688, %c0_689] : memref<16x8x128xf32, #tpu.memory_space<vmem>>, vector<1x8x128xf32>
    %2113 = vector.shape_cast %2112 : vector<1x8x128xf32> to vector<8x128xf32>
    %2114 = vector.shape_cast %2111 : vector<8x128xf32> to vector<1x8x128xf32>
    tpu.vector_store %arg5[%c15_687, %c0_688, %c0_689], %2114 {strides = array<i32>} : memref<16x8x128xf32, #tpu.memory_space<vmem>>, vector<1x8x128xf32>,
    return
  }
  func.func @transform_0(%arg0: i32) -> (i32, i32, i32) {
    %c0_i32 = arith.constant 0 : i32
    %c0_i32_0 = arith.constant 0 : i32
    %c0_i32_1 = arith.constant 0 : i32
    return %c0_i32, %arg0, %c0_i32_0 : i32, i32, i32
  }
  func.func @transform_1(%arg0: i32) -> i32 {
    %c0_i32 = arith.constant 0 : i32
    %c0_i32_0 = arith.constant 0 : i32
    return %c0_i32 : i32
  }
  func.func @transform_2(%arg0: i32) -> i32 {
    %c0_i32 = arith.constant 0 : i32
    %c0_i32_0 = arith.constant 0 : i32
    return %c0_i32 : i32
  }
  func.func @transform_3(%arg0: i32) -> i32 {
    %c0_i32 = arith.constant 0 : i32
    %c0_i32_0 = arith.constant 0 : i32
    return %c0_i32 : i32
  }
  func.func @transform_4(%arg0: i32) -> (i32, i32, i32) {
    %c0_i32 = arith.constant 0 : i32
    %c0_i32_0 = arith.constant 0 : i32
    %c0_i32_1 = arith.constant 0 : i32
    return %c0_i32, %arg0, %c0_i32_0 : i32, i32, i32
  }
  func.func @transform_5(%arg0: i32) -> (i32, i32, i32) {
    %c0_i32 = arith.constant 0 : i32
    %c0_i32_0 = arith.constant 0 : i32
    %c0_i32_1 = arith.constant 0 : i32
    return %c0_i32, %arg0, %c0_i32_0 : i32, i32, i32
  }
  func.func @transform_6(%arg0: i32) -> (i32, i32, i32) {
    %c0_i32 = arith.constant 0 : i32
    %c0_i32_0 = arith.constant 0 : i32
    %c0_i32_1 = arith.constant 0 : i32
    return %c0_i32, %arg0, %c0_i32_0 : i32, i32, i32
  }
}

</mosaic_0001>

<llo_original>
// kernel: tpu_custom_call.1
$region0: #{tpu_custom_call.1}
  #allocation0 [shape = 'u32[]', space=smem, size = 0x4, offset = 0x4, fixed_abs, tag = 'smem constant byte address 0x4 - core index']
  #allocation1 [shape = 'u32[144,128]{1,0:T(1,128)}', space=vmem, size = 0x12000, scoped, tag = 'internal scratch']
  #allocation2 [shape = 'f32[1]{0:T(128)S(6)}', space=smem, size = 0x200, scoped, tag = 'scoped memory for tpu_custom_call.1']
  %s0 = inlined_call_operand.hbm [shape: f32[16,8,128], index: 0, kind: input, shape index: {}]
  %s1 = inlined_call_operand.vmem [shape: f32[64], index: 1, kind: input, shape index: {}]
  %s2 = inlined_call_operand.vmem [shape: f32[128], index: 2, kind: input, shape index: {}]
  %s3 = inlined_call_operand.<no memory space> [shape: f32[1], index: 3, kind: input, shape index: {}]
  %s4 = inlined_call_operand.hbm [shape: f32[16,8,128], index: 4, kind: output, shape index: {0}]
  %s5 = inlined_call_operand.hbm [shape: f32[14,8,128], index: 5, kind: output, shape index: {1}]
  %s6 = inlined_call_operand.hbm [shape: f32[14,8,128], index: 6, kind: output, shape index: {2}]
  %7 = xla_tuple %s4, %s5, %s6
  %s8 = sld [smem:[#allocation0]]
  $region54: #{tpu_custom_call.1} parent=0
    _
  %s10 = ssub.s32 1, %s8
  %s11 = scalar_select 0, %s10, %s8
  %12 = sst [smem:[#allocation2]] %s3
  $region1: #{tpu_custom_call.1} parent=0
    #allocation3 [shape = 'u8[65536]{0}', space=vmem, size = 0x10000, scoped, tag = 'input window, operand 0, single buffered']
    #allocation4 [shape = 's32[1]{0}', space=sflag, size = 0x4, scoped, tag = 'scoped memory for tpu_custom_call.1']
    #allocation5 [shape = 's32[1]{0}', space=sflag, size = 0x4, scoped, tag = 'scoped memory for tpu_custom_call.1']
    #allocation6 [shape = 's32[1]{0}', space=sflag, size = 0x4, scoped, tag = 'scoped memory for tpu_custom_call.1']
    #allocation7 [shape = 'u8[512]{0}', space=smem, size = 0x200, scoped, tag = 'input window, operand 1, single buffered']
    #allocation8 [shape = 'u8[512]{0}', space=smem, size = 0x200, scoped, tag = 'input window, operand 2, single buffered']
    #allocation9 [shape = 's32[1]{0}', space=sflag, size = 0x4, scoped, tag = 'scoped memory for tpu_custom_call.1']
    #allocation10 [shape = 'u8[65536]{0}', space=vmem, size = 0x10000, scoped, tag = 'output window, operand 0, single buffered']
    #allocation11 [shape = 'u8[57344]{0}', space=vmem, size = 0xe000, scoped, tag = 'output window, operand 1, single buffered']
    #allocation12 [shape = 's32[1]{0}', space=sflag, size = 0x4, scoped, tag = 'scoped memory for tpu_custom_call.1']
    #allocation13 [shape = 'u8[57344]{0}', space=vmem, size = 0xe000, scoped, tag = 'output window, operand 2, single buffered']
    %13 = vsyncpa [#allocation4], 0
    %14 = vsyncpa [#allocation6], 0
    %15 = vsyncpa [#allocation9], 0
    %16 = vsyncpa [#allocation5], 0
    %17 = vsyncpa [#allocation12], 0
    // Predicated region
    $region2: #{tpu_custom_call.1} parent=1 // pred_check
      _
    $region3: #{tpu_custom_call.1} parent=1 // pred_check_branch
      %19 = sbr.rel (0) target = $region5
    $region4: #{tpu_custom_call.1} parent=1 // pred_region
      %s21 = ssub.s32 2048, 2048
      %22 = vsyncadd [#allocation4], %s21
      %s23 = sshll.u32 [#allocation3], 4
      %s24 = int_to_ptr.vmem [resolvable:$true] %s23
      %29 = dma.hbm_to_vmem [thread:$0]  %s0, 2048, %s24, [#allocation4], 128, 128, 8
    $region5: #{tpu_custom_call.1} parent=1 // pred_fallthru
      _
    // Predicated region
    $region6: #{tpu_custom_call.1} parent=1 // pred_check
      _
    $region7: #{tpu_custom_call.1} parent=1 // pred_check_branch
      %31 = sbr.rel (0) target = $region9
    $region8: #{tpu_custom_call.1} parent=1 // pred_region
      %s33 = ssub.s32 16, 16
      %34 = vsyncadd [#allocation6], %s33
      %s36 = sshll.u32 %s1, 4
      %s37 = int_to_ptr.vmem [resolvable:$true] %s36
      %39 = dma.vmem_to_smem %s37, 16, [#allocation7], [#allocation6]
    $region9: #{tpu_custom_call.1} parent=1 // pred_fallthru
      _
    // Predicated region
    $region10: #{tpu_custom_call.1} parent=1 // pred_check
      _
    $region11: #{tpu_custom_call.1} parent=1 // pred_check_branch
      %41 = sbr.rel (0) target = $region13
    $region12: #{tpu_custom_call.1} parent=1 // pred_region
      %s43 = ssub.s32 16, 16
      %44 = vsyncadd [#allocation9], %s43
      %s46 = sshll.u32 %s2, 4
      %s47 = int_to_ptr.vmem [resolvable:$true] %s46
      %49 = dma.vmem_to_smem %s47, 16, [#allocation8], [#allocation9]
    $region13: #{tpu_custom_call.1} parent=1 // pred_fallthru
      _
    // Predicated region
    $region14: #{tpu_custom_call.1} parent=1 // pred_check
      _
    $region15: #{tpu_custom_call.1} parent=1 // pred_check_branch
      %51 = sbr.rel (0) target = $region17
    $region16: #{tpu_custom_call.1} parent=1 // pred_region
      _
    $region17: #{tpu_custom_call.1} parent=1 // pred_fallthru
      _
    // Predicated region
    $region18: #{tpu_custom_call.1} parent=1 // pred_check
      _
    $region19: #{tpu_custom_call.1} parent=1 // pred_check_branch
      %53 = sbr.rel (0) target = $region21
    $region20: #{tpu_custom_call.1} parent=1 // pred_region
      %54 = dma.done [#allocation4], 2048
    $region21: #{tpu_custom_call.1} parent=1 // pred_fallthru
      _
    // Predicated region
    $region22: #{tpu_custom_call.1} parent=1 // pred_check
      _
    $region23: #{tpu_custom_call.1} parent=1 // pred_check_branch
      %56 = sbr.rel (0) target = $region25
    $region24: #{tpu_custom_call.1} parent=1 // pred_region
      %57 = dma.done [#allocation6], 16
    $region25: #{tpu_custom_call.1} parent=1 // pred_fallthru
      _
    // Predicated region
    $region26: #{tpu_custom_call.1} parent=1 // pred_check
      _
    $region27: #{tpu_custom_call.1} parent=1 // pred_check_branch
      %59 = sbr.rel (0) target = $region29
    $region28: #{tpu_custom_call.1} parent=1 // pred_region
      %60 = dma.done [#allocation9], 16
    $region29: #{tpu_custom_call.1} parent=1 // pred_fallthru
      _
    %61 = sfence
    %s62 = sld [smem:[#allocation2]]
    %v63 = vld [vmem:[#allocation3] sm:$0xff]
    %s64 = scalar_lea.vmem [#allocation3], 8
    %v65 = vld [vmem:[%s64] sm:$0xff]
    %v66 = vmul.f32 %v63, %v63
    %v67 = vadd.f32 %v66, 0.0
    %v68 = vmul.f32 %v65, %v65
    %v69 = vadd.f32 %v67, %v68
    %v70 = vrsqrt.pop %v69
    %v71 = vmul.f32 %v63, %v70
    %v72 = vmul.f32 %v65, %v70
    %s73 = sld [smem:[#allocation7]]
    %v74 = vstv %s73
    %v75 = vmul.f32 %v71, %v74
    %v76 = vadd.f32 %v75, 0.0
    %s77 = sld [smem:[#allocation7 + $0x1]]
    %v78 = vstv %s77
    %v79 = vmul.f32 %v72, %v78
    %v80 = vadd.f32 %v76, %v79
    %s81 = sld [smem:[#allocation7 + $0x2]]
    %v82 = vstv %s81
    %v83 = vmul.f32 %v71, %v82
    %v84 = vadd.f32 %v83, 0.0
    %s85 = sld [smem:[#allocation7 + $0x3]]
    %v86 = vstv %s85
    %v87 = vmul.f32 %v72, %v86
    %v88 = vadd.f32 %v84, %v87
    %v89 = vmul.f32 %v80, %v80
    %v90 = vadd.f32 %v89, 0.0
    %v91 = vmul.f32 %v88, %v88
    %v92 = vadd.f32 %v90, %v91
    %v93 = vrsqrt.pop %v92
    %v94 = vmul.f32 %v92, %v93
    %vm95 = vcmp.eq.f32.partialorder %v92, inf
    %v96 = vsel %vm95, %v92, %v94
    %vm97 = vcmp.eq.f32.partialorder %v92, 0.0
    %v98 = vand.u32 %v92, 2147483648
    %v99 = vsel %vm97, %v98, %v96
    %v100 = vadd.f32 %v99, 1e-06
    %v101 = vrcp.pop %v100
    %v102 = vmul.f32 %v80, %v101
    %103 = vst [vmem:[#allocation11] sm:$0xff] %v102
    %v104 = vmul.f32 %v88, %v101
    %s105 = scalar_lea.vmem [#allocation11], 8
    %106 = vst [vmem:[%s105] sm:$0xff] %v104
    %s107 = scalar_lea.vmem [#allocation3], 16
    %v108 = vld [vmem:[%s107] sm:$0xff]
    %s109 = scalar_lea.vmem [#allocation3], 24
    %v110 = vld [vmem:[%s109] sm:$0xff]
    %v111 = vmul.f32 %v108, %v108
    %v112 = vadd.f32 %v111, 0.0
    %v113 = vmul.f32 %v110, %v110
    %v114 = vadd.f32 %v112, %v113
    %v115 = vrsqrt.pop %v114
    %v116 = vmul.f32 %v108, %v115
    %v117 = vmul.f32 %v110, %v115
    %s118 = sld [smem:[#allocation7 + $0x8]]
    %v119 = vstv %s118
    %v120 = vmul.f32 %v116, %v119
    %v121 = vadd.f32 %v120, 0.0
    %s122 = sld [smem:[#allocation7 + $0x9]]
    %v123 = vstv %s122
    %v124 = vmul.f32 %v117, %v123
    %v125 = vadd.f32 %v121, %v124
    %s126 = sld [smem:[#allocation7 + $0xa]]
    %v127 = vstv %s126
    %v128 = vmul.f32 %v116, %v127
    %v129 = vadd.f32 %v128, 0.0
    %s130 = sld [smem:[#allocation7 + $0xb]]
    %v131 = vstv %s130
    %v132 = vmul.f32 %v117, %v131
    %v133 = vadd.f32 %v129, %v132
    %s134 = sld [smem:[#allocation7 + $0xc]]
    %v135 = vstv %s134
    %v136 = vmul.f32 %v116, %v135
    %v137 = vadd.f32 %v136, 0.0
    %s138 = sld [smem:[#allocation7 + $0xd]]
    %v139 = vstv %s138
    %v140 = vmul.f32 %v117, %v139
    %v141 = vadd.f32 %v137, %v140
    %s142 = sld [smem:[#allocation7 + $0xe]]
    %v143 = vstv %s142
    %v144 = vmul.f32 %v116, %v143
    %v145 = vadd.f32 %v144, 0.0
    %s146 = sld [smem:[#allocation7 + $0xf]]
    %v147 = vstv %s146
    %v148 = vmul.f32 %v117, %v147
    %v149 = vadd.f32 %v145, %v148
    %v150 = vmul.f32 %v80, %v125
    %v151 = vadd.f32 %v150, 0.0
    %v152 = vmul.f32 %v88, %v141
    %v153 = vadd.f32 %v151, %v152
    %v154 = vmul.f32 %v80, %v133
    %v155 = vadd.f32 %v154, 0.0
    %v156 = vmul.f32 %v88, %v149
    %v157 = vadd.f32 %v155, %v156
    %v158 = vmul.f32 %v153, %v153
    %v159 = vadd.f32 %v158, 0.0
    %v160 = vmul.f32 %v157, %v157
    %v161 = vadd.f32 %v159, %v160
    %v162 = vrsqrt.pop %v161
    %v163 = vmul.f32 %v161, %v162
    %vm164 = vcmp.eq.f32.partialorder %v161, inf
    %v165 = vsel %vm164, %v161, %v163
    %vm166 = vcmp.eq.f32.partialorder %v161, 0.0
    %v167 = vand.u32 %v161, 2147483648
    %v168 = vsel %vm166, %v167, %v165
    %v169 = vadd.f32 %v168, 1e-06
    %v170 = vrcp.pop %v169
    %v171 = vmul.f32 %v153, %v170
    %s172 = scalar_lea.vmem [#allocation11], 16
    %173 = vst [vmem:[%s172] sm:$0xff] %v171
    %v174 = vmul.f32 %v157, %v170
    %s175 = scalar_lea.vmem [#allocation11], 24
    %176 = vst [vmem:[%s175] sm:$0xff] %v174
    %s177 = scalar_lea.vmem [#allocation3], 32
    %v178 = vld [vmem:[%s177] sm:$0xff]
    %s179 = scalar_lea.vmem [#allocation3], 40
    %v180 = vld [vmem:[%s179] sm:$0xff]
    %v181 = vmul.f32 %v178, %v178
    %v182 = vadd.f32 %v181, 0.0
    %v183 = vmul.f32 %v180, %v180
    %v184 = vadd.f32 %v182, %v183
    %v185 = vrsqrt.pop %v184
    %v186 = vmul.f32 %v178, %v185
    %v187 = vmul.f32 %v180, %v185
    %s188 = sld [smem:[#allocation7 + $0x10]]
    %v189 = vstv %s188
    %v190 = vmul.f32 %v186, %v189
    %v191 = vadd.f32 %v190, 0.0
    %s192 = sld [smem:[#allocation7 + $0x11]]
    %v193 = vstv %s192
    %v194 = vmul.f32 %v187, %v193
    %v195 = vadd.f32 %v191, %v194
    %s196 = sld [smem:[#allocation7 + $0x12]]
    %v197 = vstv %s196
    %v198 = vmul.f32 %v186, %v197
    %v199 = vadd.f32 %v198, 0.0
    %s200 = sld [smem:[#allocation7 + $0x13]]
    %v201 = vstv %s200
    %v202 = vmul.f32 %v187, %v201
    %v203 = vadd.f32 %v199, %v202
    %s204 = sld [smem:[#allocation7 + $0x14]]
    %v205 = vstv %s204
    %v206 = vmul.f32 %v186, %v205
    %v207 = vadd.f32 %v206, 0.0
    %s208 = sld [smem:[#allocation7 + $0x15]]
    %v209 = vstv %s208
    %v210 = vmul.f32 %v187, %v209
    %v211 = vadd.f32 %v207, %v210
    %s212 = sld [smem:[#allocation7 + $0x16]]
    %v213 = vstv %s212
    %v214 = vmul.f32 %v186, %v213
    %v215 = vadd.f32 %v214, 0.0
    %s216 = sld [smem:[#allocation7 + $0x17]]
    %v217 = vstv %s216
    %v218 = vmul.f32 %v187, %v217
    %v219 = vadd.f32 %v215, %v218
    %v220 = vmul.f32 %v153, %v195
    %v221 = vadd.f32 %v220, 0.0
    %v222 = vmul.f32 %v157, %v211
    %v223 = vadd.f32 %v221, %v222
    %v224 = vmul.f32 %v153, %v203
    %v225 = vadd.f32 %v224, 0.0
    %v226 = vmul.f32 %v157, %v219
    %v227 = vadd.f32 %v225, %v226
    %v228 = vmul.f32 %v223, %v223
    %v229 = vadd.f32 %v228, 0.0
    %v230 = vmul.f32 %v227, %v227
    %v231 = vadd.f32 %v229, %v230
    %v232 = vrsqrt.pop %v231
    %v233 = vmul.f32 %v231, %v232
    %vm234 = vcmp.eq.f32.partialorder %v231, inf
    %v235 = vsel %vm234, %v231, %v233
    %vm236 = vcmp.eq.f32.partialorder %v231, 0.0
    %v237 = vand.u32 %v231, 2147483648
    %v238 = vsel %vm236, %v237, %v235
    %v239 = vadd.f32 %v238, 1e-06
    %v240 = vrcp.pop %v239
    %v241 = vmul.f32 %v223, %v240
    %s242 = scalar_lea.vmem [#allocation11], 32
    %243 = vst [vmem:[%s242] sm:$0xff] %v241
    %v244 = vmul.f32 %v227, %v240
    %s245 = scalar_lea.vmem [#allocation11], 40
    %246 = vst [vmem:[%s245] sm:$0xff] %v244
    %s247 = scalar_lea.vmem [#allocation3], 48
    %v248 = vld [vmem:[%s247] sm:$0xff]
    %s249 = scalar_lea.vmem [#allocation3], 56
    %v250 = vld [vmem:[%s249] sm:$0xff]
    %v251 = vmul.f32 %v248, %v248
    %v252 = vadd.f32 %v251, 0.0
    %v253 = vmul.f32 %v250, %v250
    %v254 = vadd.f32 %v252, %v253
    %v255 = vrsqrt.pop %v254
    %v256 = vmul.f32 %v248, %v255
    %v257 = vmul.f32 %v250, %v255
    %s258 = sld [smem:[#allocation7 + $0x18]]
    %v259 = vstv %s258
    %v260 = vmul.f32 %v256, %v259
    %v261 = vadd.f32 %v260, 0.0
    %s262 = sld [smem:[#allocation7 + $0x19]]
    %v263 = vstv %s262
    %v264 = vmul.f32 %v257, %v263
    %v265 = vadd.f32 %v261, %v264
    %s266 = sld [smem:[#allocation7 + $0x1a]]
    %v267 = vstv %s266
    %v268 = vmul.f32 %v256, %v267
    %v269 = vadd.f32 %v268, 0.0
    %s270 = sld [smem:[#allocation7 + $0x1b]]
    %v271 = vstv %s270
    %v272 = vmul.f32 %v257, %v271
    %v273 = vadd.f32 %v269, %v272
    %s274 = sld [smem:[#allocation7 + $0x1c]]
    %v275 = vstv %s274
    %v276 = vmul.f32 %v256, %v275
    %v277 = vadd.f32 %v276, 0.0
    %s278 = sld [smem:[#allocation7 + $0x1d]]
    %v279 = vstv %s278
    %v280 = vmul.f32 %v257, %v279
    %v281 = vadd.f32 %v277, %v280
    %s282 = sld [smem:[#allocation7 + $0x1e]]
    %v283 = vstv %s282
    %v284 = vmul.f32 %v256, %v283
    %v285 = vadd.f32 %v284, 0.0
    %s286 = sld [smem:[#allocation7 + $0x1f]]
    %v287 = vstv %s286
    %v288 = vmul.f32 %v257, %v287
    %v289 = vadd.f32 %v285, %v288
    %v290 = vmul.f32 %v223, %v265
    %v291 = vadd.f32 %v290, 0.0
    %v292 = vmul.f32 %v227, %v281
    %v293 = vadd.f32 %v291, %v292
    %v294 = vmul.f32 %v223, %v273
    %v295 = vadd.f32 %v294, 0.0
    %v296 = vmul.f32 %v227, %v289
    %v297 = vadd.f32 %v295, %v296
    %v298 = vmul.f32 %v293, %v293
    %v299 = vadd.f32 %v298, 0.0
    %v300 = vmul.f32 %v297, %v297
    %v301 = vadd.f32 %v299, %v300
    %v302 = vrsqrt.pop %v301
    %v303 = vmul.f32 %v301, %v302
    %vm304 = vcmp.eq.f32.partialorder %v301, inf
    %v305 = vsel %vm304, %v301, %v303
    %vm306 = vcmp.eq.f32.partialorder %v301, 0.0
    %v307 = vand.u32 %v301, 2147483648
    %v308 = vsel %vm306, %v307, %v305
    %v309 = vadd.f32 %v308, 1e-06
    %v310 = vrcp.pop %v309
    %v311 = vmul.f32 %v293, %v310
    %s312 = scalar_lea.vmem [#allocation11], 48
    %313 = vst [vmem:[%s312] sm:$0xff] %v311
    %v314 = vmul.f32 %v297, %v310
    %s315 = scalar_lea.vmem [#allocation11], 56
    %316 = vst [vmem:[%s315] sm:$0xff] %v314
    %s317 = scalar_lea.vmem [#allocation3], 64
    %v318 = vld [vmem:[%s317] sm:$0xff]
    %s319 = scalar_lea.vmem [#allocation3], 72
    %v320 = vld [vmem:[%s319] sm:$0xff]
    %v321 = vmul.f32 %v318, %v318
    %v322 = vadd.f32 %v321, 0.0
    %v323 = vmul.f32 %v320, %v320
    %v324 = vadd.f32 %v322, %v323
    %v325 = vrsqrt.pop %v324
    %v326 = vmul.f32 %v318, %v325
    %v327 = vmul.f32 %v320, %v325
    %s328 = sld [smem:[#allocation7 + $0x20]]
    %v329 = vstv %s328
    %v330 = vmul.f32 %v326, %v329
    %v331 = vadd.f32 %v330, 0.0
    %s332 = sld [smem:[#allocation7 + $0x21]]
    %v333 = vstv %s332
    %v334 = vmul.f32 %v327, %v333
    %v335 = vadd.f32 %v331, %v334
    %s336 = sld [smem:[#allocation7 + $0x22]]
    %v337 = vstv %s336
    %v338 = vmul.f32 %v326, %v337
    %v339 = vadd.f32 %v338, 0.0
    %s340 = sld [smem:[#allocation7 + $0x23]]
    %v341 = vstv %s340
    %v342 = vmul.f32 %v327, %v341
    %v343 = vadd.f32 %v339, %v342
    %s344 = sld [smem:[#allocation7 + $0x24]]
    %v345 = vstv %s344
    %v346 = vmul.f32 %v326, %v345
    %v347 = vadd.f32 %v346, 0.0
    %s348 = sld [smem:[#allocation7 + $0x25]]
    %v349 = vstv %s348
    %v350 = vmul.f32 %v327, %v349
    %v351 = vadd.f32 %v347, %v350
    %s352 = sld [smem:[#allocation7 + $0x26]]
    %v353 = vstv %s352
    %v354 = vmul.f32 %v326, %v353
    %v355 = vadd.f32 %v354, 0.0
    %s356 = sld [smem:[#allocation7 + $0x27]]
    %v357 = vstv %s356
    %v358 = vmul.f32 %v327, %v357
    %v359 = vadd.f32 %v355, %v358
    %v360 = vmul.f32 %v293, %v335
    %v361 = vadd.f32 %v360, 0.0
    %v362 = vmul.f32 %v297, %v351
    %v363 = vadd.f32 %v361, %v362
    %v364 = vmul.f32 %v293, %v343
    %v365 = vadd.f32 %v364, 0.0
    %v366 = vmul.f32 %v297, %v359
    %v367 = vadd.f32 %v365, %v366
    %v368 = vmul.f32 %v363, %v363
    %v369 = vadd.f32 %v368, 0.0
    %v370 = vmul.f32 %v367, %v367
    %v371 = vadd.f32 %v369, %v370
    %v372 = vrsqrt.pop %v371
    %v373 = vmul.f32 %v371, %v372
    %vm374 = vcmp.eq.f32.partialorder %v371, inf
    %v375 = vsel %vm374, %v371, %v373
    %vm376 = vcmp.eq.f32.partialorder %v371, 0.0
    %v377 = vand.u32 %v371, 2147483648
    %v378 = vsel %vm376, %v377, %v375
    %v379 = vadd.f32 %v378, 1e-06
    %v380 = vrcp.pop %v379
    %v381 = vmul.f32 %v363, %v380
    %s382 = scalar_lea.vmem [#allocation11], 64
    %383 = vst [vmem:[%s382] sm:$0xff] %v381
    %v384 = vmul.f32 %v367, %v380
    %s385 = scalar_lea.vmem [#allocation11], 72
    %386 = vst [vmem:[%s385] sm:$0xff] %v384
    %s387 = scalar_lea.vmem [#allocation3], 80
    %v388 = vld [vmem:[%s387] sm:$0xff]
    %s389 = scalar_lea.vmem [#allocation3], 88
    %v390 = vld [vmem:[%s389] sm:$0xff]
    %v391 = vmul.f32 %v388, %v388
    %v392 = vadd.f32 %v391, 0.0
    %v393 = vmul.f32 %v390, %v390
    %v394 = vadd.f32 %v392, %v393
    %v395 = vrsqrt.pop %v394
    %v396 = vmul.f32 %v388, %v395
    %v397 = vmul.f32 %v390, %v395
    %s398 = sld [smem:[#allocation7 + $0x28]]
    %v399 = vstv %s398
    %v400 = vmul.f32 %v396, %v399
    %v401 = vadd.f32 %v400, 0.0
    %s402 = sld [smem:[#allocation7 + $0x29]]
    %v403 = vstv %s402
    %v404 = vmul.f32 %v397, %v403
    %v405 = vadd.f32 %v401, %v404
    %s406 = sld [smem:[#allocation7 + $0x2a]]
    %v407 = vstv %s406
    %v408 = vmul.f32 %v396, %v407
    %v409 = vadd.f32 %v408, 0.0
    %s410 = sld [smem:[#allocation7 + $0x2b]]
    %v411 = vstv %s410
    %v412 = vmul.f32 %v397, %v411
    %v413 = vadd.f32 %v409, %v412
    %s414 = sld [smem:[#allocation7 + $0x2c]]
    %v415 = vstv %s414
    %v416 = vmul.f32 %v396, %v415
    %v417 = vadd.f32 %v416, 0.0
    %s418 = sld [smem:[#allocation7 + $0x2d]]
    %v419 = vstv %s418
    %v420 = vmul.f32 %v397, %v419
    %v421 = vadd.f32 %v417, %v420
    %s422 = sld [smem:[#allocation7 + $0x2e]]
    %v423 = vstv %s422
    %v424 = vmul.f32 %v396, %v423
    %v425 = vadd.f32 %v424, 0.0
    %s426 = sld [smem:[#allocation7 + $0x2f]]
    %v427 = vstv %s426
    %v428 = vmul.f32 %v397, %v427
    %v429 = vadd.f32 %v425, %v428
    %v430 = vmul.f32 %v363, %v405
    %v431 = vadd.f32 %v430, 0.0
    %v432 = vmul.f32 %v367, %v421
    %v433 = vadd.f32 %v431, %v432
    %v434 = vmul.f32 %v363, %v413
    %v435 = vadd.f32 %v434, 0.0
    %v436 = vmul.f32 %v367, %v429
    %v437 = vadd.f32 %v435, %v436
    %v438 = vmul.f32 %v433, %v433
    %v439 = vadd.f32 %v438, 0.0
    %v440 = vmul.f32 %v437, %v437
    %v441 = vadd.f32 %v439, %v440
    %v442 = vrsqrt.pop %v441
    %v443 = vmul.f32 %v441, %v442
    %vm444 = vcmp.eq.f32.partialorder %v441, inf
    %v445 = vsel %vm444, %v441, %v443
    %vm446 = vcmp.eq.f32.partialorder %v441, 0.0
    %v447 = vand.u32 %v441, 2147483648
    %v448 = vsel %vm446, %v447, %v445
    %v449 = vadd.f32 %v448, 1e-06
    %v450 = vrcp.pop %v449
    %v451 = vmul.f32 %v433, %v450
    %s452 = scalar_lea.vmem [#allocation11], 80
    %453 = vst [vmem:[%s452] sm:$0xff] %v451
    %v454 = vmul.f32 %v437, %v450
    %s455 = scalar_lea.vmem [#allocation11], 88
    %456 = vst [vmem:[%s455] sm:$0xff] %v454
    %s457 = scalar_lea.vmem [#allocation3], 96
    %v458 = vld [vmem:[%s457] sm:$0xff]
    %s459 = scalar_lea.vmem [#allocation3], 104
    %v460 = vld [vmem:[%s459] sm:$0xff]
    %v461 = vmul.f32 %v458, %v458
    %v462 = vadd.f32 %v461, 0.0
    %v463 = vmul.f32 %v460, %v460
    %v464 = vadd.f32 %v462, %v463
    %v465 = vrsqrt.pop %v464
    %v466 = vmul.f32 %v458, %v465
    %v467 = vmul.f32 %v460, %v465
    %s468 = sld [smem:[#allocation7 + $0x30]]
    %v469 = vstv %s468
    %v470 = vmul.f32 %v466, %v469
    %v471 = vadd.f32 %v470, 0.0
    %s472 = sld [smem:[#allocation7 + $0x31]]
    %v473 = vstv %s472
    %v474 = vmul.f32 %v467, %v473
    %v475 = vadd.f32 %v471, %v474
    %s476 = sld [smem:[#allocation7 + $0x32]]
    %v477 = vstv %s476
    %v478 = vmul.f32 %v466, %v477
    %v479 = vadd.f32 %v478, 0.0
    %s480 = sld [smem:[#allocation7 + $0x33]]
    %v481 = vstv %s480
    %v482 = vmul.f32 %v467, %v481
    %v483 = vadd.f32 %v479, %v482
    %s484 = sld [smem:[#allocation7 + $0x34]]
    %v485 = vstv %s484
    %v486 = vmul.f32 %v466, %v485
    %v487 = vadd.f32 %v486, 0.0
    %s488 = sld [smem:[#allocation7 + $0x35]]
    %v489 = vstv %s488
    %v490 = vmul.f32 %v467, %v489
    %v491 = vadd.f32 %v487, %v490
    %s492 = sld [smem:[#allocation7 + $0x36]]
    %v493 = vstv %s492
    %v494 = vmul.f32 %v466, %v493
    %v495 = vadd.f32 %v494, 0.0
    %s496 = sld [smem:[#allocation7 + $0x37]]
    %v497 = vstv %s496
    %v498 = vmul.f32 %v467, %v497
    %v499 = vadd.f32 %v495, %v498
    %v500 = vmul.f32 %v433, %v475
    %v501 = vadd.f32 %v500, 0.0
    %v502 = vmul.f32 %v437, %v491
    %v503 = vadd.f32 %v501, %v502
    %v504 = vmul.f32 %v433, %v483
    %v505 = vadd.f32 %v504, 0.0
    %v506 = vmul.f32 %v437, %v499
    %v507 = vadd.f32 %v505, %v506
    %v508 = vmul.f32 %v503, %v503
    %v509 = vadd.f32 %v508, 0.0
    %v510 = vmul.f32 %v507, %v507
    %v511 = vadd.f32 %v509, %v510
    %v512 = vrsqrt.pop %v511
    %v513 = vmul.f32 %v511, %v512
    %vm514 = vcmp.eq.f32.partialorder %v511, inf
    %v515 = vsel %vm514, %v511, %v513
    %vm516 = vcmp.eq.f32.partialorder %v511, 0.0
    %v517 = vand.u32 %v511, 2147483648
    %v518 = vsel %vm516, %v517, %v515
    %v519 = vadd.f32 %v518, 1e-06
    %v520 = vrcp.pop %v519
    %v521 = vmul.f32 %v503, %v520
    %s522 = scalar_lea.vmem [#allocation11], 96
    %523 = vst [vmem:[%s522] sm:$0xff] %v521
    %v524 = vmul.f32 %v507, %v520
    %s525 = scalar_lea.vmem [#allocation11], 104
    %526 = vst [vmem:[%s525] sm:$0xff] %v524
    %s527 = scalar_lea.vmem [#allocation3], 112
    %v528 = vld [vmem:[%s527] sm:$0xff]
    %s529 = scalar_lea.vmem [#allocation3], 120
    %v530 = vld [vmem:[%s529] sm:$0xff]
    %v531 = vmul.f32 %v528, %v528
    %v532 = vadd.f32 %v531, 0.0
    %v533 = vmul.f32 %v530, %v530
    %v534 = vadd.f32 %v532, %v533
    %v535 = vrsqrt.pop %v534
    %v536 = vmul.f32 %v528, %v535
    %v537 = vmul.f32 %v530, %v535
    %s538 = sld [smem:[#allocation7 + $0x38]]
    %v539 = vstv %s538
    %v540 = vmul.f32 %v536, %v539
    %v541 = vadd.f32 %v540, 0.0
    %s542 = sld [smem:[#allocation7 + $0x39]]
    %v543 = vstv %s542
    %v544 = vmul.f32 %v537, %v543
    %v545 = vadd.f32 %v541, %v544
    %s546 = sld [smem:[#allocation7 + $0x3c]]
    %v547 = vstv %s546
    %v548 = vmul.f32 %v536, %v547
    %v549 = vadd.f32 %v548, 0.0
    %s550 = sld [smem:[#allocation7 + $0x3d]]
    %v551 = vstv %s550
    %v552 = vmul.f32 %v537, %v551
    %v553 = vadd.f32 %v549, %v552
    %v554 = vmul.f32 %v545, %v545
    %v555 = vadd.f32 %v554, 0.0
    %v556 = vmul.f32 %v553, %v553
    %v557 = vadd.f32 %v555, %v556
    %v558 = vrsqrt.pop %v557
    %v559 = vmul.f32 %v557, %v558
    %vm560 = vcmp.eq.f32.partialorder %v557, inf
    %v561 = vsel %vm560, %v557, %v559
    %vm562 = vcmp.eq.f32.partialorder %v557, 0.0
    %v563 = vand.u32 %v557, 2147483648
    %v564 = vsel %vm562, %v563, %v561
    %v565 = vadd.f32 %v564, 1e-06
    %v566 = vrcp.pop %v565
    %v567 = vmul.f32 %v545, %v566
    %s568 = scalar_lea.vmem [#allocation13], 96
    %569 = vst [vmem:[%s568] sm:$0xff] %v567
    %v570 = vmul.f32 %v553, %v566
    %s571 = scalar_lea.vmem [#allocation13], 104
    %572 = vst [vmem:[%s571] sm:$0xff] %v570
    %v573 = vld [vmem:[%s457] sm:$0xff]
    %v574 = vld [vmem:[%s459] sm:$0xff]
    %v575 = vmul.f32 %v573, %v573
    %v576 = vadd.f32 %v575, 0.0
    %v577 = vmul.f32 %v574, %v574
    %v578 = vadd.f32 %v576, %v577
    %v579 = vrsqrt.pop %v578
    %v580 = vmul.f32 %v573, %v579
    %v581 = vmul.f32 %v574, %v579
    %s582 = sld [smem:[#allocation7 + $0x30]]
    %v583 = vstv %s582
    %v584 = vmul.f32 %v580, %v583
    %v585 = vadd.f32 %v584, 0.0
    %s586 = sld [smem:[#allocation7 + $0x31]]
    %v587 = vstv %s586
    %v588 = vmul.f32 %v581, %v587
    %v589 = vadd.f32 %v585, %v588
    %s590 = sld [smem:[#allocation7 + $0x32]]
    %v591 = vstv %s590
    %v592 = vmul.f32 %v580, %v591
    %v593 = vadd.f32 %v592, 0.0
    %s594 = sld [smem:[#allocation7 + $0x33]]
    %v595 = vstv %s594
    %v596 = vmul.f32 %v581, %v595
    %v597 = vadd.f32 %v593, %v596
    %s598 = sld [smem:[#allocation7 + $0x34]]
    %v599 = vstv %s598
    %v600 = vmul.f32 %v580, %v599
    %v601 = vadd.f32 %v600, 0.0
    %s602 = sld [smem:[#allocation7 + $0x35]]
    %v603 = vstv %s602
    %v604 = vmul.f32 %v581, %v603
    %v605 = vadd.f32 %v601, %v604
    %s606 = sld [smem:[#allocation7 + $0x36]]
    %v607 = vstv %s606
    %v608 = vmul.f32 %v580, %v607
    %v609 = vadd.f32 %v608, 0.0
    %s610 = sld [smem:[#allocation7 + $0x37]]
    %v611 = vstv %s610
    %v612 = vmul.f32 %v581, %v611
    %v613 = vadd.f32 %v609, %v612
    %v614 = vmul.f32 %v589, %v545
    %v615 = vadd.f32 %v614, 0.0
    %v616 = vmul.f32 %v597, %v553
    %v617 = vadd.f32 %v615, %v616
    %v618 = vmul.f32 %v605, %v545
    %v619 = vadd.f32 %v618, 0.0
    %v620 = vmul.f32 %v613, %v553
    %v621 = vadd.f32 %v619, %v620
    %v622 = vmul.f32 %v617, %v617
    %v623 = vadd.f32 %v622, 0.0
    %v624 = vmul.f32 %v621, %v621
    %v625 = vadd.f32 %v623, %v624
    %v626 = vrsqrt.pop %v625
    %v627 = vmul.f32 %v625, %v626
    %vm628 = vcmp.eq.f32.partialorder %v625, inf
    %v629 = vsel %vm628, %v625, %v627
    %vm630 = vcmp.eq.f32.partialorder %v625, 0.0
    %v631 = vand.u32 %v625, 2147483648
    %v632 = vsel %vm630, %v631, %v629
    %v633 = vadd.f32 %v632, 1e-06
    %v634 = vrcp.pop %v633
    %v635 = vmul.f32 %v617, %v634
    %s636 = scalar_lea.vmem [#allocation13], 80
    %637 = vst [vmem:[%s636] sm:$0xff] %v635
    %v638 = vmul.f32 %v621, %v634
    %s639 = scalar_lea.vmem [#allocation13], 88
    %640 = vst [vmem:[%s639] sm:$0xff] %v638
    %v641 = vld [vmem:[%s387] sm:$0xff]
    %v642 = vld [vmem:[%s389] sm:$0xff]
    %v643 = vmul.f32 %v641, %v641
    %v644 = vadd.f32 %v643, 0.0
    %v645 = vmul.f32 %v642, %v642
    %v646 = vadd.f32 %v644, %v645
    %v647 = vrsqrt.pop %v646
    %v648 = vmul.f32 %v641, %v647
    %v649 = vmul.f32 %v642, %v647
    %s650 = sld [smem:[#allocation7 + $0x28]]
    %v651 = vstv %s650
    %v652 = vmul.f32 %v648, %v651
    %v653 = vadd.f32 %v652, 0.0
    %s654 = sld [smem:[#allocation7 + $0x29]]
    %v655 = vstv %s654
    %v656 = vmul.f32 %v649, %v655
    %v657 = vadd.f32 %v653, %v656
    %s658 = sld [smem:[#allocation7 + $0x2a]]
    %v659 = vstv %s658
    %v660 = vmul.f32 %v648, %v659
    %v661 = vadd.f32 %v660, 0.0
    %s662 = sld [smem:[#allocation7 + $0x2b]]
    %v663 = vstv %s662
    %v664 = vmul.f32 %v649, %v663
    %v665 = vadd.f32 %v661, %v664
    %s666 = sld [smem:[#allocation7 + $0x2c]]
    %v667 = vstv %s666
    %v668 = vmul.f32 %v648, %v667
    %v669 = vadd.f32 %v668, 0.0
    %s670 = sld [smem:[#allocation7 + $0x2d]]
    %v671 = vstv %s670
    %v672 = vmul.f32 %v649, %v671
    %v673 = vadd.f32 %v669, %v672
    %s674 = sld [smem:[#allocation7 + $0x2e]]
    %v675 = vstv %s674
    %v676 = vmul.f32 %v648, %v675
    %v677 = vadd.f32 %v676, 0.0
    %s678 = sld [smem:[#allocation7 + $0x2f]]
    %v679 = vstv %s678
    %v680 = vmul.f32 %v649, %v679
    %v681 = vadd.f32 %v677, %v680
    %v682 = vmul.f32 %v657, %v617
    %v683 = vadd.f32 %v682, 0.0
    %v684 = vmul.f32 %v665, %v621
    %v685 = vadd.f32 %v683, %v684
    %v686 = vmul.f32 %v673, %v617
    %v687 = vadd.f32 %v686, 0.0
    %v688 = vmul.f32 %v681, %v621
    %v689 = vadd.f32 %v687, %v688
    %v690 = vmul.f32 %v685, %v685
    %v691 = vadd.f32 %v690, 0.0
    %v692 = vmul.f32 %v689, %v689
    %v693 = vadd.f32 %v691, %v692
    %v694 = vrsqrt.pop %v693
    %v695 = vmul.f32 %v693, %v694
    %vm696 = vcmp.eq.f32.partialorder %v693, inf
    %v697 = vsel %vm696, %v693, %v695
    %vm698 = vcmp.eq.f32.partialorder %v693, 0.0
    %v699 = vand.u32 %v693, 2147483648
    %v700 = vsel %vm698, %v699, %v697
    %v701 = vadd.f32 %v700, 1e-06
    %v702 = vrcp.pop %v701
    %v703 = vmul.f32 %v685, %v702
    %s704 = scalar_lea.vmem [#allocation13], 64
    %705 = vst [vmem:[%s704] sm:$0xff] %v703
    %v706 = vmul.f32 %v689, %v702
    %s707 = scalar_lea.vmem [#allocation13], 72
    %708 = vst [vmem:[%s707] sm:$0xff] %v706
    %v709 = vld [vmem:[%s317] sm:$0xff]
    %v710 = vld [vmem:[%s319] sm:$0xff]
    %v711 = vmul.f32 %v709, %v709
    %v712 = vadd.f32 %v711, 0.0
    %v713 = vmul.f32 %v710, %v710
    %v714 = vadd.f32 %v712, %v713
    %v715 = vrsqrt.pop %v714
    %v716 = vmul.f32 %v709, %v715
    %v717 = vmul.f32 %v710, %v715
    %s718 = sld [smem:[#allocation7 + $0x20]]
    %v719 = vstv %s718
    %v720 = vmul.f32 %v716, %v719
    %v721 = vadd.f32 %v720, 0.0
    %s722 = sld [smem:[#allocation7 + $0x21]]
    %v723 = vstv %s722
    %v724 = vmul.f32 %v717, %v723
    %v725 = vadd.f32 %v721, %v724
    %s726 = sld [smem:[#allocation7 + $0x22]]
    %v727 = vstv %s726
    %v728 = vmul.f32 %v716, %v727
    %v729 = vadd.f32 %v728, 0.0
    %s730 = sld [smem:[#allocation7 + $0x23]]
    %v731 = vstv %s730
    %v732 = vmul.f32 %v717, %v731
    %v733 = vadd.f32 %v729, %v732
    %s734 = sld [smem:[#allocation7 + $0x24]]
    %v735 = vstv %s734
    %v736 = vmul.f32 %v716, %v735
    %v737 = vadd.f32 %v736, 0.0
    %s738 = sld [smem:[#allocation7 + $0x25]]
    %v739 = vstv %s738
    %v740 = vmul.f32 %v717, %v739
    %v741 = vadd.f32 %v737, %v740
    %s742 = sld [smem:[#allocation7 + $0x26]]
    %v743 = vstv %s742
    %v744 = vmul.f32 %v716, %v743
    %v745 = vadd.f32 %v744, 0.0
    %s746 = sld [smem:[#allocation7 + $0x27]]
    %v747 = vstv %s746
    %v748 = vmul.f32 %v717, %v747
    %v749 = vadd.f32 %v745, %v748
    %v750 = vmul.f32 %v725, %v685
    %v751 = vadd.f32 %v750, 0.0
    %v752 = vmul.f32 %v733, %v689
    %v753 = vadd.f32 %v751, %v752
    %v754 = vmul.f32 %v741, %v685
    %v755 = vadd.f32 %v754, 0.0
    %v756 = vmul.f32 %v749, %v689
    %v757 = vadd.f32 %v755, %v756
    %v758 = vmul.f32 %v753, %v753
    %v759 = vadd.f32 %v758, 0.0
    %v760 = vmul.f32 %v757, %v757
    %v761 = vadd.f32 %v759, %v760
    %v762 = vrsqrt.pop %v761
    %v763 = vmul.f32 %v761, %v762
    %vm764 = vcmp.eq.f32.partialorder %v761, inf
    %v765 = vsel %vm764, %v761, %v763
    %vm766 = vcmp.eq.f32.partialorder %v761, 0.0
    %v767 = vand.u32 %v761, 2147483648
    %v768 = vsel %vm766, %v767, %v765
    %v769 = vadd.f32 %v768, 1e-06
    %v770 = vrcp.pop %v769
    %v771 = vmul.f32 %v753, %v770
    %s772 = scalar_lea.vmem [#allocation13], 48
    %773 = vst [vmem:[%s772] sm:$0xff] %v771
    %v774 = vmul.f32 %v757, %v770
    %s775 = scalar_lea.vmem [#allocation13], 56
    %776 = vst [vmem:[%s775] sm:$0xff] %v774
    %v777 = vld [vmem:[%s247] sm:$0xff]
    %v778 = vld [vmem:[%s249] sm:$0xff]
    %v779 = vmul.f32 %v777, %v777
    %v780 = vadd.f32 %v779, 0.0
    %v781 = vmul.f32 %v778, %v778
    %v782 = vadd.f32 %v780, %v781
    %v783 = vrsqrt.pop %v782
    %v784 = vmul.f32 %v777, %v783
    %v785 = vmul.f32 %v778, %v783
    %s786 = sld [smem:[#allocation7 + $0x18]]
    %v787 = vstv %s786
    %v788 = vmul.f32 %v784, %v787
    %v789 = vadd.f32 %v788, 0.0
    %s790 = sld [smem:[#allocation7 + $0x19]]
    %v791 = vstv %s790
    %v792 = vmul.f32 %v785, %v791
    %v793 = vadd.f32 %v789, %v792
    %s794 = sld [smem:[#allocation7 + $0x1a]]
    %v795 = vstv %s794
    %v796 = vmul.f32 %v784, %v795
    %v797 = vadd.f32 %v796, 0.0
    %s798 = sld [smem:[#allocation7 + $0x1b]]
    %v799 = vstv %s798
    %v800 = vmul.f32 %v785, %v799
    %v801 = vadd.f32 %v797, %v800
    %s802 = sld [smem:[#allocation7 + $0x1c]]
    %v803 = vstv %s802
    %v804 = vmul.f32 %v784, %v803
    %v805 = vadd.f32 %v804, 0.0
    %s806 = sld [smem:[#allocation7 + $0x1d]]
    %v807 = vstv %s806
    %v808 = vmul.f32 %v785, %v807
    %v809 = vadd.f32 %v805, %v808
    %s810 = sld [smem:[#allocation7 + $0x1e]]
    %v811 = vstv %s810
    %v812 = vmul.f32 %v784, %v811
    %v813 = vadd.f32 %v812, 0.0
    %s814 = sld [smem:[#allocation7 + $0x1f]]
    %v815 = vstv %s814
    %v816 = vmul.f32 %v785, %v815
    %v817 = vadd.f32 %v813, %v816
    %v818 = vmul.f32 %v793, %v753
    %v819 = vadd.f32 %v818, 0.0
    %v820 = vmul.f32 %v801, %v757
    %v821 = vadd.f32 %v819, %v820
    %v822 = vmul.f32 %v809, %v753
    %v823 = vadd.f32 %v822, 0.0
    %v824 = vmul.f32 %v817, %v757
    %v825 = vadd.f32 %v823, %v824
    %v826 = vmul.f32 %v821, %v821
    %v827 = vadd.f32 %v826, 0.0
    %v828 = vmul.f32 %v825, %v825
    %v829 = vadd.f32 %v827, %v828
    %v830 = vrsqrt.pop %v829
    %v831 = vmul.f32 %v829, %v830
    %vm832 = vcmp.eq.f32.partialorder %v829, inf
    %v833 = vsel %vm832, %v829, %v831
    %vm834 = vcmp.eq.f32.partialorder %v829, 0.0
    %v835 = vand.u32 %v829, 2147483648
    %v836 = vsel %vm834, %v835, %v833
    %v837 = vadd.f32 %v836, 1e-06
    %v838 = vrcp.pop %v837
    %v839 = vmul.f32 %v821, %v838
    %s840 = scalar_lea.vmem [#allocation13], 32
    %841 = vst [vmem:[%s840] sm:$0xff] %v839
    %v842 = vmul.f32 %v825, %v838
    %s843 = scalar_lea.vmem [#allocation13], 40
    %844 = vst [vmem:[%s843] sm:$0xff] %v842
    %v845 = vld [vmem:[%s177] sm:$0xff]
    %v846 = vld [vmem:[%s179] sm:$0xff]
    %v847 = vmul.f32 %v845, %v845
    %v848 = vadd.f32 %v847, 0.0
    %v849 = vmul.f32 %v846, %v846
    %v850 = vadd.f32 %v848, %v849
    %v851 = vrsqrt.pop %v850
    %v852 = vmul.f32 %v845, %v851
    %v853 = vmul.f32 %v846, %v851
    %s854 = sld [smem:[#allocation7 + $0x10]]
    %v855 = vstv %s854
    %v856 = vmul.f32 %v852, %v855
    %v857 = vadd.f32 %v856, 0.0
    %s858 = sld [smem:[#allocation7 + $0x11]]
    %v859 = vstv %s858
    %v860 = vmul.f32 %v853, %v859
    %v861 = vadd.f32 %v857, %v860
    %s862 = sld [smem:[#allocation7 + $0x12]]
    %v863 = vstv %s862
    %v864 = vmul.f32 %v852, %v863
    %v865 = vadd.f32 %v864, 0.0
    %s866 = sld [smem:[#allocation7 + $0x13]]
    %v867 = vstv %s866
    %v868 = vmul.f32 %v853, %v867
    %v869 = vadd.f32 %v865, %v868
    %s870 = sld [smem:[#allocation7 + $0x14]]
    %v871 = vstv %s870
    %v872 = vmul.f32 %v852, %v871
    %v873 = vadd.f32 %v872, 0.0
    %s874 = sld [smem:[#allocation7 + $0x15]]
    %v875 = vstv %s874
    %v876 = vmul.f32 %v853, %v875
    %v877 = vadd.f32 %v873, %v876
    %s878 = sld [smem:[#allocation7 + $0x16]]
    %v879 = vstv %s878
    %v880 = vmul.f32 %v852, %v879
    %v881 = vadd.f32 %v880, 0.0
    %s882 = sld [smem:[#allocation7 + $0x17]]
    %v883 = vstv %s882
    %v884 = vmul.f32 %v853, %v883
    %v885 = vadd.f32 %v881, %v884
    %v886 = vmul.f32 %v861, %v821
    %v887 = vadd.f32 %v886, 0.0
    %v888 = vmul.f32 %v869, %v825
    %v889 = vadd.f32 %v887, %v888
    %v890 = vmul.f32 %v877, %v821
    %v891 = vadd.f32 %v890, 0.0
    %v892 = vmul.f32 %v885, %v825
    %v893 = vadd.f32 %v891, %v892
    %v894 = vmul.f32 %v889, %v889
    %v895 = vadd.f32 %v894, 0.0
    %v896 = vmul.f32 %v893, %v893
    %v897 = vadd.f32 %v895, %v896
    %v898 = vrsqrt.pop %v897
    %v899 = vmul.f32 %v897, %v898
    %vm900 = vcmp.eq.f32.partialorder %v897, inf
    %v901 = vsel %vm900, %v897, %v899
    %vm902 = vcmp.eq.f32.partialorder %v897, 0.0
    %v903 = vand.u32 %v897, 2147483648
    %v904 = vsel %vm902, %v903, %v901
    %v905 = vadd.f32 %v904, 1e-06
    %v906 = vrcp.pop %v905
    %v907 = vmul.f32 %v889, %v906
    %s908 = scalar_lea.vmem [#allocation13], 16
    %909 = vst [vmem:[%s908] sm:$0xff] %v907
    %v910 = vmul.f32 %v893, %v906
    %s911 = scalar_lea.vmem [#allocation13], 24
    %912 = vst [vmem:[%s911] sm:$0xff] %v910
    %v913 = vld [vmem:[%s107] sm:$0xff]
    %v914 = vld [vmem:[%s109] sm:$0xff]
    %v915 = vmul.f32 %v913, %v913
    %v916 = vadd.f32 %v915, 0.0
    %v917 = vmul.f32 %v914, %v914
    %v918 = vadd.f32 %v916, %v917
    %v919 = vrsqrt.pop %v918
    %v920 = vmul.f32 %v913, %v919
    %v921 = vmul.f32 %v914, %v919
    %s922 = sld [smem:[#allocation7 + $0x8]]
    %v923 = vstv %s922
    %v924 = vmul.f32 %v920, %v923
    %v925 = vadd.f32 %v924, 0.0
    %s926 = sld [smem:[#allocation7 + $0x9]]
    %v927 = vstv %s926
    %v928 = vmul.f32 %v921, %v927
    %v929 = vadd.f32 %v925, %v928
    %s930 = sld [smem:[#allocation7 + $0xa]]
    %v931 = vstv %s930
    %v932 = vmul.f32 %v920, %v931
    %v933 = vadd.f32 %v932, 0.0
    %s934 = sld [smem:[#allocation7 + $0xb]]
    %v935 = vstv %s934
    %v936 = vmul.f32 %v921, %v935
    %v937 = vadd.f32 %v933, %v936
    %s938 = sld [smem:[#allocation7 + $0xc]]
    %v939 = vstv %s938
    %v940 = vmul.f32 %v920, %v939
    %v941 = vadd.f32 %v940, 0.0
    %s942 = sld [smem:[#allocation7 + $0xd]]
    %v943 = vstv %s942
    %v944 = vmul.f32 %v921, %v943
    %v945 = vadd.f32 %v941, %v944
    %s946 = sld [smem:[#allocation7 + $0xe]]
    %v947 = vstv %s946
    %v948 = vmul.f32 %v920, %v947
    %v949 = vadd.f32 %v948, 0.0
    %s950 = sld [smem:[#allocation7 + $0xf]]
    %v951 = vstv %s950
    %v952 = vmul.f32 %v921, %v951
    %v953 = vadd.f32 %v949, %v952
    %v954 = vmul.f32 %v929, %v889
    %v955 = vadd.f32 %v954, 0.0
    %v956 = vmul.f32 %v937, %v893
    %v957 = vadd.f32 %v955, %v956
    %v958 = vmul.f32 %v945, %v889
    %v959 = vadd.f32 %v958, 0.0
    %v960 = vmul.f32 %v953, %v893
    %v961 = vadd.f32 %v959, %v960
    %v962 = vmul.f32 %v957, %v957
    %v963 = vadd.f32 %v962, 0.0
    %v964 = vmul.f32 %v961, %v961
    %v965 = vadd.f32 %v963, %v964
    %v966 = vrsqrt.pop %v965
    %v967 = vmul.f32 %v965, %v966
    %vm968 = vcmp.eq.f32.partialorder %v965, inf
    %v969 = vsel %vm968, %v965, %v967
    %vm970 = vcmp.eq.f32.partialorder %v965, 0.0
    %v971 = vand.u32 %v965, 2147483648
    %v972 = vsel %vm970, %v971, %v969
    %v973 = vadd.f32 %v972, 1e-06
    %v974 = vrcp.pop %v973
    %v975 = vmul.f32 %v957, %v974
    %976 = vst [vmem:[#allocation13] sm:$0xff] %v975
    %v977 = vmul.f32 %v961, %v974
    %s978 = scalar_lea.vmem [#allocation13], 8
    %979 = vst [vmem:[%s978] sm:$0xff] %v977
    %v980 = vld [vmem:[#allocation3] sm:$0xff]
    %v981 = vld [vmem:[%s64] sm:$0xff]
    %v982 = vld [vmem:[#allocation13] sm:$0xff]
    %v983 = vld [vmem:[%s978] sm:$0xff]
    %s984 = sld [smem:[#allocation8]]
    %v985 = vstv %s984
    %v986 = vmul.f32 %v985, %v982
    %v987 = vadd.f32 %v986, 0.0
    %s988 = sld [smem:[#allocation8 + $0x4]]
    %v989 = vstv %s988
    %v990 = vmul.f32 %v989, %v983
    %v991 = vadd.f32 %v987, %v990
    %s992 = sld [smem:[#allocation8 + $0x1]]
    %v993 = vstv %s992
    %v994 = vmul.f32 %v993, %v982
    %v995 = vadd.f32 %v994, 0.0
    %s996 = sld [smem:[#allocation8 + $0x5]]
    %v997 = vstv %s996
    %v998 = vmul.f32 %v997, %v983
    %v999 = vadd.f32 %v995, %v998
    %s1000 = sld [smem:[#allocation8 + $0x2]]
    %v1001 = vstv %s1000
    %v1002 = vmul.f32 %v1001, %v982
    %v1003 = vadd.f32 %v1002, 0.0
    %s1004 = sld [smem:[#allocation8 + $0x6]]
    %v1005 = vstv %s1004
    %v1006 = vmul.f32 %v1005, %v983
    %v1007 = vadd.f32 %v1003, %v1006
    %s1008 = sld [smem:[#allocation8 + $0x3]]
    %v1009 = vstv %s1008
    %v1010 = vmul.f32 %v1009, %v982
    %v1011 = vadd.f32 %v1010, 0.0
    %s1012 = sld [smem:[#allocation8 + $0x7]]
    %v1013 = vstv %s1012
    %v1014 = vmul.f32 %v1013, %v983
    %v1015 = vadd.f32 %v1011, %v1014
    %v1016 = vmul.f32 %v991, %v991
    %v1017 = vadd.f32 %v1016, 0.0
    %v1018 = vmul.f32 %v999, %v999
    %v1019 = vadd.f32 %v1017, %v1018
    %v1020 = vmul.f32 %v1007, %v1007
    %v1021 = vadd.f32 %v1019, %v1020
    %v1022 = vmul.f32 %v1015, %v1015
    %v1023 = vadd.f32 %v1021, %v1022
    %v1024 = vrsqrt.pop %v1023
    %v1025 = vmul.f32 %v1023, %v1024
    %vm1026 = vcmp.eq.f32.partialorder %v1023, inf
    %v1027 = vsel %vm1026, %v1023, %v1025
    %vm1028 = vcmp.eq.f32.partialorder %v1023, 0.0
    %v1029 = vand.u32 %v1023, 2147483648
    %v1030 = vsel %vm1028, %v1029, %v1027
    %v1031 = vadd.f32 %v1030, 1e-06
    %v1032 = vrcp.pop %v1031
    %v1033 = vstv %s62
    %v1034 = vmul.f32 %v1033, %v1032
    %vm1035 = vcmp.lt.f32.partialorder %v1031, inf
    %v1036 = vmul.f32 %v991, %v980
    %v1037 = vadd.f32 %v1036, 0.0
    %v1038 = vmul.f32 %v999, %v981
    %v1039 = vadd.f32 %v1037, %v1038
    %v1040 = vmul.f32 %v1039, %v1034
    %v1041 = vsel %vm1035, %v1040, 0.0
    %vm1042 = vcmp.ge.f32.partialorder %v1041, 0.0
    %v1043 = vmul.f32 %v1041, 1e-05
    %v1044 = vsel %vm1042, %v1041, %v1043
    %v1045 = vand.u32 2147483647, %v1044
    %v1046 = vmul.f32 %v1007, %v980
    %v1047 = vadd.f32 %v1046, 0.0
    %v1048 = vmul.f32 %v1015, %v981
    %v1049 = vadd.f32 %v1047, %v1048
    %v1050 = vmul.f32 %v1049, %v1034
    %v1051 = vsel %vm1035, %v1050, 0.0
    %vm1052 = vcmp.ge.f32.partialorder %v1051, 0.0
    %v1053 = vmul.f32 %v1051, 1e-05
    %v1054 = vsel %vm1052, %v1051, %v1053
    %v1055 = vand.u32 2147483647, %v1054
    %v1056 = vadd.f32 %v1045, 0.0
    %v1057 = vadd.f32 %v1056, %v1055
    %v1058 = vrcp.pop %v1057
    %v1059 = vmul.f32 %v1045, %v1058
    %1060 = vst [vmem:[#allocation10] sm:$0xff] %v1059
    %v1061 = vmul.f32 %v1055, %v1058
    %s1062 = scalar_lea.vmem [#allocation10], 8
    %1063 = vst [vmem:[%s1062] sm:$0xff] %v1061
    %v1064 = vld [vmem:[%s107] sm:$0xff]
    %v1065 = vld [vmem:[%s109] sm:$0xff]
    %v1066 = vld [vmem:[#allocation11] sm:$0xff]
    %v1067 = vld [vmem:[%s105] sm:$0xff]
    %v1068 = vld [vmem:[%s908] sm:$0xff]
    %v1069 = vld [vmem:[%s911] sm:$0xff]
    %s1070 = sld [smem:[#allocation8 + $0x10]]
    %v1071 = vstv %s1070
    %v1072 = vmul.f32 %v1066, %v1071
    %v1073 = vmul.f32 %v1072, %v1068
    %v1074 = vadd.f32 %v1073, 0.0
    %s1075 = sld [smem:[#allocation8 + $0x14]]
    %v1076 = vstv %s1075
    %v1077 = vmul.f32 %v1066, %v1076
    %v1078 = vmul.f32 %v1077, %v1069
    %v1079 = vadd.f32 %v1074, %v1078
    %s1080 = sld [smem:[#allocation8 + $0x18]]
    %v1081 = vstv %s1080
    %v1082 = vmul.f32 %v1067, %v1081
    %v1083 = vmul.f32 %v1082, %v1068
    %v1084 = vadd.f32 %v1079, %v1083
    %s1085 = sld [smem:[#allocation8 + $0x1c]]
    %v1086 = vstv %s1085
    %v1087 = vmul.f32 %v1067, %v1086
    %v1088 = vmul.f32 %v1087, %v1069
    %v1089 = vadd.f32 %v1084, %v1088
    %s1090 = sld [smem:[#allocation8 + $0x11]]
    %v1091 = vstv %s1090
    %v1092 = vmul.f32 %v1066, %v1091
    %v1093 = vmul.f32 %v1092, %v1068
    %v1094 = vadd.f32 %v1093, 0.0
    %s1095 = sld [smem:[#allocation8 + $0x15]]
    %v1096 = vstv %s1095
    %v1097 = vmul.f32 %v1066, %v1096
    %v1098 = vmul.f32 %v1097, %v1069
    %v1099 = vadd.f32 %v1094, %v1098
    %s1100 = sld [smem:[#allocation8 + $0x19]]
    %v1101 = vstv %s1100
    %v1102 = vmul.f32 %v1067, %v1101
    %v1103 = vmul.f32 %v1102, %v1068
    %v1104 = vadd.f32 %v1099, %v1103
    %s1105 = sld [smem:[#allocation8 + $0x1d]]
    %v1106 = vstv %s1105
    %v1107 = vmul.f32 %v1067, %v1106
    %v1108 = vmul.f32 %v1107, %v1069
    %v1109 = vadd.f32 %v1104, %v1108
    %s1110 = sld [smem:[#allocation8 + $0x12]]
    %v1111 = vstv %s1110
    %v1112 = vmul.f32 %v1066, %v1111
    %v1113 = vmul.f32 %v1112, %v1068
    %v1114 = vadd.f32 %v1113, 0.0
    %s1115 = sld [smem:[#allocation8 + $0x16]]
    %v1116 = vstv %s1115
    %v1117 = vmul.f32 %v1066, %v1116
    %v1118 = vmul.f32 %v1117, %v1069
    %v1119 = vadd.f32 %v1114, %v1118
    %s1120 = sld [smem:[#allocation8 + $0x1a]]
    %v1121 = vstv %s1120
    %v1122 = vmul.f32 %v1067, %v1121
    %v1123 = vmul.f32 %v1122, %v1068
    %v1124 = vadd.f32 %v1119, %v1123
    %s1125 = sld [smem:[#allocation8 + $0x1e]]
    %v1126 = vstv %s1125
    %v1127 = vmul.f32 %v1067, %v1126
    %v1128 = vmul.f32 %v1127, %v1069
    %v1129 = vadd.f32 %v1124, %v1128
    %s1130 = sld [smem:[#allocation8 + $0x13]]
    %v1131 = vstv %s1130
    %v1132 = vmul.f32 %v1066, %v1131
    %v1133 = vmul.f32 %v1132, %v1068
    %v1134 = vadd.f32 %v1133, 0.0
    %s1135 = sld [smem:[#allocation8 + $0x17]]
    %v1136 = vstv %s1135
    %v1137 = vmul.f32 %v1066, %v1136
    %v1138 = vmul.f32 %v1137, %v1069
    %v1139 = vadd.f32 %v1134, %v1138
    %s1140 = sld [smem:[#allocation8 + $0x1b]]
    %v1141 = vstv %s1140
    %v1142 = vmul.f32 %v1067, %v1141
    %v1143 = vmul.f32 %v1142, %v1068
    %v1144 = vadd.f32 %v1139, %v1143
    %s1145 = sld [smem:[#allocation8 + $0x1f]]
    %v1146 = vstv %s1145
    %v1147 = vmul.f32 %v1067, %v1146
    %v1148 = vmul.f32 %v1147, %v1069
    %v1149 = vadd.f32 %v1144, %v1148
    %v1150 = vmul.f32 %v1089, %v1089
    %v1151 = vadd.f32 %v1150, 0.0
    %v1152 = vmul.f32 %v1109, %v1109
    %v1153 = vadd.f32 %v1151, %v1152
    %v1154 = vmul.f32 %v1129, %v1129
    %v1155 = vadd.f32 %v1153, %v1154
    %v1156 = vmul.f32 %v1149, %v1149
    %v1157 = vadd.f32 %v1155, %v1156
    %v1158 = vrsqrt.pop %v1157
    %v1159 = vmul.f32 %v1157, %v1158
    %vm1160 = vcmp.eq.f32.partialorder %v1157, inf
    %v1161 = vsel %vm1160, %v1157, %v1159
    %vm1162 = vcmp.eq.f32.partialorder %v1157, 0.0
    %v1163 = vand.u32 %v1157, 2147483648
    %v1164 = vsel %vm1162, %v1163, %v1161
    %v1165 = vadd.f32 %v1164, 1e-06
    %v1166 = vrcp.pop %v1165
    %v1167 = vmul.f32 %v1033, %v1166
    %vm1168 = vcmp.lt.f32.partialorder %v1165, inf
    %v1169 = vmul.f32 %v1089, %v1064
    %v1170 = vadd.f32 %v1169, 0.0
    %v1171 = vmul.f32 %v1109, %v1065
    %v1172 = vadd.f32 %v1170, %v1171
    %v1173 = vmul.f32 %v1172, %v1167
    %v1174 = vsel %vm1168, %v1173, 0.0
    %vm1175 = vcmp.ge.f32.partialorder %v1174, 0.0
    %v1176 = vmul.f32 %v1174, 1e-05
    %v1177 = vsel %vm1175, %v1174, %v1176
    %v1178 = vand.u32 2147483647, %v1177
    %v1179 = vmul.f32 %v1129, %v1064
    %v1180 = vadd.f32 %v1179, 0.0
    %v1181 = vmul.f32 %v1149, %v1065
    %v1182 = vadd.f32 %v1180, %v1181
    %v1183 = vmul.f32 %v1182, %v1167
    %v1184 = vsel %vm1168, %v1183, 0.0
    %vm1185 = vcmp.ge.f32.partialorder %v1184, 0.0
    %v1186 = vmul.f32 %v1184, 1e-05
    %v1187 = vsel %vm1185, %v1184, %v1186
    %v1188 = vand.u32 2147483647, %v1187
    %v1189 = vadd.f32 %v1178, 0.0
    %v1190 = vadd.f32 %v1189, %v1188
    %v1191 = vrcp.pop %v1190
    %v1192 = vmul.f32 %v1178, %v1191
    %s1193 = scalar_lea.vmem [#allocation10], 16
    %1194 = vst [vmem:[%s1193] sm:$0xff] %v1192
    %v1195 = vmul.f32 %v1188, %v1191
    %s1196 = scalar_lea.vmem [#allocation10], 24
    %1197 = vst [vmem:[%s1196] sm:$0xff] %v1195
    %v1198 = vld [vmem:[%s177] sm:$0xff]
    %v1199 = vld [vmem:[%s179] sm:$0xff]
    %v1200 = vld [vmem:[%s172] sm:$0xff]
    %v1201 = vld [vmem:[%s175] sm:$0xff]
    %v1202 = vld [vmem:[%s840] sm:$0xff]
    %v1203 = vld [vmem:[%s843] sm:$0xff]
    %s1204 = sld [smem:[#allocation8 + $0x20]]
    %v1205 = vstv %s1204
    %v1206 = vmul.f32 %v1200, %v1205
    %v1207 = vmul.f32 %v1206, %v1202
    %v1208 = vadd.f32 %v1207, 0.0
    %s1209 = sld [smem:[#allocation8 + $0x24]]
    %v1210 = vstv %s1209
    %v1211 = vmul.f32 %v1200, %v1210
    %v1212 = vmul.f32 %v1211, %v1203
    %v1213 = vadd.f32 %v1208, %v1212
    %s1214 = sld [smem:[#allocation8 + $0x28]]
    %v1215 = vstv %s1214
    %v1216 = vmul.f32 %v1201, %v1215
    %v1217 = vmul.f32 %v1216, %v1202
    %v1218 = vadd.f32 %v1213, %v1217
    %s1219 = sld [smem:[#allocation8 + $0x2c]]
    %v1220 = vstv %s1219
    %v1221 = vmul.f32 %v1201, %v1220
    %v1222 = vmul.f32 %v1221, %v1203
    %v1223 = vadd.f32 %v1218, %v1222
    %s1224 = sld [smem:[#allocation8 + $0x21]]
    %v1225 = vstv %s1224
    %v1226 = vmul.f32 %v1200, %v1225
    %v1227 = vmul.f32 %v1226, %v1202
    %v1228 = vadd.f32 %v1227, 0.0
    %s1229 = sld [smem:[#allocation8 + $0x25]]
    %v1230 = vstv %s1229
    %v1231 = vmul.f32 %v1200, %v1230
    %v1232 = vmul.f32 %v1231, %v1203
    %v1233 = vadd.f32 %v1228, %v1232
    %s1234 = sld [smem:[#allocation8 + $0x29]]
    %v1235 = vstv %s1234
    %v1236 = vmul.f32 %v1201, %v1235
    %v1237 = vmul.f32 %v1236, %v1202
    %v1238 = vadd.f32 %v1233, %v1237
    %s1239 = sld [smem:[#allocation8 + $0x2d]]
    %v1240 = vstv %s1239
    %v1241 = vmul.f32 %v1201, %v1240
    %v1242 = vmul.f32 %v1241, %v1203
    %v1243 = vadd.f32 %v1238, %v1242
    %s1244 = sld [smem:[#allocation8 + $0x22]]
    %v1245 = vstv %s1244
    %v1246 = vmul.f32 %v1200, %v1245
    %v1247 = vmul.f32 %v1246, %v1202
    %v1248 = vadd.f32 %v1247, 0.0
    %s1249 = sld [smem:[#allocation8 + $0x26]]
    %v1250 = vstv %s1249
    %v1251 = vmul.f32 %v1200, %v1250
    %v1252 = vmul.f32 %v1251, %v1203
    %v1253 = vadd.f32 %v1248, %v1252
    %s1254 = sld [smem:[#allocation8 + $0x2a]]
    %v1255 = vstv %s1254
    %v1256 = vmul.f32 %v1201, %v1255
    %v1257 = vmul.f32 %v1256, %v1202
    %v1258 = vadd.f32 %v1253, %v1257
    %s1259 = sld [smem:[#allocation8 + $0x2e]]
    %v1260 = vstv %s1259
    %v1261 = vmul.f32 %v1201, %v1260
    %v1262 = vmul.f32 %v1261, %v1203
    %v1263 = vadd.f32 %v1258, %v1262
    %s1264 = sld [smem:[#allocation8 + $0x23]]
    %v1265 = vstv %s1264
    %v1266 = vmul.f32 %v1200, %v1265
    %v1267 = vmul.f32 %v1266, %v1202
    %v1268 = vadd.f32 %v1267, 0.0
    %s1269 = sld [smem:[#allocation8 + $0x27]]
    %v1270 = vstv %s1269
    %v1271 = vmul.f32 %v1200, %v1270
    %v1272 = vmul.f32 %v1271, %v1203
    %v1273 = vadd.f32 %v1268, %v1272
    %s1274 = sld [smem:[#allocation8 + $0x2b]]
    %v1275 = vstv %s1274
    %v1276 = vmul.f32 %v1201, %v1275
    %v1277 = vmul.f32 %v1276, %v1202
    %v1278 = vadd.f32 %v1273, %v1277
    %s1279 = sld [smem:[#allocation8 + $0x2f]]
    %v1280 = vstv %s1279
    %v1281 = vmul.f32 %v1201, %v1280
    %v1282 = vmul.f32 %v1281, %v1203
    %v1283 = vadd.f32 %v1278, %v1282
    %v1284 = vmul.f32 %v1223, %v1223
    %v1285 = vadd.f32 %v1284, 0.0
    %v1286 = vmul.f32 %v1243, %v1243
    %v1287 = vadd.f32 %v1285, %v1286
    %v1288 = vmul.f32 %v1263, %v1263
    %v1289 = vadd.f32 %v1287, %v1288
    %v1290 = vmul.f32 %v1283, %v1283
    %v1291 = vadd.f32 %v1289, %v1290
    %v1292 = vrsqrt.pop %v1291
    %v1293 = vmul.f32 %v1291, %v1292
    %vm1294 = vcmp.eq.f32.partialorder %v1291, inf
    %v1295 = vsel %vm1294, %v1291, %v1293
    %vm1296 = vcmp.eq.f32.partialorder %v1291, 0.0
    %v1297 = vand.u32 %v1291, 2147483648
    %v1298 = vsel %vm1296, %v1297, %v1295
    %v1299 = vadd.f32 %v1298, 1e-06
    %v1300 = vrcp.pop %v1299
    %v1301 = vmul.f32 %v1033, %v1300
    %vm1302 = vcmp.lt.f32.partialorder %v1299, inf
    %v1303 = vmul.f32 %v1223, %v1198
    %v1304 = vadd.f32 %v1303, 0.0
    %v1305 = vmul.f32 %v1243, %v1199
    %v1306 = vadd.f32 %v1304, %v1305
    %v1307 = vmul.f32 %v1306, %v1301
    %v1308 = vsel %vm1302, %v1307, 0.0
    %vm1309 = vcmp.ge.f32.partialorder %v1308, 0.0
    %v1310 = vmul.f32 %v1308, 1e-05
    %v1311 = vsel %vm1309, %v1308, %v1310
    %v1312 = vand.u32 2147483647, %v1311
    %v1313 = vmul.f32 %v1263, %v1198
    %v1314 = vadd.f32 %v1313, 0.0
    %v1315 = vmul.f32 %v1283, %v1199
    %v1316 = vadd.f32 %v1314, %v1315
    %v1317 = vmul.f32 %v1316, %v1301
    %v1318 = vsel %vm1302, %v1317, 0.0
    %vm1319 = vcmp.ge.f32.partialorder %v1318, 0.0
    %v1320 = vmul.f32 %v1318, 1e-05
    %v1321 = vsel %vm1319, %v1318, %v1320
    %v1322 = vand.u32 2147483647, %v1321
    %v1323 = vadd.f32 %v1312, 0.0
    %v1324 = vadd.f32 %v1323, %v1322
    %v1325 = vrcp.pop %v1324
    %v1326 = vmul.f32 %v1312, %v1325
    %s1327 = scalar_lea.vmem [#allocation10], 32
    %1328 = vst [vmem:[%s1327] sm:$0xff] %v1326
    %v1329 = vmul.f32 %v1322, %v1325
    %s1330 = scalar_lea.vmem [#allocation10], 40
    %1331 = vst [vmem:[%s1330] sm:$0xff] %v1329
    %v1332 = vld [vmem:[%s247] sm:$0xff]
    %v1333 = vld [vmem:[%s249] sm:$0xff]
    %v1334 = vld [vmem:[%s242] sm:$0xff]
    %v1335 = vld [vmem:[%s245] sm:$0xff]
    %v1336 = vld [vmem:[%s772] sm:$0xff]
    %v1337 = vld [vmem:[%s775] sm:$0xff]
    %s1338 = sld [smem:[#allocation8 + $0x30]]
    %v1339 = vstv %s1338
    %v1340 = vmul.f32 %v1334, %v1339
    %v1341 = vmul.f32 %v1340, %v1336
    %v1342 = vadd.f32 %v1341, 0.0
    %s1343 = sld [smem:[#allocation8 + $0x34]]
    %v1344 = vstv %s1343
    %v1345 = vmul.f32 %v1334, %v1344
    %v1346 = vmul.f32 %v1345, %v1337
    %v1347 = vadd.f32 %v1342, %v1346
    %s1348 = sld [smem:[#allocation8 + $0x38]]
    %v1349 = vstv %s1348
    %v1350 = vmul.f32 %v1335, %v1349
    %v1351 = vmul.f32 %v1350, %v1336
    %v1352 = vadd.f32 %v1347, %v1351
    %s1353 = sld [smem:[#allocation8 + $0x3c]]
    %v1354 = vstv %s1353
    %v1355 = vmul.f32 %v1335, %v1354
    %v1356 = vmul.f32 %v1355, %v1337
    %v1357 = vadd.f32 %v1352, %v1356
    %s1358 = sld [smem:[#allocation8 + $0x31]]
    %v1359 = vstv %s1358
    %v1360 = vmul.f32 %v1334, %v1359
    %v1361 = vmul.f32 %v1360, %v1336
    %v1362 = vadd.f32 %v1361, 0.0
    %s1363 = sld [smem:[#allocation8 + $0x35]]
    %v1364 = vstv %s1363
    %v1365 = vmul.f32 %v1334, %v1364
    %v1366 = vmul.f32 %v1365, %v1337
    %v1367 = vadd.f32 %v1362, %v1366
    %s1368 = sld [smem:[#allocation8 + $0x39]]
    %v1369 = vstv %s1368
    %v1370 = vmul.f32 %v1335, %v1369
    %v1371 = vmul.f32 %v1370, %v1336
    %v1372 = vadd.f32 %v1367, %v1371
    %s1373 = sld [smem:[#allocation8 + $0x3d]]
    %v1374 = vstv %s1373
    %v1375 = vmul.f32 %v1335, %v1374
    %v1376 = vmul.f32 %v1375, %v1337
    %v1377 = vadd.f32 %v1372, %v1376
    %s1378 = sld [smem:[#allocation8 + $0x32]]
    %v1379 = vstv %s1378
    %v1380 = vmul.f32 %v1334, %v1379
    %v1381 = vmul.f32 %v1380, %v1336
    %v1382 = vadd.f32 %v1381, 0.0
    %s1383 = sld [smem:[#allocation8 + $0x36]]
    %v1384 = vstv %s1383
    %v1385 = vmul.f32 %v1334, %v1384
    %v1386 = vmul.f32 %v1385, %v1337
    %v1387 = vadd.f32 %v1382, %v1386
    %s1388 = sld [smem:[#allocation8 + $0x3a]]
    %v1389 = vstv %s1388
    %v1390 = vmul.f32 %v1335, %v1389
    %v1391 = vmul.f32 %v1390, %v1336
    %v1392 = vadd.f32 %v1387, %v1391
    %s1393 = sld [smem:[#allocation8 + $0x3e]]
    %v1394 = vstv %s1393
    %v1395 = vmul.f32 %v1335, %v1394
    %v1396 = vmul.f32 %v1395, %v1337
    %v1397 = vadd.f32 %v1392, %v1396
    %s1398 = sld [smem:[#allocation8 + $0x33]]
    %v1399 = vstv %s1398
    %v1400 = vmul.f32 %v1334, %v1399
    %v1401 = vmul.f32 %v1400, %v1336
    %v1402 = vadd.f32 %v1401, 0.0
    %s1403 = sld [smem:[#allocation8 + $0x37]]
    %v1404 = vstv %s1403
    %v1405 = vmul.f32 %v1334, %v1404
    %v1406 = vmul.f32 %v1405, %v1337
    %v1407 = vadd.f32 %v1402, %v1406
    %s1408 = sld [smem:[#allocation8 + $0x3b]]
    %v1409 = vstv %s1408
    %v1410 = vmul.f32 %v1335, %v1409
    %v1411 = vmul.f32 %v1410, %v1336
    %v1412 = vadd.f32 %v1407, %v1411
    %s1413 = sld [smem:[#allocation8 + $0x3f]]
    %v1414 = vstv %s1413
    %v1415 = vmul.f32 %v1335, %v1414
    %v1416 = vmul.f32 %v1415, %v1337
    %v1417 = vadd.f32 %v1412, %v1416
    %v1418 = vmul.f32 %v1357, %v1357
    %v1419 = vadd.f32 %v1418, 0.0
    %v1420 = vmul.f32 %v1377, %v1377
    %v1421 = vadd.f32 %v1419, %v1420
    %v1422 = vmul.f32 %v1397, %v1397
    %v1423 = vadd.f32 %v1421, %v1422
    %v1424 = vmul.f32 %v1417, %v1417
    %v1425 = vadd.f32 %v1423, %v1424
    %v1426 = vrsqrt.pop %v1425
    %v1427 = vmul.f32 %v1425, %v1426
    %vm1428 = vcmp.eq.f32.partialorder %v1425, inf
    %v1429 = vsel %vm1428, %v1425, %v1427
    %vm1430 = vcmp.eq.f32.partialorder %v1425, 0.0
    %v1431 = vand.u32 %v1425, 2147483648
    %v1432 = vsel %vm1430, %v1431, %v1429
    %v1433 = vadd.f32 %v1432, 1e-06
    %v1434 = vrcp.pop %v1433
    %v1435 = vmul.f32 %v1033, %v1434
    %vm1436 = vcmp.lt.f32.partialorder %v1433, inf
    %v1437 = vmul.f32 %v1357, %v1332
    %v1438 = vadd.f32 %v1437, 0.0
    %v1439 = vmul.f32 %v1377, %v1333
    %v1440 = vadd.f32 %v1438, %v1439
    %v1441 = vmul.f32 %v1440, %v1435
    %v1442 = vsel %vm1436, %v1441, 0.0
    %vm1443 = vcmp.ge.f32.partialorder %v1442, 0.0
    %v1444 = vmul.f32 %v1442, 1e-05
    %v1445 = vsel %vm1443, %v1442, %v1444
    %v1446 = vand.u32 2147483647, %v1445
    %v1447 = vmul.f32 %v1397, %v1332
    %v1448 = vadd.f32 %v1447, 0.0
    %v1449 = vmul.f32 %v1417, %v1333
    %v1450 = vadd.f32 %v1448, %v1449
    %v1451 = vmul.f32 %v1450, %v1435
    %v1452 = vsel %vm1436, %v1451, 0.0
    %vm1453 = vcmp.ge.f32.partialorder %v1452, 0.0
    %v1454 = vmul.f32 %v1452, 1e-05
    %v1455 = vsel %vm1453, %v1452, %v1454
    %v1456 = vand.u32 2147483647, %v1455
    %v1457 = vadd.f32 %v1446, 0.0
    %v1458 = vadd.f32 %v1457, %v1456
    %v1459 = vrcp.pop %v1458
    %v1460 = vmul.f32 %v1446, %v1459
    %s1461 = scalar_lea.vmem [#allocation10], 48
    %1462 = vst [vmem:[%s1461] sm:$0xff] %v1460
    %v1463 = vmul.f32 %v1456, %v1459
    %s1464 = scalar_lea.vmem [#allocation10], 56
    %1465 = vst [vmem:[%s1464] sm:$0xff] %v1463
    %v1466 = vld [vmem:[%s317] sm:$0xff]
    %v1467 = vld [vmem:[%s319] sm:$0xff]
    %v1468 = vld [vmem:[%s312] sm:$0xff]
    %v1469 = vld [vmem:[%s315] sm:$0xff]
    %v1470 = vld [vmem:[%s704] sm:$0xff]
    %v1471 = vld [vmem:[%s707] sm:$0xff]
    %s1472 = sld [smem:[#allocation8 + $0x40]]
    %v1473 = vstv %s1472
    %v1474 = vmul.f32 %v1468, %v1473
    %v1475 = vmul.f32 %v1474, %v1470
    %v1476 = vadd.f32 %v1475, 0.0
    %s1477 = sld [smem:[#allocation8 + $0x44]]
    %v1478 = vstv %s1477
    %v1479 = vmul.f32 %v1468, %v1478
    %v1480 = vmul.f32 %v1479, %v1471
    %v1481 = vadd.f32 %v1476, %v1480
    %s1482 = sld [smem:[#allocation8 + $0x48]]
    %v1483 = vstv %s1482
    %v1484 = vmul.f32 %v1469, %v1483
    %v1485 = vmul.f32 %v1484, %v1470
    %v1486 = vadd.f32 %v1481, %v1485
    %s1487 = sld [smem:[#allocation8 + $0x4c]]
    %v1488 = vstv %s1487
    %v1489 = vmul.f32 %v1469, %v1488
    %v1490 = vmul.f32 %v1489, %v1471
    %v1491 = vadd.f32 %v1486, %v1490
    %s1492 = sld [smem:[#allocation8 + $0x41]]
    %v1493 = vstv %s1492
    %v1494 = vmul.f32 %v1468, %v1493
    %v1495 = vmul.f32 %v1494, %v1470
    %v1496 = vadd.f32 %v1495, 0.0
    %s1497 = sld [smem:[#allocation8 + $0x45]]
    %v1498 = vstv %s1497
    %v1499 = vmul.f32 %v1468, %v1498
    %v1500 = vmul.f32 %v1499, %v1471
    %v1501 = vadd.f32 %v1496, %v1500
    %s1502 = sld [smem:[#allocation8 + $0x49]]
    %v1503 = vstv %s1502
    %v1504 = vmul.f32 %v1469, %v1503
    %v1505 = vmul.f32 %v1504, %v1470
    %v1506 = vadd.f32 %v1501, %v1505
    %s1507 = sld [smem:[#allocation8 + $0x4d]]
    %v1508 = vstv %s1507
    %v1509 = vmul.f32 %v1469, %v1508
    %v1510 = vmul.f32 %v1509, %v1471
    %v1511 = vadd.f32 %v1506, %v1510
    %s1512 = sld [smem:[#allocation8 + $0x42]]
    %v1513 = vstv %s1512
    %v1514 = vmul.f32 %v1468, %v1513
    %v1515 = vmul.f32 %v1514, %v1470
    %v1516 = vadd.f32 %v1515, 0.0
    %s1517 = sld [smem:[#allocation8 + $0x46]]
    %v1518 = vstv %s1517
    %v1519 = vmul.f32 %v1468, %v1518
    %v1520 = vmul.f32 %v1519, %v1471
    %v1521 = vadd.f32 %v1516, %v1520
    %s1522 = sld [smem:[#allocation8 + $0x4a]]
    %v1523 = vstv %s1522
    %v1524 = vmul.f32 %v1469, %v1523
    %v1525 = vmul.f32 %v1524, %v1470
    %v1526 = vadd.f32 %v1521, %v1525
    %s1527 = sld [smem:[#allocation8 + $0x4e]]
    %v1528 = vstv %s1527
    %v1529 = vmul.f32 %v1469, %v1528
    %v1530 = vmul.f32 %v1529, %v1471
    %v1531 = vadd.f32 %v1526, %v1530
    %s1532 = sld [smem:[#allocation8 + $0x43]]
    %v1533 = vstv %s1532
    %v1534 = vmul.f32 %v1468, %v1533
    %v1535 = vmul.f32 %v1534, %v1470
    %v1536 = vadd.f32 %v1535, 0.0
    %s1537 = sld [smem:[#allocation8 + $0x47]]
    %v1538 = vstv %s1537
    %v1539 = vmul.f32 %v1468, %v1538
    %v1540 = vmul.f32 %v1539, %v1471
    %v1541 = vadd.f32 %v1536, %v1540
    %s1542 = sld [smem:[#allocation8 + $0x4b]]
    %v1543 = vstv %s1542
    %v1544 = vmul.f32 %v1469, %v1543
    %v1545 = vmul.f32 %v1544, %v1470
    %v1546 = vadd.f32 %v1541, %v1545
    %s1547 = sld [smem:[#allocation8 + $0x4f]]
    %v1548 = vstv %s1547
    %v1549 = vmul.f32 %v1469, %v1548
    %v1550 = vmul.f32 %v1549, %v1471
    %v1551 = vadd.f32 %v1546, %v1550
    %v1552 = vmul.f32 %v1491, %v1491
    %v1553 = vadd.f32 %v1552, 0.0
    %v1554 = vmul.f32 %v1511, %v1511
    %v1555 = vadd.f32 %v1553, %v1554
    %v1556 = vmul.f32 %v1531, %v1531
    %v1557 = vadd.f32 %v1555, %v1556
    %v1558 = vmul.f32 %v1551, %v1551
    %v1559 = vadd.f32 %v1557, %v1558
    %v1560 = vrsqrt.pop %v1559
    %v1561 = vmul.f32 %v1559, %v1560
    %vm1562 = vcmp.eq.f32.partialorder %v1559, inf
    %v1563 = vsel %vm1562, %v1559, %v1561
    %vm1564 = vcmp.eq.f32.partialorder %v1559, 0.0
    %v1565 = vand.u32 %v1559, 2147483648
    %v1566 = vsel %vm1564, %v1565, %v1563
    %v1567 = vadd.f32 %v1566, 1e-06
    %v1568 = vrcp.pop %v1567
    %v1569 = vmul.f32 %v1033, %v1568
    %vm1570 = vcmp.lt.f32.partialorder %v1567, inf
    %v1571 = vmul.f32 %v1491, %v1466
    %v1572 = vadd.f32 %v1571, 0.0
    %v1573 = vmul.f32 %v1511, %v1467
    %v1574 = vadd.f32 %v1572, %v1573
    %v1575 = vmul.f32 %v1574, %v1569
    %v1576 = vsel %vm1570, %v1575, 0.0
    %vm1577 = vcmp.ge.f32.partialorder %v1576, 0.0
    %v1578 = vmul.f32 %v1576, 1e-05
    %v1579 = vsel %vm1577, %v1576, %v1578
    %v1580 = vand.u32 2147483647, %v1579
    %v1581 = vmul.f32 %v1531, %v1466
    %v1582 = vadd.f32 %v1581, 0.0
    %v1583 = vmul.f32 %v1551, %v1467
    %v1584 = vadd.f32 %v1582, %v1583
    %v1585 = vmul.f32 %v1584, %v1569
    %v1586 = vsel %vm1570, %v1585, 0.0
    %vm1587 = vcmp.ge.f32.partialorder %v1586, 0.0
    %v1588 = vmul.f32 %v1586, 1e-05
    %v1589 = vsel %vm1587, %v1586, %v1588
    %v1590 = vand.u32 2147483647, %v1589
    %v1591 = vadd.f32 %v1580, 0.0
    %v1592 = vadd.f32 %v1591, %v1590
    %v1593 = vrcp.pop %v1592
    %v1594 = vmul.f32 %v1580, %v1593
    %s1595 = scalar_lea.vmem [#allocation10], 64
    %1596 = vst [vmem:[%s1595] sm:$0xff] %v1594
    %v1597 = vmul.f32 %v1590, %v1593
    %s1598 = scalar_lea.vmem [#allocation10], 72
    %1599 = vst [vmem:[%s1598] sm:$0xff] %v1597
    %v1600 = vld [vmem:[%s387] sm:$0xff]
    %v1601 = vld [vmem:[%s389] sm:$0xff]
    %v1602 = vld [vmem:[%s382] sm:$0xff]
    %v1603 = vld [vmem:[%s385] sm:$0xff]
    %v1604 = vld [vmem:[%s636] sm:$0xff]
    %v1605 = vld [vmem:[%s639] sm:$0xff]
    %s1606 = sld [smem:[#allocation8 + $0x50]]
    %v1607 = vstv %s1606
    %v1608 = vmul.f32 %v1602, %v1607
    %v1609 = vmul.f32 %v1608, %v1604
    %v1610 = vadd.f32 %v1609, 0.0
    %s1611 = sld [smem:[#allocation8 + $0x54]]
    %v1612 = vstv %s1611
    %v1613 = vmul.f32 %v1602, %v1612
    %v1614 = vmul.f32 %v1613, %v1605
    %v1615 = vadd.f32 %v1610, %v1614
    %s1616 = sld [smem:[#allocation8 + $0x58]]
    %v1617 = vstv %s1616
    %v1618 = vmul.f32 %v1603, %v1617
    %v1619 = vmul.f32 %v1618, %v1604
    %v1620 = vadd.f32 %v1615, %v1619
    %s1621 = sld [smem:[#allocation8 + $0x5c]]
    %v1622 = vstv %s1621
    %v1623 = vmul.f32 %v1603, %v1622
    %v1624 = vmul.f32 %v1623, %v1605
    %v1625 = vadd.f32 %v1620, %v1624
    %s1626 = sld [smem:[#allocation8 + $0x51]]
    %v1627 = vstv %s1626
    %v1628 = vmul.f32 %v1602, %v1627
    %v1629 = vmul.f32 %v1628, %v1604
    %v1630 = vadd.f32 %v1629, 0.0
    %s1631 = sld [smem:[#allocation8 + $0x55]]
    %v1632 = vstv %s1631
    %v1633 = vmul.f32 %v1602, %v1632
    %v1634 = vmul.f32 %v1633, %v1605
    %v1635 = vadd.f32 %v1630, %v1634
    %s1636 = sld [smem:[#allocation8 + $0x59]]
    %v1637 = vstv %s1636
    %v1638 = vmul.f32 %v1603, %v1637
    %v1639 = vmul.f32 %v1638, %v1604
    %v1640 = vadd.f32 %v1635, %v1639
    %s1641 = sld [smem:[#allocation8 + $0x5d]]
    %v1642 = vstv %s1641
    %v1643 = vmul.f32 %v1603, %v1642
    %v1644 = vmul.f32 %v1643, %v1605
    %v1645 = vadd.f32 %v1640, %v1644
    %s1646 = sld [smem:[#allocation8 + $0x52]]
    %v1647 = vstv %s1646
    %v1648 = vmul.f32 %v1602, %v1647
    %v1649 = vmul.f32 %v1648, %v1604
    %v1650 = vadd.f32 %v1649, 0.0
    %s1651 = sld [smem:[#allocation8 + $0x56]]
    %v1652 = vstv %s1651
    %v1653 = vmul.f32 %v1602, %v1652
    %v1654 = vmul.f32 %v1653, %v1605
    %v1655 = vadd.f32 %v1650, %v1654
    %s1656 = sld [smem:[#allocation8 + $0x5a]]
    %v1657 = vstv %s1656
    %v1658 = vmul.f32 %v1603, %v1657
    %v1659 = vmul.f32 %v1658, %v1604
    %v1660 = vadd.f32 %v1655, %v1659
    %s1661 = sld [smem:[#allocation8 + $0x5e]]
    %v1662 = vstv %s1661
    %v1663 = vmul.f32 %v1603, %v1662
    %v1664 = vmul.f32 %v1663, %v1605
    %v1665 = vadd.f32 %v1660, %v1664
    %s1666 = sld [smem:[#allocation8 + $0x53]]
    %v1667 = vstv %s1666
    %v1668 = vmul.f32 %v1602, %v1667
    %v1669 = vmul.f32 %v1668, %v1604
    %v1670 = vadd.f32 %v1669, 0.0
    %s1671 = sld [smem:[#allocation8 + $0x57]]
    %v1672 = vstv %s1671
    %v1673 = vmul.f32 %v1602, %v1672
    %v1674 = vmul.f32 %v1673, %v1605
    %v1675 = vadd.f32 %v1670, %v1674
    %s1676 = sld [smem:[#allocation8 + $0x5b]]
    %v1677 = vstv %s1676
    %v1678 = vmul.f32 %v1603, %v1677
    %v1679 = vmul.f32 %v1678, %v1604
    %v1680 = vadd.f32 %v1675, %v1679
    %s1681 = sld [smem:[#allocation8 + $0x5f]]
    %v1682 = vstv %s1681
    %v1683 = vmul.f32 %v1603, %v1682
    %v1684 = vmul.f32 %v1683, %v1605
    %v1685 = vadd.f32 %v1680, %v1684
    %v1686 = vmul.f32 %v1625, %v1625
    %v1687 = vadd.f32 %v1686, 0.0
    %v1688 = vmul.f32 %v1645, %v1645
    %v1689 = vadd.f32 %v1687, %v1688
    %v1690 = vmul.f32 %v1665, %v1665
    %v1691 = vadd.f32 %v1689, %v1690
    %v1692 = vmul.f32 %v1685, %v1685
    %v1693 = vadd.f32 %v1691, %v1692
    %v1694 = vrsqrt.pop %v1693
    %v1695 = vmul.f32 %v1693, %v1694
    %vm1696 = vcmp.eq.f32.partialorder %v1693, inf
    %v1697 = vsel %vm1696, %v1693, %v1695
    %vm1698 = vcmp.eq.f32.partialorder %v1693, 0.0
    %v1699 = vand.u32 %v1693, 2147483648
    %v1700 = vsel %vm1698, %v1699, %v1697
    %v1701 = vadd.f32 %v1700, 1e-06
    %v1702 = vrcp.pop %v1701
    %v1703 = vmul.f32 %v1033, %v1702
    %vm1704 = vcmp.lt.f32.partialorder %v1701, inf
    %v1705 = vmul.f32 %v1625, %v1600
    %v1706 = vadd.f32 %v1705, 0.0
    %v1707 = vmul.f32 %v1645, %v1601
    %v1708 = vadd.f32 %v1706, %v1707
    %v1709 = vmul.f32 %v1708, %v1703
    %v1710 = vsel %vm1704, %v1709, 0.0
    %vm1711 = vcmp.ge.f32.partialorder %v1710, 0.0
    %v1712 = vmul.f32 %v1710, 1e-05
    %v1713 = vsel %vm1711, %v1710, %v1712
    %v1714 = vand.u32 2147483647, %v1713
    %v1715 = vmul.f32 %v1665, %v1600
    %v1716 = vadd.f32 %v1715, 0.0
    %v1717 = vmul.f32 %v1685, %v1601
    %v1718 = vadd.f32 %v1716, %v1717
    %v1719 = vmul.f32 %v1718, %v1703
    %v1720 = vsel %vm1704, %v1719, 0.0
    %vm1721 = vcmp.ge.f32.partialorder %v1720, 0.0
    %v1722 = vmul.f32 %v1720, 1e-05
    %v1723 = vsel %vm1721, %v1720, %v1722
    %v1724 = vand.u32 2147483647, %v1723
    %v1725 = vadd.f32 %v1714, 0.0
    %v1726 = vadd.f32 %v1725, %v1724
    %v1727 = vrcp.pop %v1726
    %v1728 = vmul.f32 %v1714, %v1727
    %s1729 = scalar_lea.vmem [#allocation10], 80
    %1730 = vst [vmem:[%s1729] sm:$0xff] %v1728
    %v1731 = vmul.f32 %v1724, %v1727
    %s1732 = scalar_lea.vmem [#allocation10], 88
    %1733 = vst [vmem:[%s1732] sm:$0xff] %v1731
    %v1734 = vld [vmem:[%s457] sm:$0xff]
    %v1735 = vld [vmem:[%s459] sm:$0xff]
    %v1736 = vld [vmem:[%s452] sm:$0xff]
    %v1737 = vld [vmem:[%s455] sm:$0xff]
    %v1738 = vld [vmem:[%s568] sm:$0xff]
    %v1739 = vld [vmem:[%s571] sm:$0xff]
    %s1740 = sld [smem:[#allocation8 + $0x60]]
    %v1741 = vstv %s1740
    %v1742 = vmul.f32 %v1736, %v1741
    %v1743 = vmul.f32 %v1742, %v1738
    %v1744 = vadd.f32 %v1743, 0.0
    %s1745 = sld [smem:[#allocation8 + $0x64]]
    %v1746 = vstv %s1745
    %v1747 = vmul.f32 %v1736, %v1746
    %v1748 = vmul.f32 %v1747, %v1739
    %v1749 = vadd.f32 %v1744, %v1748
    %s1750 = sld [smem:[#allocation8 + $0x68]]
    %v1751 = vstv %s1750
    %v1752 = vmul.f32 %v1737, %v1751
    %v1753 = vmul.f32 %v1752, %v1738
    %v1754 = vadd.f32 %v1749, %v1753
    %s1755 = sld [smem:[#allocation8 + $0x6c]]
    %v1756 = vstv %s1755
    %v1757 = vmul.f32 %v1737, %v1756
    %v1758 = vmul.f32 %v1757, %v1739
    %v1759 = vadd.f32 %v1754, %v1758
    %s1760 = sld [smem:[#allocation8 + $0x61]]
    %v1761 = vstv %s1760
    %v1762 = vmul.f32 %v1736, %v1761
    %v1763 = vmul.f32 %v1762, %v1738
    %v1764 = vadd.f32 %v1763, 0.0
    %s1765 = sld [smem:[#allocation8 + $0x65]]
    %v1766 = vstv %s1765
    %v1767 = vmul.f32 %v1736, %v1766
    %v1768 = vmul.f32 %v1767, %v1739
    %v1769 = vadd.f32 %v1764, %v1768
    %s1770 = sld [smem:[#allocation8 + $0x69]]
    %v1771 = vstv %s1770
    %v1772 = vmul.f32 %v1737, %v1771
    %v1773 = vmul.f32 %v1772, %v1738
    %v1774 = vadd.f32 %v1769, %v1773
    %s1775 = sld [smem:[#allocation8 + $0x6d]]
    %v1776 = vstv %s1775
    %v1777 = vmul.f32 %v1737, %v1776
    %v1778 = vmul.f32 %v1777, %v1739
    %v1779 = vadd.f32 %v1774, %v1778
    %s1780 = sld [smem:[#allocation8 + $0x62]]
    %v1781 = vstv %s1780
    %v1782 = vmul.f32 %v1736, %v1781
    %v1783 = vmul.f32 %v1782, %v1738
    %v1784 = vadd.f32 %v1783, 0.0
    %s1785 = sld [smem:[#allocation8 + $0x66]]
    %v1786 = vstv %s1785
    %v1787 = vmul.f32 %v1736, %v1786
    %v1788 = vmul.f32 %v1787, %v1739
    %v1789 = vadd.f32 %v1784, %v1788
    %s1790 = sld [smem:[#allocation8 + $0x6a]]
    %v1791 = vstv %s1790
    %v1792 = vmul.f32 %v1737, %v1791
    %v1793 = vmul.f32 %v1792, %v1738
    %v1794 = vadd.f32 %v1789, %v1793
    %s1795 = sld [smem:[#allocation8 + $0x6e]]
    %v1796 = vstv %s1795
    %v1797 = vmul.f32 %v1737, %v1796
    %v1798 = vmul.f32 %v1797, %v1739
    %v1799 = vadd.f32 %v1794, %v1798
    %s1800 = sld [smem:[#allocation8 + $0x63]]
    %v1801 = vstv %s1800
    %v1802 = vmul.f32 %v1736, %v1801
    %v1803 = vmul.f32 %v1802, %v1738
    %v1804 = vadd.f32 %v1803, 0.0
    %s1805 = sld [smem:[#allocation8 + $0x67]]
    %v1806 = vstv %s1805
    %v1807 = vmul.f32 %v1736, %v1806
    %v1808 = vmul.f32 %v1807, %v1739
    %v1809 = vadd.f32 %v1804, %v1808
    %s1810 = sld [smem:[#allocation8 + $0x6b]]
    %v1811 = vstv %s1810
    %v1812 = vmul.f32 %v1737, %v1811
    %v1813 = vmul.f32 %v1812, %v1738
    %v1814 = vadd.f32 %v1809, %v1813
    %s1815 = sld [smem:[#allocation8 + $0x6f]]
    %v1816 = vstv %s1815
    %v1817 = vmul.f32 %v1737, %v1816
    %v1818 = vmul.f32 %v1817, %v1739
    %v1819 = vadd.f32 %v1814, %v1818
    %v1820 = vmul.f32 %v1759, %v1759
    %v1821 = vadd.f32 %v1820, 0.0
    %v1822 = vmul.f32 %v1779, %v1779
    %v1823 = vadd.f32 %v1821, %v1822
    %v1824 = vmul.f32 %v1799, %v1799
    %v1825 = vadd.f32 %v1823, %v1824
    %v1826 = vmul.f32 %v1819, %v1819
    %v1827 = vadd.f32 %v1825, %v1826
    %v1828 = vrsqrt.pop %v1827
    %v1829 = vmul.f32 %v1827, %v1828
    %vm1830 = vcmp.eq.f32.partialorder %v1827, inf
    %v1831 = vsel %vm1830, %v1827, %v1829
    %vm1832 = vcmp.eq.f32.partialorder %v1827, 0.0
    %v1833 = vand.u32 %v1827, 2147483648
    %v1834 = vsel %vm1832, %v1833, %v1831
    %v1835 = vadd.f32 %v1834, 1e-06
    %v1836 = vrcp.pop %v1835
    %v1837 = vmul.f32 %v1033, %v1836
    %vm1838 = vcmp.lt.f32.partialorder %v1835, inf
    %v1839 = vmul.f32 %v1759, %v1734
    %v1840 = vadd.f32 %v1839, 0.0
    %v1841 = vmul.f32 %v1779, %v1735
    %v1842 = vadd.f32 %v1840, %v1841
    %v1843 = vmul.f32 %v1842, %v1837
    %v1844 = vsel %vm1838, %v1843, 0.0
    %vm1845 = vcmp.ge.f32.partialorder %v1844, 0.0
    %v1846 = vmul.f32 %v1844, 1e-05
    %v1847 = vsel %vm1845, %v1844, %v1846
    %v1848 = vand.u32 2147483647, %v1847
    %v1849 = vmul.f32 %v1799, %v1734
    %v1850 = vadd.f32 %v1849, 0.0
    %v1851 = vmul.f32 %v1819, %v1735
    %v1852 = vadd.f32 %v1850, %v1851
    %v1853 = vmul.f32 %v1852, %v1837
    %v1854 = vsel %vm1838, %v1853, 0.0
    %vm1855 = vcmp.ge.f32.partialorder %v1854, 0.0
    %v1856 = vmul.f32 %v1854, 1e-05
    %v1857 = vsel %vm1855, %v1854, %v1856
    %v1858 = vand.u32 2147483647, %v1857
    %v1859 = vadd.f32 %v1848, 0.0
    %v1860 = vadd.f32 %v1859, %v1858
    %v1861 = vrcp.pop %v1860
    %v1862 = vmul.f32 %v1848, %v1861
    %s1863 = scalar_lea.vmem [#allocation10], 96
    %1864 = vst [vmem:[%s1863] sm:$0xff] %v1862
    %v1865 = vmul.f32 %v1858, %v1861
    %s1866 = scalar_lea.vmem [#allocation10], 104
    %1867 = vst [vmem:[%s1866] sm:$0xff] %v1865
    %v1868 = vld [vmem:[%s527] sm:$0xff]
    %v1869 = vld [vmem:[%s529] sm:$0xff]
    %v1870 = vld [vmem:[%s522] sm:$0xff]
    %v1871 = vld [vmem:[%s525] sm:$0xff]
    %s1872 = sld [smem:[#allocation8 + $0x70]]
    %v1873 = vstv %s1872
    %v1874 = vmul.f32 %v1870, %v1873
    %v1875 = vadd.f32 %v1874, 0.0
    %s1876 = sld [smem:[#allocation8 + $0x78]]
    %v1877 = vstv %s1876
    %v1878 = vmul.f32 %v1871, %v1877
    %v1879 = vadd.f32 %v1875, %v1878
    %s1880 = sld [smem:[#allocation8 + $0x71]]
    %v1881 = vstv %s1880
    %v1882 = vmul.f32 %v1870, %v1881
    %v1883 = vadd.f32 %v1882, 0.0
    %s1884 = sld [smem:[#allocation8 + $0x79]]
    %v1885 = vstv %s1884
    %v1886 = vmul.f32 %v1871, %v1885
    %v1887 = vadd.f32 %v1883, %v1886
    %s1888 = sld [smem:[#allocation8 + $0x72]]
    %v1889 = vstv %s1888
    %v1890 = vmul.f32 %v1870, %v1889
    %v1891 = vadd.f32 %v1890, 0.0
    %s1892 = sld [smem:[#allocation8 + $0x7a]]
    %v1893 = vstv %s1892
    %v1894 = vmul.f32 %v1871, %v1893
    %v1895 = vadd.f32 %v1891, %v1894
    %s1896 = sld [smem:[#allocation8 + $0x73]]
    %v1897 = vstv %s1896
    %v1898 = vmul.f32 %v1870, %v1897
    %v1899 = vadd.f32 %v1898, 0.0
    %s1900 = sld [smem:[#allocation8 + $0x7b]]
    %v1901 = vstv %s1900
    %v1902 = vmul.f32 %v1871, %v1901
    %v1903 = vadd.f32 %v1899, %v1902
    %v1904 = vmul.f32 %v1879, %v1879
    %v1905 = vadd.f32 %v1904, 0.0
    %v1906 = vmul.f32 %v1887, %v1887
    %v1907 = vadd.f32 %v1905, %v1906
    %v1908 = vmul.f32 %v1895, %v1895
    %v1909 = vadd.f32 %v1907, %v1908
    %v1910 = vmul.f32 %v1903, %v1903
    %v1911 = vadd.f32 %v1909, %v1910
    %v1912 = vrsqrt.pop %v1911
    %v1913 = vmul.f32 %v1911, %v1912
    %vm1914 = vcmp.eq.f32.partialorder %v1911, inf
    %v1915 = vsel %vm1914, %v1911, %v1913
    %vm1916 = vcmp.eq.f32.partialorder %v1911, 0.0
    %v1917 = vand.u32 %v1911, 2147483648
    %v1918 = vsel %vm1916, %v1917, %v1915
    %v1919 = vadd.f32 %v1918, 1e-06
    %v1920 = vrcp.pop %v1919
    %v1921 = vmul.f32 %v1033, %v1920
    %vm1922 = vcmp.lt.f32.partialorder %v1919, inf
    %v1923 = vmul.f32 %v1879, %v1868
    %v1924 = vadd.f32 %v1923, 0.0
    %v1925 = vmul.f32 %v1887, %v1869
    %v1926 = vadd.f32 %v1924, %v1925
    %v1927 = vmul.f32 %v1926, %v1921
    %v1928 = vsel %vm1922, %v1927, 0.0
    %vm1929 = vcmp.ge.f32.partialorder %v1928, 0.0
    %v1930 = vmul.f32 %v1928, 1e-05
    %v1931 = vsel %vm1929, %v1928, %v1930
    %v1932 = vand.u32 2147483647, %v1931
    %v1933 = vmul.f32 %v1895, %v1868
    %v1934 = vadd.f32 %v1933, 0.0
    %v1935 = vmul.f32 %v1903, %v1869
    %v1936 = vadd.f32 %v1934, %v1935
    %v1937 = vmul.f32 %v1936, %v1921
    %v1938 = vsel %vm1922, %v1937, 0.0
    %vm1939 = vcmp.ge.f32.partialorder %v1938, 0.0
    %v1940 = vmul.f32 %v1938, 1e-05
    %v1941 = vsel %vm1939, %v1938, %v1940
    %v1942 = vand.u32 2147483647, %v1941
    %v1943 = vadd.f32 %v1932, 0.0
    %v1944 = vadd.f32 %v1943, %v1942
    %v1945 = vrcp.pop %v1944
    %v1946 = vmul.f32 %v1932, %v1945
    %s1947 = scalar_lea.vmem [#allocation10], 112
    %1948 = vst [vmem:[%s1947] sm:$0xff] %v1946
    %v1949 = vmul.f32 %v1942, %v1945
    %s1950 = scalar_lea.vmem [#allocation10], 120
    %1951 = vst [vmem:[%s1950] sm:$0xff] %v1949
    // Predicated region
    $region30: #{tpu_custom_call.1} parent=1 // pred_check
      _
    $region31: #{tpu_custom_call.1} parent=1 // pred_check_branch
      %1953 = sbr.rel (0) target = $region33
    $region32: #{tpu_custom_call.1} parent=1 // pred_region
      %s1955 = ssub.s32 2048, 2048
      %1956 = vsyncadd [#allocation5], %s1955
      %s1957 = sshll.u32 [#allocation10], 4
      %s1958 = int_to_ptr.vmem [resolvable:$true] %s1957
      %1963 = dma.vmem_to_hbm [thread:$0]  %s1958, 2048, %s4, [#allocation5], 128, 128, 8
    $region33: #{tpu_custom_call.1} parent=1 // pred_fallthru
      _
    // Predicated region
    $region34: #{tpu_custom_call.1} parent=1 // pred_check
      _
    $region35: #{tpu_custom_call.1} parent=1 // pred_check_branch
      %1965 = sbr.rel (0) target = $region37
    $region36: #{tpu_custom_call.1} parent=1 // pred_region
      %s1967 = ssub.s32 1792, 1792
      %1968 = vsyncadd [#allocation12], %s1967
      %s1969 = sshll.u32 [#allocation11], 4
      %s1970 = int_to_ptr.vmem [resolvable:$true] %s1969
      %1975 = dma.vmem_to_hbm [thread:$0]  %s1970, 1792, %s5, [#allocation12], 128, 128, 8
    $region37: #{tpu_custom_call.1} parent=1 // pred_fallthru
      _
    // Predicated region
    $region38: #{tpu_custom_call.1} parent=1 // pred_check
      _
    $region39: #{tpu_custom_call.1} parent=1 // pred_check_branch
      %1977 = sbr.rel (0) target = $region41
    $region40: #{tpu_custom_call.1} parent=1 // pred_region
      %s1979 = ssub.s32 1792, 1792
      %1980 = vsyncadd [#allocation12], %s1979
      %s1981 = sshll.u32 [#allocation13], 4
      %s1982 = int_to_ptr.vmem [resolvable:$true] %s1981
      %1987 = dma.vmem_to_hbm [thread:$0]  %s1982, 1792, %s6, [#allocation12], 128, 128, 8
    $region41: #{tpu_custom_call.1} parent=1 // pred_fallthru
      _
    // Predicated region
    $region42: #{tpu_custom_call.1} parent=1 // pred_check
      _
    $region43: #{tpu_custom_call.1} parent=1 // pred_check_branch
      %1989 = sbr.rel (0) target = $region45
    $region44: #{tpu_custom_call.1} parent=1 // pred_region
      %1990 = dma.done [#allocation5], 2048
    $region45: #{tpu_custom_call.1} parent=1 // pred_fallthru
      _
    // Predicated region
    $region46: #{tpu_custom_call.1} parent=1 // pred_check
      _
    $region47: #{tpu_custom_call.1} parent=1 // pred_check_branch
      %1992 = sbr.rel (0) target = $region49
    $region48: #{tpu_custom_call.1} parent=1 // pred_region
      %1993 = dma.done [#allocation12], 1792
    $region49: #{tpu_custom_call.1} parent=1 // pred_fallthru
      _
    // Predicated region
    $region50: #{tpu_custom_call.1} parent=1 // pred_check
      _
    $region51: #{tpu_custom_call.1} parent=1 // pred_check_branch
      %1995 = sbr.rel (0) target = $region53
    $region52: #{tpu_custom_call.1} parent=1 // pred_region
      %1996 = dma.done [#allocation12], 1792
    $region53: #{tpu_custom_call.1} parent=1 // pred_fallthru
      _
    %1997 = vsyncpa [#allocation4], 1
    %1998 = vsyncpa [#allocation5], 1
    %1999 = vsyncpa [#allocation12], 1
    %2000 = vsyncpa [#allocation6], 1
    %2001 = vsyncpa [#allocation9], 1

</llo_original>
